<compile_context>
chip_gen: v6e
topology: v6e:2x2x1
jax: 0.10.0
libtpu: 0.0.40
codegen_flags: <defaults>
</compile_context>

<pallas_src>
import functools
import math

import jax
import jax.numpy as jnp
from jax import lax
from jax.experimental import pallas as pl
from jax.experimental.pallas import tpu as pltpu


_LANES = 128
_SUB = 8


def _round_up(n, m):
    return ((n + m - 1) // m) * m


# ----------------------------------------------------------------------------
# In-kernel helpers (operate on values already loaded from VMEM refs)
# ----------------------------------------------------------------------------
def _dot_last(a, w):
    """Contract last axis of `a` (2-D or 3-D) with first axis of `w`, f32 acc."""
    return lax.dot_general(a, w, (((a.ndim - 1,), (0,)), ((), ())),
                           preferred_element_type=jnp.float32)


def _shift_p1(x):
    """y[t] = x[t-1], zero at t = 0."""
    Bb, L, C = x.shape
    zero = jnp.zeros((Bb, 1, C), jnp.float32)
    return jnp.concatenate([zero, x[:, :L - 1, :]], axis=1)


def _shift_m1(x):
    """y[t] = x[t+1], zero at t = L-1."""
    Bb, L, C = x.shape
    zero = jnp.zeros((Bb, 1, C), jnp.float32)
    return jnp.concatenate([x[:, 1:, :], zero], axis=1)


def _conv3_same(x, w_prev, w_cent, w_next, b):
    """Conv1d(k=3, padding=1), channels-last, as three accumulated GEMMs."""
    return (_dot_last(x, w_cent)
            + _dot_last(_shift_p1(x), w_prev)
            + _dot_last(_shift_m1(x), w_next) + b)


def _mha(x, wq, wk, wv, bq, bk, bv, wo, bo, num_heads):
    """Multi-head self-attention; single output projection on concatenated heads."""
    Bb, L, E = x.shape
    hd = E // num_heads
    scale = 1.0 / math.sqrt(hd)
    q = _dot_last(x, wq) + bq
    k = _dot_last(x, wk) + bk
    v = _dot_last(x, wv) + bv
    ctx = []
    for h in range(num_heads):                       # small static unroll (heads=2)
        sl = slice(h * hd, (h + 1) * hd)
        s = jnp.einsum('bqd,bkd->bqk', q[..., sl], k[..., sl],
                       preferred_element_type=jnp.float32) * scale
        s = s - jnp.max(s, axis=-1, keepdims=True)
        e = jnp.exp(s)
        attn = e / jnp.sum(e, axis=-1, keepdims=True)      # exact softmax (parity)
        ctx.append(jnp.einsum('bqk,bkd->bqd', attn, v[..., sl],
                              preferred_element_type=jnp.float32))
    ctx = jnp.concatenate(ctx, axis=-1)
    return _dot_last(ctx, wo) + bo


def _lstm_seq(gx_list, whh, H):
    """Unrolled LSTM over precomputed per-step input gates (Bb, 4H).

    Gate order [i, f, g, o].  Zero initial h/c -> first step skips the Whh term.
    Activations: one wide sigmoid over all 4H lanes + one tanh over the g slice.
    """
    hs = []
    h = c = None
    for gx_t in gx_list:
        if h is None:
            gates = gx_t
        else:
            gates = gx_t + jnp.dot(h, whh, preferred_element_type=jnp.float32)
        sig = jax.nn.sigmoid(gates)                  # i, f, o come from this push
        g = jnp.tanh(gates[:, 2 * H:3 * H])
        i = sig[:, 0:H]
        f = sig[:, H:2 * H]
        o = sig[:, 3 * H:4 * H]
        c = i * g if c is None else f * c + i * g
        h = o * jnp.tanh(c)
        hs.append(h)
    return hs


# ----------------------------------------------------------------------------
# The single fused kernel (one batch TILE per grid step)
# ----------------------------------------------------------------------------
def fused_kernel(x_ref, *refs, layout, n_slabs, L, D, H, num_heads, out_w, out_pad):
    slab_refs = refs[:n_slabs]
    out_ref = refs[n_slabs]

    def get(name):                                   # static slice of a weight slab
        si, off, r, c = layout[name]
        return slab_refs[si][off:off + r, 0:c]

    x = x_ref[...]                                   # (TB, L, D)
    Bb = x.shape[0]
    H4 = 4 * H

    # -------------------- Encoder --------------------
    h1 = jnp.maximum(_conv3_same(x, get('e_c1_wp'), get('e_c1_wc'), get('e_c1_wn'),
                                 get('e_c1_b')), 0.0)
    h2 = jnp.maximum(_conv3_same(h1, get('e_c2_wp'), get('e_c2_wc'), get('e_c2_wn'),
                                 get('e_c2_b')), 0.0)
    xa = _mha(h2, get('att_wq'), get('att_wk'), get('att_wv'),
              get('att_bq'), get('att_bk'), get('att_bv'),
              get('att_wo'), get('att_bo'), num_heads)

    # Encoder LSTM: hoisted input GEMM over all timesteps.
    gx_e = _dot_last(xa, get('e_rnn_wih')) + get('e_rnn_b')          # (TB, L, 4H)
    hs_e = _lstm_seq([gx_e[:, t, :] for t in range(L)], get('e_rnn_whh'), H)
    x_flat = jnp.concatenate(hs_e, axis=-1)                          # (TB, L*H)

    z = jnp.maximum(jnp.dot(x_flat, get('e_cmp1_w'),
                            preferred_element_type=jnp.float32) + get('e_cmp1_b'), 0.0)
    z = jnp.dot(z, get('e_cmp2_w'),
                preferred_element_type=jnp.float32) + get('e_cmp2_b')   # (TB, H)

    # -------------------- Decoder --------------------  (Dropout = identity)
    dd = jnp.maximum(jnp.dot(z, get('d_dec1_w'),
                             preferred_element_type=jnp.float32) + get('d_dec1_b'), 0.0)
    # decompress layer-2 and the decoder-LSTM input GEMM are folded (at pack time)
    # into one wide weight -> per-step gates are 128-lane-aligned slices.
    gx_d = jnp.dot(dd, get('d_dec2f_w'),
                   preferred_element_type=jnp.float32) + get('d_dec2f_b')  # (TB, L*4H)
    hs_d = _lstm_seq([gx_d[:, t * H4:(t + 1) * H4] for t in range(L)],
                     get('d_rnn_whh'), H)
    hd3 = jnp.stack(hs_d, axis=1)                                    # (TB, L, H)

    v = jnp.maximum(_dot_last(hd3, get('d_vr1_w')) + get('d_vr1_b'), 0.0)
    v = _dot_last(v, get('d_vr2_w')) + get('d_vr2_b')                # (TB, L, D)
    recon = _conv3_same(v, get('d_sm_wp'), get('d_sm_wc'), get('d_sm_wn'),
                        get('d_sm_b'))                               # (TB, L, D)

    # -------------------- Anomaly scorer --------------------
    err = jnp.abs(x - recon)
    ew = jnp.maximum(_dot_last(err, get('a_ew1_w')) + get('a_ew1_b'), 0.0)
    ew = jax.nn.sigmoid(_dot_last(ew, get('a_ew2_w')) + get('a_ew2_b'))
    var_score = jnp.mean(err * ew, axis=-1, keepdims=True)           # (TB, L, 1)

    # temporal detector LSTM(1, 8): input GEMM is a broadcast multiply.
    gx_a = var_score * get('a_rnn_wih') + get('a_rnn_b')             # (TB, L, 32)
    hs_a = _lstm_seq([gx_a[:, t, :] for t in range(L)], get('a_rnn_whh'), 8)
    ha3 = jnp.stack(hs_a, axis=1)                                    # (TB, L, 8)
    temp = jnp.sum(ha3 * get('a_ts_w'), axis=-1, keepdims=True) + get('a_ts_b')
    score3 = jax.nn.sigmoid(var_score + temp)                        # (TB, L, 1)

    # -------------------- lane-dense output slab --------------------
    recon_flat = jnp.concatenate([recon[:, t, :] for t in range(L)], axis=-1)  # (TB, L*D)
    score_flat = jnp.concatenate([score3[:, t, :] for t in range(L)], axis=-1)  # (TB, L)
    pieces = [recon_flat, score_flat, z]
    if out_pad > out_w:
        pieces.append(jnp.zeros((Bb, out_pad - out_w), jnp.float32))
    out_ref[0] = jnp.concatenate(pieces, axis=-1)                    # (TB, out_pad)


# ----------------------------------------------------------------------------
# Wrapper
# ----------------------------------------------------------------------------
def _pick_tb(B, L, target_m=256, max_tb=32):
    """Batch-tile size: TB*L >= target_m (MXU fill) but keep >= 2 grid steps."""
    tb = max(1, _round_up(target_m, L) // L)
    tb = min(tb, max_tb)                      # bounds vreg live ranges in the LSTMs
    if B >= 2:
        tb = min(tb, (B + 1) // 2)            # v7x: keep both TensorCores busy
    return max(1, min(tb, B))


def forward(slabs, layout, x, *, hidden_dim, seq_len, num_heads, block_batch=None):
    B, L, D = x.shape
    H = hidden_dim
    assert L == seq_len and H % num_heads == 0

    TB = block_batch if block_batch is not None else _pick_tb(B, L)
    G = pl.cdiv(B, TB)
    Bp = G * TB
    x = x.astype(jnp.float32)
    if Bp != B:
        x = jnp.concatenate([x, jnp.zeros((Bp - B, L, D), jnp.float32)], axis=0)

    out_w = L * D + L + H
    out_pad = _round_up(out_w, _LANES)

    kern = functools.partial(fused_kernel, layout=layout, n_slabs=len(slabs),
                             L=L, D=D, H=H, num_heads=num_heads,
                             out_w=out_w, out_pad=out_pad)

    in_specs = [pl.BlockSpec((TB, L, D), lambda b: (b, 0, 0))]
    for s in slabs:                                   # whole-array, constant block
        in_specs.append(pl.BlockSpec(s.shape, lambda b: (0, 0)))

    out = pl.pallas_call(
        kern,
        grid=(G,),
        out_shape=jax.ShapeDtypeStruct((G, TB, out_pad), jnp.float32),
        in_specs=in_specs,
        out_specs=pl.BlockSpec((1, TB, out_pad), lambda b: (b, 0, 0)),
        compiler_params=pltpu.CompilerParams(
            dimension_semantics=("parallel",)),
    )(x, *slabs)

    flat = out.reshape(G * TB, out_pad)[:B]
    recon = flat[:, :L * D].reshape(B, L, D)
    scores = flat[:, L * D:L * D + L]
    latent = flat[:, L * D + L:L * D + L + H]
    return {'reconstructed': recon, 'anomaly_scores': scores, 'latent_repr': latent}


# ----------------------------------------------------------------------------
# Parameters (deterministic synthetic init; shapes mirror the PyTorch module)
# Conv weights: (3*Cin, Cout), tap-major rows [x[t-1]; x[t]; x[t+1]]
#   (PyTorch (Cout, Cin, 3) -> (3, Cin, Cout) -> reshape).
# Linear weights: (in, out).  LSTM: wih (in, 4H), whh (H, 4H), gate order [i,f,g,o],
# the two PyTorch biases summed into a single (1, 4H) row.
# ----------------------------------------------------------------------------
def init_params(D, H, L, key):
    ks = iter(jax.random.split(key, 64))

    def w(shape, scale=0.1):
        return scale * jax.random.normal(next(ks), shape, jnp.float32)

    p = {}
    p['e_c1_w'] = w((3 * D, H // 2));        p['e_c1_b'] = w((1, H // 2))
    p['e_c2_w'] = w((3 * (H // 2), H));      p['e_c2_b'] = w((1, H))
    p['att_wq'] = w((H, H)); p['att_wk'] = w((H, H)); p['att_wv'] = w((H, H))
    p['att_bq'] = w((1, H)); p['att_bk'] = w((1, H)); p['att_bv'] = w((1, H))
    p['att_wo'] = w((H, H)); p['att_bo'] = w((1, H))
    p['e_rnn_wih'] = w((H, 4 * H)); p['e_rnn_whh'] = w((H, 4 * H)); p['e_rnn_b'] = w((1, 4 * H))
    p['e_cmp1_w'] = w((H * L, 2 * H)); p['e_cmp1_b'] = w((1, 2 * H))
    p['e_cmp2_w'] = w((2 * H, H));     p['e_cmp2_b'] = w((1, H))
    p['d_dec1_w'] = w((H, 2 * H));     p['d_dec1_b'] = w((1, 2 * H))
    p['d_dec2_w'] = w((2 * H, H * L)); p['d_dec2_b'] = w((1, H * L))
    p['d_rnn_wih'] = w((H, 4 * H)); p['d_rnn_whh'] = w((H, 4 * H)); p['d_rnn_b'] = w((1, 4 * H))
    p['d_vr1_w'] = w((H, H // 2)); p['d_vr1_b'] = w((1, H // 2))
    p['d_vr2_w'] = w((H // 2, D)); p['d_vr2_b'] = w((1, D))
    p['d_sm_w'] = w((3 * D, D)); p['d_sm_b'] = w((1, D))
    p['a_ew1_w'] = w((D, 2 * D)); p['a_ew1_b'] = w((1, 2 * D))
    p['a_ew2_w'] = w((2 * D, D)); p['a_ew2_b'] = w((1, D))
    p['a_rnn_wih'] = w((1, 32)); p['a_rnn_whh'] = w((8, 32)); p['a_rnn_b'] = w((1, 32))
    p['a_ts_w'] = w((1, 8));     p['a_ts_b'] = w((1, 1))
    return p


def pack_params(params, D, H, L):
    """Pack all weights into a few contiguous, lane-aligned f32 slabs.

    Returns (slabs: list of 2-D arrays, layout: name -> (slab_idx, row_off, rows, cols)).
    Also folds decompress-layer-2 with the decoder-LSTM input transform.
    """
    H2 = H // 2
    entries = []

    def add(name, arr):
        arr = jnp.asarray(arr, jnp.float32)
        arr = arr.reshape(-1, arr.shape[-1])
        entries.append((name, arr))

    def add_conv(prefix, wmat, cin):                 # split the 3 taps, 8-row aligned
        wmat = jnp.asarray(wmat, jnp.float32)
        add(prefix + '_wp', wmat[0:cin])             # multiplies x[t-1]
        add(prefix + '_wc', wmat[cin:2 * cin])       # multiplies x[t]
        add(prefix + '_wn', wmat[2 * cin:3 * cin])   # multiplies x[t+1]

    add_conv('e_c1', params['e_c1_w'], D);  add('e_c1_b', params['e_c1_b'])
    add_conv('e_c2', params['e_c2_w'], H2); add('e_c2_b', params['e_c2_b'])
    for k in ('att_wq', 'att_wk', 'att_wv', 'att_bq', 'att_bk', 'att_bv',
              'att_wo', 'att_bo',
              'e_rnn_wih', 'e_rnn_whh', 'e_rnn_b',
              'e_cmp1_w', 'e_cmp1_b', 'e_cmp2_w', 'e_cmp2_b',
              'd_dec1_w', 'd_dec1_b', 'd_rnn_whh',
              'd_vr1_w', 'd_vr1_b', 'd_vr2_w', 'd_vr2_b',
              'a_ew1_w', 'a_ew1_b', 'a_ew2_w', 'a_ew2_b',
              'a_rnn_wih', 'a_rnn_whh', 'a_rnn_b', 'a_ts_w', 'a_ts_b'):
        add(k, params[k])
    add_conv('d_sm', params['d_sm_w'], D); add('d_sm_b', params['d_sm_b'])

    # Fold: gx_t = (dd @ W2[:, tH:(t+1)H] + b2_t) @ Wih + b_r  (exact algebraic identity)
    W2 = jnp.asarray(params['d_dec2_w'], jnp.float32)
    b2 = jnp.asarray(params['d_dec2_b'], jnp.float32).reshape(1, -1)
    Wih = jnp.asarray(params['d_rnn_wih'], jnp.float32)
    br = jnp.asarray(params['d_rnn_b'], jnp.float32).reshape(1, -1)
    w2f = jnp.concatenate([W2[:, t * H:(t + 1) * H] @ Wih for t in range(L)], axis=1)
    b2f = jnp.concatenate([b2[:, t * H:(t + 1) * H] @ Wih + br for t in range(L)], axis=1)
    add('d_dec2f_w', w2f)                            # (2H, L*4H)
    add('d_dec2f_b', b2f)                            # (1,  L*4H)

    # Group entries by 128-rounded lane width -> one contiguous slab per width.
    widths = sorted({_round_up(a.shape[1], _LANES) for _, a in entries})
    slabs, layout = [], {}
    for si, wdt in enumerate(widths):
        blocks, off = [], 0
        for name, a in entries:
            if _round_up(a.shape[1], _LANES) != wdt:
                continue
            r, c = a.shape
            rp = _round_up(r, _SUB)
            blocks.append(jnp.pad(a, ((0, rp - r), (0, wdt - c))))
            layout[name] = (si, off, r, c)
            off += rp
        slabs.append(jnp.concatenate(blocks, axis=0))
    return slabs, layout


if __name__ == "__main__":
    B, L, D, H = 2, 8, 4, 32
    num_heads = max(1, H // 16)
    key = jax.random.PRNGKey(0)
    pkey, xkey = jax.random.split(key)

    params = init_params(D, H, L, pkey)
    slabs, layout = pack_params(params, D, H, L)
    x = jax.random.normal(xkey, (B, L, D), jnp.float32)

    out = forward(slabs, layout, x, hidden_dim=H, seq_len=L, num_heads=num_heads)
    out = jax.tree_util.tree_map(jax.block_until_ready, out)

    assert out['reconstructed'].shape == (B, L, D)
    assert out['anomaly_scores'].shape == (B, L)
    assert out['latent_repr'].shape == (B, H)
    assert all(bool(jnp.all(jnp.isfinite(v))) for v in out.values())
    print("KERNEL_OK")
</pallas_src>

<mosaic_0001>
module attributes {stable_mosaic.version = 11 : i64} {
  func.func @fused_kernel(%arg0: i32, %arg1: memref<1x8x4xf32, #tpu.memory_space<vmem>>, %arg2: memref<896x128xf32, #tpu.memory_space<vmem>>, %arg3: memref<72x1024xf32, #tpu.memory_space<vmem>>, %arg4: memref<1x1x128xf32, #tpu.memory_space<vmem>>) attributes {dimension_semantics = [#tpu.dimension_semantics<parallel>], iteration_bounds = array<i64: 2>, scalar_prefetch = 0 : i64, scratch_operands = 0 : i64, tpu.core_type = #tpu.core_type<tc>, window_params = [{transform_indices = @transform_0, window_bounds = array<i64: 1, 8, 4>}, {pipeline_mode = #tpu.pipeline_mode<synchronous>, transform_indices = @transform_1, window_bounds = array<i64: 896, 128>}, {pipeline_mode = #tpu.pipeline_mode<synchronous>, transform_indices = @transform_2, window_bounds = array<i64: 72, 1024>}, {transform_indices = @transform_3, window_bounds = array<i64: 1, 1, 128>}]} {
    %c0 = arith.constant 0 : index
    %c0_0 = arith.constant 0 : index
    %c0_1 = arith.constant 0 : index
    %0 = vector.load %arg1[%c0, %c0_0, %c0_1] : memref<1x8x4xf32, #tpu.memory_space<vmem>>, vector<1x8x4xf32>
    %c0_2 = arith.constant 0 : index
    %c0_3 = arith.constant 0 : index
    %1 = vector.load %arg2[%c0_2, %c0_3] : memref<896x128xf32, #tpu.memory_space<vmem>>, vector<4x16xf32>
    %c8 = arith.constant 8 : index
    %c0_4 = arith.constant 0 : index
    %2 = vector.load %arg2[%c8, %c0_4] : memref<896x128xf32, #tpu.memory_space<vmem>>, vector<4x16xf32>
    %c16 = arith.constant 16 : index
    %c0_5 = arith.constant 0 : index
    %3 = vector.load %arg2[%c16, %c0_5] : memref<896x128xf32, #tpu.memory_space<vmem>>, vector<4x16xf32>
    %c24 = arith.constant 24 : index
    %c0_6 = arith.constant 0 : index
    %4 = vector.load %arg2[%c24, %c0_6] : memref<896x128xf32, #tpu.memory_space<vmem>>, vector<1x16xf32>
    %cst = arith.constant dense<0.000000e+00> : vector<1x8x16xf32>
    %5 = tpu.matmul %0, %2, %cst {dimension_numbers = #tpu.dot_dimension_numbers<[2], [0], [0, 1], [1], [0, 0, 0, 1, 1, 1], [], []>} : vector<1x8x4xf32>, vector<4x16xf32>, vector<1x8x16xf32> -> vector<1x8x16xf32>
    %cst_7 = arith.constant 0.000000e+00 : f32
    %6 = vector.broadcast %cst_7 : f32 to vector<1x1x4xf32>
    %7 = vector.extract_strided_slice %0 {offsets = [0, 0, 0], sizes = [1, 7, 4], strides = [1, 1, 1]} : vector<1x8x4xf32> to vector<1x7x4xf32>
    %8 = tpu.concatenate %6, %7 in 1 : vector<1x1x4xf32>, vector<1x7x4xf32> -> vector<1x8x4xf32>
    %cst_8 = arith.constant dense<0.000000e+00> : vector<1x8x16xf32>
    %9 = tpu.matmul %8, %1, %cst_8 {dimension_numbers = #tpu.dot_dimension_numbers<[2], [0], [0, 1], [1], [0, 0, 0, 1, 1, 1], [], []>} : vector<1x8x4xf32>, vector<4x16xf32>, vector<1x8x16xf32> -> vector<1x8x16xf32>
    %10 = arith.addf %5, %9 : vector<1x8x16xf32>
    %cst_9 = arith.constant 0.000000e+00 : f32
    %11 = vector.broadcast %cst_9 : f32 to vector<1x1x4xf32>
    %12 = vector.extract_strided_slice %0 {offsets = [0, 1, 0], sizes = [1, 7, 4], strides = [1, 1, 1]} : vector<1x8x4xf32> to vector<1x7x4xf32>
    %13 = tpu.concatenate %12, %11 in 1 : vector<1x7x4xf32>, vector<1x1x4xf32> -> vector<1x8x4xf32>
    %cst_10 = arith.constant dense<0.000000e+00> : vector<1x8x16xf32>
    %14 = tpu.matmul %13, %3, %cst_10 {dimension_numbers = #tpu.dot_dimension_numbers<[2], [0], [0, 1], [1], [0, 0, 0, 1, 1, 1], [], []>} : vector<1x8x4xf32>, vector<4x16xf32>, vector<1x8x16xf32> -> vector<1x8x16xf32>
    %15 = arith.addf %10, %14 : vector<1x8x16xf32>
    %16 = vector.shape_cast %4 : vector<1x16xf32> to vector<1x1x16xf32>
    %17 = vector.broadcast %16 : vector<1x1x16xf32> to vector<1x8x16xf32>
    %18 = arith.addf %15, %17 : vector<1x8x16xf32>
    %cst_11 = arith.constant 0.000000e+00 : f32
    %19 = vector.broadcast %cst_11 : f32 to vector<1x8x16xf32>
    %20 = arith.maximumf %18, %19 : vector<1x8x16xf32>
    %c32 = arith.constant 32 : index
    %c0_12 = arith.constant 0 : index
    %21 = vector.load %arg2[%c32, %c0_12] : memref<896x128xf32, #tpu.memory_space<vmem>>, vector<16x32xf32>
    %c48 = arith.constant 48 : index
    %c0_13 = arith.constant 0 : index
    %22 = vector.load %arg2[%c48, %c0_13] : memref<896x128xf32, #tpu.memory_space<vmem>>, vector<16x32xf32>
    %c64 = arith.constant 64 : index
    %c0_14 = arith.constant 0 : index
    %23 = vector.load %arg2[%c64, %c0_14] : memref<896x128xf32, #tpu.memory_space<vmem>>, vector<16x32xf32>
    %c80 = arith.constant 80 : index
    %c0_15 = arith.constant 0 : index
    %24 = vector.load %arg2[%c80, %c0_15] : memref<896x128xf32, #tpu.memory_space<vmem>>, vector<1x32xf32>
    %cst_16 = arith.constant dense<0.000000e+00> : vector<1x8x32xf32>
    %25 = tpu.matmul %20, %22, %cst_16 {dimension_numbers = #tpu.dot_dimension_numbers<[2], [0], [0, 1], [1], [0, 0, 0, 1, 1, 1], [], []>} : vector<1x8x16xf32>, vector<16x32xf32>, vector<1x8x32xf32> -> vector<1x8x32xf32>
    %cst_17 = arith.constant 0.000000e+00 : f32
    %26 = vector.broadcast %cst_17 : f32 to vector<1x1x16xf32>
    %27 = vector.extract_strided_slice %20 {offsets = [0, 0, 0], sizes = [1, 7, 16], strides = [1, 1, 1]} : vector<1x8x16xf32> to vector<1x7x16xf32>
    %28 = tpu.concatenate %26, %27 in 1 : vector<1x1x16xf32>, vector<1x7x16xf32> -> vector<1x8x16xf32>
    %cst_18 = arith.constant dense<0.000000e+00> : vector<1x8x32xf32>
    %29 = tpu.matmul %28, %21, %cst_18 {dimension_numbers = #tpu.dot_dimension_numbers<[2], [0], [0, 1], [1], [0, 0, 0, 1, 1, 1], [], []>} : vector<1x8x16xf32>, vector<16x32xf32>, vector<1x8x32xf32> -> vector<1x8x32xf32>
    %30 = arith.addf %25, %29 : vector<1x8x32xf32>
    %cst_19 = arith.constant 0.000000e+00 : f32
    %31 = vector.broadcast %cst_19 : f32 to vector<1x1x16xf32>
    %32 = vector.extract_strided_slice %20 {offsets = [0, 1, 0], sizes = [1, 7, 16], strides = [1, 1, 1]} : vector<1x8x16xf32> to vector<1x7x16xf32>
    %33 = tpu.concatenate %32, %31 in 1 : vector<1x7x16xf32>, vector<1x1x16xf32> -> vector<1x8x16xf32>
    %cst_20 = arith.constant dense<0.000000e+00> : vector<1x8x32xf32>
    %34 = tpu.matmul %33, %23, %cst_20 {dimension_numbers = #tpu.dot_dimension_numbers<[2], [0], [0, 1], [1], [0, 0, 0, 1, 1, 1], [], []>} : vector<1x8x16xf32>, vector<16x32xf32>, vector<1x8x32xf32> -> vector<1x8x32xf32>
    %35 = arith.addf %30, %34 : vector<1x8x32xf32>
    %36 = vector.shape_cast %24 : vector<1x32xf32> to vector<1x1x32xf32>
    %37 = vector.broadcast %36 : vector<1x1x32xf32> to vector<1x8x32xf32>
    %38 = arith.addf %35, %37 : vector<1x8x32xf32>
    %cst_21 = arith.constant 0.000000e+00 : f32
    %39 = vector.broadcast %cst_21 : f32 to vector<1x8x32xf32>
    %40 = arith.maximumf %38, %39 : vector<1x8x32xf32>
    %c88 = arith.constant 88 : index
    %c0_22 = arith.constant 0 : index
    %41 = vector.load %arg2[%c88, %c0_22] : memref<896x128xf32, #tpu.memory_space<vmem>>, vector<32x32xf32>
    %c120 = arith.constant 120 : index
    %c0_23 = arith.constant 0 : index
    %42 = vector.load %arg2[%c120, %c0_23] : memref<896x128xf32, #tpu.memory_space<vmem>>, vector<32x32xf32>
    %c152 = arith.constant 152 : index
    %c0_24 = arith.constant 0 : index
    %43 = vector.load %arg2[%c152, %c0_24] : memref<896x128xf32, #tpu.memory_space<vmem>>, vector<32x32xf32>
    %c184 = arith.constant 184 : index
    %c0_25 = arith.constant 0 : index
    %44 = vector.load %arg2[%c184, %c0_25] : memref<896x128xf32, #tpu.memory_space<vmem>>, vector<1x32xf32>
    %c192 = arith.constant 192 : index
    %c0_26 = arith.constant 0 : index
    %45 = vector.load %arg2[%c192, %c0_26] : memref<896x128xf32, #tpu.memory_space<vmem>>, vector<1x32xf32>
    %c200 = arith.constant 200 : index
    %c0_27 = arith.constant 0 : index
    %46 = vector.load %arg2[%c200, %c0_27] : memref<896x128xf32, #tpu.memory_space<vmem>>, vector<1x32xf32>
    %c208 = arith.constant 208 : index
    %c0_28 = arith.constant 0 : index
    %47 = vector.load %arg2[%c208, %c0_28] : memref<896x128xf32, #tpu.memory_space<vmem>>, vector<32x32xf32>
    %c240 = arith.constant 240 : index
    %c0_29 = arith.constant 0 : index
    %48 = vector.load %arg2[%c240, %c0_29] : memref<896x128xf32, #tpu.memory_space<vmem>>, vector<1x32xf32>
    %cst_30 = arith.constant dense<0.000000e+00> : vector<1x8x32xf32>
    %49 = tpu.matmul %40, %41, %cst_30 {dimension_numbers = #tpu.dot_dimension_numbers<[2], [0], [0, 1], [1], [0, 0, 0, 1, 1, 1], [], []>} : vector<1x8x32xf32>, vector<32x32xf32>, vector<1x8x32xf32> -> vector<1x8x32xf32>
    %50 = vector.shape_cast %44 : vector<1x32xf32> to vector<1x1x32xf32>
    %51 = vector.broadcast %50 : vector<1x1x32xf32> to vector<1x8x32xf32>
    %52 = arith.addf %49, %51 : vector<1x8x32xf32>
    %cst_31 = arith.constant dense<0.000000e+00> : vector<1x8x32xf32>
    %53 = tpu.matmul %40, %42, %cst_31 {dimension_numbers = #tpu.dot_dimension_numbers<[2], [0], [0, 1], [1], [0, 0, 0, 1, 1, 1], [], []>} : vector<1x8x32xf32>, vector<32x32xf32>, vector<1x8x32xf32> -> vector<1x8x32xf32>
    %54 = vector.shape_cast %45 : vector<1x32xf32> to vector<1x1x32xf32>
    %55 = vector.broadcast %54 : vector<1x1x32xf32> to vector<1x8x32xf32>
    %56 = arith.addf %53, %55 : vector<1x8x32xf32>
    %cst_32 = arith.constant dense<0.000000e+00> : vector<1x8x32xf32>
    %57 = tpu.matmul %40, %43, %cst_32 {dimension_numbers = #tpu.dot_dimension_numbers<[2], [0], [0, 1], [1], [0, 0, 0, 1, 1, 1], [], []>} : vector<1x8x32xf32>, vector<32x32xf32>, vector<1x8x32xf32> -> vector<1x8x32xf32>
    %58 = vector.shape_cast %46 : vector<1x32xf32> to vector<1x1x32xf32>
    %59 = vector.broadcast %58 : vector<1x1x32xf32> to vector<1x8x32xf32>
    %60 = arith.addf %57, %59 : vector<1x8x32xf32>
    %61 = vector.extract_strided_slice %52 {offsets = [0, 0, 0], sizes = [1, 8, 16], strides = [1, 1, 1]} : vector<1x8x32xf32> to vector<1x8x16xf32>
    %62 = vector.extract_strided_slice %56 {offsets = [0, 0, 0], sizes = [1, 8, 16], strides = [1, 1, 1]} : vector<1x8x32xf32> to vector<1x8x16xf32>
    "tpu.trace_start"() <{level = 10 : i32, message = "bqd,bkd->bqk"}> : () -> ()
    %cst_33 = arith.constant dense<0.000000e+00> : vector<1x8x8xf32>
    %63 = tpu.matmul %61, %62, %cst_33 {dimension_numbers = #tpu.dot_dimension_numbers<[2], [2], [1], [1], [0, 0, 0, 1, 1, 1], [0], [0]>} : vector<1x8x16xf32>, vector<1x8x16xf32>, vector<1x8x8xf32> -> vector<1x8x8xf32>
    "tpu.trace_stop"() : () -> ()
    %cst_34 = arith.constant 2.500000e-01 : f32
    %64 = vector.broadcast %cst_34 : f32 to vector<1x8x8xf32>
    %65 = arith.mulf %63, %64 : vector<1x8x8xf32>
    %cst_35 = arith.constant dense<0xFF800000> : vector<1x8xf32>
    %66 = vector.multi_reduction <maximumf>, %65, %cst_35 [2] : vector<1x8x8xf32> to vector<1x8xf32>
    %67 = vector.shape_cast %66 : vector<1x8xf32> to vector<1x8x1xf32>
    %68 = vector.broadcast %67 : vector<1x8x1xf32> to vector<1x8x8xf32>
    %69 = arith.subf %65, %68 : vector<1x8x8xf32>
    %70 = math.exp %69 : vector<1x8x8xf32>
    %cst_36 = arith.constant dense<0.000000e+00> : vector<1x8xf32>
    %71 = vector.multi_reduction <add>, %70, %cst_36 [2] : vector<1x8x8xf32> to vector<1x8xf32>
    %72 = vector.shape_cast %71 : vector<1x8xf32> to vector<1x8x1xf32>
    %73 = vector.broadcast %72 : vector<1x8x1xf32> to vector<1x8x8xf32>
    %74 = arith.divf %70, %73 : vector<1x8x8xf32>
    %75 = vector.extract_strided_slice %60 {offsets = [0, 0, 0], sizes = [1, 8, 16], strides = [1, 1, 1]} : vector<1x8x32xf32> to vector<1x8x16xf32>
    "tpu.trace_start"() <{level = 10 : i32, message = "bqk,bkd->bqd"}> : () -> ()
    %cst_37 = arith.constant dense<0.000000e+00> : vector<1x8x16xf32>
    %76 = tpu.matmul %74, %75, %cst_37 {dimension_numbers = #tpu.dot_dimension_numbers<[2], [1], [1], [2], [0, 0, 0, 1, 1, 2], [0], [0]>} : vector<1x8x8xf32>, vector<1x8x16xf32>, vector<1x8x16xf32> -> vector<1x8x16xf32>
    "tpu.trace_stop"() : () -> ()
    %77 = vector.extract_strided_slice %52 {offsets = [0, 0, 16], sizes = [1, 8, 16], strides = [1, 1, 1]} : vector<1x8x32xf32> to vector<1x8x16xf32>
    %78 = vector.extract_strided_slice %56 {offsets = [0, 0, 16], sizes = [1, 8, 16], strides = [1, 1, 1]} : vector<1x8x32xf32> to vector<1x8x16xf32>
    "tpu.trace_start"() <{level = 10 : i32, message = "bqd,bkd->bqk"}> : () -> ()
    %cst_38 = arith.constant dense<0.000000e+00> : vector<1x8x8xf32>
    %79 = tpu.matmul %77, %78, %cst_38 {dimension_numbers = #tpu.dot_dimension_numbers<[2], [2], [1], [1], [0, 0, 0, 1, 1, 1], [0], [0]>} : vector<1x8x16xf32>, vector<1x8x16xf32>, vector<1x8x8xf32> -> vector<1x8x8xf32>
    "tpu.trace_stop"() : () -> ()
    %cst_39 = arith.constant 2.500000e-01 : f32
    %80 = vector.broadcast %cst_39 : f32 to vector<1x8x8xf32>
    %81 = arith.mulf %79, %80 : vector<1x8x8xf32>
    %cst_40 = arith.constant dense<0xFF800000> : vector<1x8xf32>
    %82 = vector.multi_reduction <maximumf>, %81, %cst_40 [2] : vector<1x8x8xf32> to vector<1x8xf32>
    %83 = vector.shape_cast %82 : vector<1x8xf32> to vector<1x8x1xf32>
    %84 = vector.broadcast %83 : vector<1x8x1xf32> to vector<1x8x8xf32>
    %85 = arith.subf %81, %84 : vector<1x8x8xf32>
    %86 = math.exp %85 : vector<1x8x8xf32>
    %cst_41 = arith.constant dense<0.000000e+00> : vector<1x8xf32>
    %87 = vector.multi_reduction <add>, %86, %cst_41 [2] : vector<1x8x8xf32> to vector<1x8xf32>
    %88 = vector.shape_cast %87 : vector<1x8xf32> to vector<1x8x1xf32>
    %89 = vector.broadcast %88 : vector<1x8x1xf32> to vector<1x8x8xf32>
    %90 = arith.divf %86, %89 : vector<1x8x8xf32>
    %91 = vector.extract_strided_slice %60 {offsets = [0, 0, 16], sizes = [1, 8, 16], strides = [1, 1, 1]} : vector<1x8x32xf32> to vector<1x8x16xf32>
    "tpu.trace_start"() <{level = 10 : i32, message = "bqk,bkd->bqd"}> : () -> ()
    %cst_42 = arith.constant dense<0.000000e+00> : vector<1x8x16xf32>
    %92 = tpu.matmul %90, %91, %cst_42 {dimension_numbers = #tpu.dot_dimension_numbers<[2], [1], [1], [2], [0, 0, 0, 1, 1, 2], [0], [0]>} : vector<1x8x8xf32>, vector<1x8x16xf32>, vector<1x8x16xf32> -> vector<1x8x16xf32>
    "tpu.trace_stop"() : () -> ()
    %93 = tpu.concatenate %76, %92 in 2 : vector<1x8x16xf32>, vector<1x8x16xf32> -> vector<1x8x32xf32>
    %cst_43 = arith.constant dense<0.000000e+00> : vector<1x8x32xf32>
    %94 = tpu.matmul %93, %47, %cst_43 {dimension_numbers = #tpu.dot_dimension_numbers<[2], [0], [0, 1], [1], [0, 0, 0, 1, 1, 1], [], []>} : vector<1x8x32xf32>, vector<32x32xf32>, vector<1x8x32xf32> -> vector<1x8x32xf32>
    %95 = vector.shape_cast %48 : vector<1x32xf32> to vector<1x1x32xf32>
    %96 = vector.broadcast %95 : vector<1x1x32xf32> to vector<1x8x32xf32>
    %97 = arith.addf %94, %96 : vector<1x8x32xf32>
    %c248 = arith.constant 248 : index
    %c0_44 = arith.constant 0 : index
    %98 = vector.load %arg2[%c248, %c0_44] : memref<896x128xf32, #tpu.memory_space<vmem>>, vector<32x128xf32>
    %cst_45 = arith.constant dense<0.000000e+00> : vector<1x8x128xf32>
    %99 = tpu.matmul %97, %98, %cst_45 {dimension_numbers = #tpu.dot_dimension_numbers<[2], [0], [0, 1], [1], [0, 0, 0, 1, 1, 1], [], []>} : vector<1x8x32xf32>, vector<32x128xf32>, vector<1x8x128xf32> -> vector<1x8x128xf32>
    %c312 = arith.constant 312 : index
    %c0_46 = arith.constant 0 : index
    %100 = vector.load %arg2[%c312, %c0_46] : memref<896x128xf32, #tpu.memory_space<vmem>>, vector<1x128xf32>
    %101 = vector.shape_cast %100 : vector<1x128xf32> to vector<1x1x128xf32>
    %102 = vector.broadcast %101 : vector<1x1x128xf32> to vector<1x8x128xf32>
    %103 = arith.addf %99, %102 : vector<1x8x128xf32>
    %104 = vector.extract_strided_slice %103 {offsets = [0, 0, 0], sizes = [1, 1, 128], strides = [1, 1, 1]} : vector<1x8x128xf32> to vector<1x1x128xf32>
    %105 = vector.shape_cast %104 : vector<1x1x128xf32> to vector<1x128xf32>
    %106 = vector.extract_strided_slice %103 {offsets = [0, 1, 0], sizes = [1, 1, 128], strides = [1, 1, 1]} : vector<1x8x128xf32> to vector<1x1x128xf32>
    %107 = vector.shape_cast %106 : vector<1x1x128xf32> to vector<1x128xf32>
    %108 = vector.extract_strided_slice %103 {offsets = [0, 2, 0], sizes = [1, 1, 128], strides = [1, 1, 1]} : vector<1x8x128xf32> to vector<1x1x128xf32>
    %109 = vector.shape_cast %108 : vector<1x1x128xf32> to vector<1x128xf32>
    %110 = vector.extract_strided_slice %103 {offsets = [0, 3, 0], sizes = [1, 1, 128], strides = [1, 1, 1]} : vector<1x8x128xf32> to vector<1x1x128xf32>
    %111 = vector.shape_cast %110 : vector<1x1x128xf32> to vector<1x128xf32>
    %112 = vector.extract_strided_slice %103 {offsets = [0, 4, 0], sizes = [1, 1, 128], strides = [1, 1, 1]} : vector<1x8x128xf32> to vector<1x1x128xf32>
    %113 = vector.shape_cast %112 : vector<1x1x128xf32> to vector<1x128xf32>
    %114 = vector.extract_strided_slice %103 {offsets = [0, 5, 0], sizes = [1, 1, 128], strides = [1, 1, 1]} : vector<1x8x128xf32> to vector<1x1x128xf32>
    %115 = vector.shape_cast %114 : vector<1x1x128xf32> to vector<1x128xf32>
    %116 = vector.extract_strided_slice %103 {offsets = [0, 6, 0], sizes = [1, 1, 128], strides = [1, 1, 1]} : vector<1x8x128xf32> to vector<1x1x128xf32>
    %117 = vector.shape_cast %116 : vector<1x1x128xf32> to vector<1x128xf32>
    %118 = vector.extract_strided_slice %103 {offsets = [0, 7, 0], sizes = [1, 1, 128], strides = [1, 1, 1]} : vector<1x8x128xf32> to vector<1x1x128xf32>
    %119 = vector.shape_cast %118 : vector<1x1x128xf32> to vector<1x128xf32>
    %c280 = arith.constant 280 : index
    %c0_47 = arith.constant 0 : index
    %120 = vector.load %arg2[%c280, %c0_47] : memref<896x128xf32, #tpu.memory_space<vmem>>, vector<32x128xf32>
    %121 = arith.negf %105 : vector<1x128xf32>
    %122 = math.exp %121 : vector<1x128xf32>
    %cst_48 = arith.constant 1.000000e+00 : f32
    %123 = vector.broadcast %cst_48 : f32 to vector<1x128xf32>
    %124 = arith.addf %123, %122 : vector<1x128xf32>
    %125 = arith.divf %123, %124 : vector<1x128xf32>
    %126 = vector.extract_strided_slice %105 {offsets = [0, 64], sizes = [1, 32], strides = [1, 1]} : vector<1x128xf32> to vector<1x32xf32>
    %127 = math.tanh %126 : vector<1x32xf32>
    %128 = vector.extract_strided_slice %125 {offsets = [0, 0], sizes = [1, 32], strides = [1, 1]} : vector<1x128xf32> to vector<1x32xf32>
    %129 = vector.extract_strided_slice %125 {offsets = [0, 96], sizes = [1, 32], strides = [1, 1]} : vector<1x128xf32> to vector<1x32xf32>
    %130 = arith.mulf %128, %127 : vector<1x32xf32>
    %131 = math.tanh %130 : vector<1x32xf32>
    %132 = arith.mulf %129, %131 : vector<1x32xf32>
    %cst_49 = arith.constant dense<0.000000e+00> : vector<1x128xf32>
    %133 = tpu.matmul %132, %120, %cst_49 {dimension_numbers = #tpu.dot_dimension_numbers<[1], [0], [0], [1], [0, 0, 1, 1], [], []>} : vector<1x32xf32>, vector<32x128xf32>, vector<1x128xf32> -> vector<1x128xf32>
    %134 = arith.addf %107, %133 : vector<1x128xf32>
    %135 = arith.negf %134 : vector<1x128xf32>
    %136 = math.exp %135 : vector<1x128xf32>
    %cst_50 = arith.constant 1.000000e+00 : f32
    %137 = vector.broadcast %cst_50 : f32 to vector<1x128xf32>
    %138 = arith.addf %137, %136 : vector<1x128xf32>
    %139 = arith.divf %137, %138 : vector<1x128xf32>
    %140 = vector.extract_strided_slice %134 {offsets = [0, 64], sizes = [1, 32], strides = [1, 1]} : vector<1x128xf32> to vector<1x32xf32>
    %141 = math.tanh %140 : vector<1x32xf32>
    %142 = vector.extract_strided_slice %139 {offsets = [0, 0], sizes = [1, 32], strides = [1, 1]} : vector<1x128xf32> to vector<1x32xf32>
    %143 = vector.extract_strided_slice %139 {offsets = [0, 32], sizes = [1, 32], strides = [1, 1]} : vector<1x128xf32> to vector<1x32xf32>
    %144 = vector.extract_strided_slice %139 {offsets = [0, 96], sizes = [1, 32], strides = [1, 1]} : vector<1x128xf32> to vector<1x32xf32>
    %145 = arith.mulf %143, %130 : vector<1x32xf32>
    %146 = arith.mulf %142, %141 : vector<1x32xf32>
    %147 = arith.addf %145, %146 : vector<1x32xf32>
    %148 = math.tanh %147 : vector<1x32xf32>
    %149 = arith.mulf %144, %148 : vector<1x32xf32>
    %cst_51 = arith.constant dense<0.000000e+00> : vector<1x128xf32>
    %150 = tpu.matmul %149, %120, %cst_51 {dimension_numbers = #tpu.dot_dimension_numbers<[1], [0], [0], [1], [0, 0, 1, 1], [], []>} : vector<1x32xf32>, vector<32x128xf32>, vector<1x128xf32> -> vector<1x128xf32>
    %151 = arith.addf %109, %150 : vector<1x128xf32>
    %152 = arith.negf %151 : vector<1x128xf32>
    %153 = math.exp %152 : vector<1x128xf32>
    %cst_52 = arith.constant 1.000000e+00 : f32
    %154 = vector.broadcast %cst_52 : f32 to vector<1x128xf32>
    %155 = arith.addf %154, %153 : vector<1x128xf32>
    %156 = arith.divf %154, %155 : vector<1x128xf32>
    %157 = vector.extract_strided_slice %151 {offsets = [0, 64], sizes = [1, 32], strides = [1, 1]} : vector<1x128xf32> to vector<1x32xf32>
    %158 = math.tanh %157 : vector<1x32xf32>
    %159 = vector.extract_strided_slice %156 {offsets = [0, 0], sizes = [1, 32], strides = [1, 1]} : vector<1x128xf32> to vector<1x32xf32>
    %160 = vector.extract_strided_slice %156 {offsets = [0, 32], sizes = [1, 32], strides = [1, 1]} : vector<1x128xf32> to vector<1x32xf32>
    %161 = vector.extract_strided_slice %156 {offsets = [0, 96], sizes = [1, 32], strides = [1, 1]} : vector<1x128xf32> to vector<1x32xf32>
    %162 = arith.mulf %160, %147 : vector<1x32xf32>
    %163 = arith.mulf %159, %158 : vector<1x32xf32>
    %164 = arith.addf %162, %163 : vector<1x32xf32>
    %165 = math.tanh %164 : vector<1x32xf32>
    %166 = arith.mulf %161, %165 : vector<1x32xf32>
    %cst_53 = arith.constant dense<0.000000e+00> : vector<1x128xf32>
    %167 = tpu.matmul %166, %120, %cst_53 {dimension_numbers = #tpu.dot_dimension_numbers<[1], [0], [0], [1], [0, 0, 1, 1], [], []>} : vector<1x32xf32>, vector<32x128xf32>, vector<1x128xf32> -> vector<1x128xf32>
    %168 = arith.addf %111, %167 : vector<1x128xf32>
    %169 = arith.negf %168 : vector<1x128xf32>
    %170 = math.exp %169 : vector<1x128xf32>
    %cst_54 = arith.constant 1.000000e+00 : f32
    %171 = vector.broadcast %cst_54 : f32 to vector<1x128xf32>
    %172 = arith.addf %171, %170 : vector<1x128xf32>
    %173 = arith.divf %171, %172 : vector<1x128xf32>
    %174 = vector.extract_strided_slice %168 {offsets = [0, 64], sizes = [1, 32], strides = [1, 1]} : vector<1x128xf32> to vector<1x32xf32>
    %175 = math.tanh %174 : vector<1x32xf32>
    %176 = vector.extract_strided_slice %173 {offsets = [0, 0], sizes = [1, 32], strides = [1, 1]} : vector<1x128xf32> to vector<1x32xf32>
    %177 = vector.extract_strided_slice %173 {offsets = [0, 32], sizes = [1, 32], strides = [1, 1]} : vector<1x128xf32> to vector<1x32xf32>
    %178 = vector.extract_strided_slice %173 {offsets = [0, 96], sizes = [1, 32], strides = [1, 1]} : vector<1x128xf32> to vector<1x32xf32>
    %179 = arith.mulf %177, %164 : vector<1x32xf32>
    %180 = arith.mulf %176, %175 : vector<1x32xf32>
    %181 = arith.addf %179, %180 : vector<1x32xf32>
    %182 = math.tanh %181 : vector<1x32xf32>
    %183 = arith.mulf %178, %182 : vector<1x32xf32>
    %cst_55 = arith.constant dense<0.000000e+00> : vector<1x128xf32>
    %184 = tpu.matmul %183, %120, %cst_55 {dimension_numbers = #tpu.dot_dimension_numbers<[1], [0], [0], [1], [0, 0, 1, 1], [], []>} : vector<1x32xf32>, vector<32x128xf32>, vector<1x128xf32> -> vector<1x128xf32>
    %185 = arith.addf %113, %184 : vector<1x128xf32>
    %186 = arith.negf %185 : vector<1x128xf32>
    %187 = math.exp %186 : vector<1x128xf32>
    %cst_56 = arith.constant 1.000000e+00 : f32
    %188 = vector.broadcast %cst_56 : f32 to vector<1x128xf32>
    %189 = arith.addf %188, %187 : vector<1x128xf32>
    %190 = arith.divf %188, %189 : vector<1x128xf32>
    %191 = vector.extract_strided_slice %185 {offsets = [0, 64], sizes = [1, 32], strides = [1, 1]} : vector<1x128xf32> to vector<1x32xf32>
    %192 = math.tanh %191 : vector<1x32xf32>
    %193 = vector.extract_strided_slice %190 {offsets = [0, 0], sizes = [1, 32], strides = [1, 1]} : vector<1x128xf32> to vector<1x32xf32>
    %194 = vector.extract_strided_slice %190 {offsets = [0, 32], sizes = [1, 32], strides = [1, 1]} : vector<1x128xf32> to vector<1x32xf32>
    %195 = vector.extract_strided_slice %190 {offsets = [0, 96], sizes = [1, 32], strides = [1, 1]} : vector<1x128xf32> to vector<1x32xf32>
    %196 = arith.mulf %194, %181 : vector<1x32xf32>
    %197 = arith.mulf %193, %192 : vector<1x32xf32>
    %198 = arith.addf %196, %197 : vector<1x32xf32>
    %199 = math.tanh %198 : vector<1x32xf32>
    %200 = arith.mulf %195, %199 : vector<1x32xf32>
    %cst_57 = arith.constant dense<0.000000e+00> : vector<1x128xf32>
    %201 = tpu.matmul %200, %120, %cst_57 {dimension_numbers = #tpu.dot_dimension_numbers<[1], [0], [0], [1], [0, 0, 1, 1], [], []>} : vector<1x32xf32>, vector<32x128xf32>, vector<1x128xf32> -> vector<1x128xf32>
    %202 = arith.addf %115, %201 : vector<1x128xf32>
    %203 = arith.negf %202 : vector<1x128xf32>
    %204 = math.exp %203 : vector<1x128xf32>
    %cst_58 = arith.constant 1.000000e+00 : f32
    %205 = vector.broadcast %cst_58 : f32 to vector<1x128xf32>
    %206 = arith.addf %205, %204 : vector<1x128xf32>
    %207 = arith.divf %205, %206 : vector<1x128xf32>
    %208 = vector.extract_strided_slice %202 {offsets = [0, 64], sizes = [1, 32], strides = [1, 1]} : vector<1x128xf32> to vector<1x32xf32>
    %209 = math.tanh %208 : vector<1x32xf32>
    %210 = vector.extract_strided_slice %207 {offsets = [0, 0], sizes = [1, 32], strides = [1, 1]} : vector<1x128xf32> to vector<1x32xf32>
    %211 = vector.extract_strided_slice %207 {offsets = [0, 32], sizes = [1, 32], strides = [1, 1]} : vector<1x128xf32> to vector<1x32xf32>
    %212 = vector.extract_strided_slice %207 {offsets = [0, 96], sizes = [1, 32], strides = [1, 1]} : vector<1x128xf32> to vector<1x32xf32>
    %213 = arith.mulf %211, %198 : vector<1x32xf32>
    %214 = arith.mulf %210, %209 : vector<1x32xf32>
    %215 = arith.addf %213, %214 : vector<1x32xf32>
    %216 = math.tanh %215 : vector<1x32xf32>
    %217 = arith.mulf %212, %216 : vector<1x32xf32>
    %cst_59 = arith.constant dense<0.000000e+00> : vector<1x128xf32>
    %218 = tpu.matmul %217, %120, %cst_59 {dimension_numbers = #tpu.dot_dimension_numbers<[1], [0], [0], [1], [0, 0, 1, 1], [], []>} : vector<1x32xf32>, vector<32x128xf32>, vector<1x128xf32> -> vector<1x128xf32>
    %219 = arith.addf %117, %218 : vector<1x128xf32>
    %220 = arith.negf %219 : vector<1x128xf32>
    %221 = math.exp %220 : vector<1x128xf32>
    %cst_60 = arith.constant 1.000000e+00 : f32
    %222 = vector.broadcast %cst_60 : f32 to vector<1x128xf32>
    %223 = arith.addf %222, %221 : vector<1x128xf32>
    %224 = arith.divf %222, %223 : vector<1x128xf32>
    %225 = vector.extract_strided_slice %219 {offsets = [0, 64], sizes = [1, 32], strides = [1, 1]} : vector<1x128xf32> to vector<1x32xf32>
    %226 = math.tanh %225 : vector<1x32xf32>
    %227 = vector.extract_strided_slice %224 {offsets = [0, 0], sizes = [1, 32], strides = [1, 1]} : vector<1x128xf32> to vector<1x32xf32>
    %228 = vector.extract_strided_slice %224 {offsets = [0, 32], sizes = [1, 32], strides = [1, 1]} : vector<1x128xf32> to vector<1x32xf32>
    %229 = vector.extract_strided_slice %224 {offsets = [0, 96], sizes = [1, 32], strides = [1, 1]} : vector<1x128xf32> to vector<1x32xf32>
    %230 = arith.mulf %228, %215 : vector<1x32xf32>
    %231 = arith.mulf %227, %226 : vector<1x32xf32>
    %232 = arith.addf %230, %231 : vector<1x32xf32>
    %233 = math.tanh %232 : vector<1x32xf32>
    %234 = arith.mulf %229, %233 : vector<1x32xf32>
    %cst_61 = arith.constant dense<0.000000e+00> : vector<1x128xf32>
    %235 = tpu.matmul %234, %120, %cst_61 {dimension_numbers = #tpu.dot_dimension_numbers<[1], [0], [0], [1], [0, 0, 1, 1], [], []>} : vector<1x32xf32>, vector<32x128xf32>, vector<1x128xf32> -> vector<1x128xf32>
    %236 = arith.addf %119, %235 : vector<1x128xf32>
    %237 = arith.negf %236 : vector<1x128xf32>
    %238 = math.exp %237 : vector<1x128xf32>
    %cst_62 = arith.constant 1.000000e+00 : f32
    %239 = vector.broadcast %cst_62 : f32 to vector<1x128xf32>
    %240 = arith.addf %239, %238 : vector<1x128xf32>
    %241 = arith.divf %239, %240 : vector<1x128xf32>
    %242 = vector.extract_strided_slice %236 {offsets = [0, 64], sizes = [1, 32], strides = [1, 1]} : vector<1x128xf32> to vector<1x32xf32>
    %243 = math.tanh %242 : vector<1x32xf32>
    %244 = vector.extract_strided_slice %241 {offsets = [0, 0], sizes = [1, 32], strides = [1, 1]} : vector<1x128xf32> to vector<1x32xf32>
    %245 = vector.extract_strided_slice %241 {offsets = [0, 32], sizes = [1, 32], strides = [1, 1]} : vector<1x128xf32> to vector<1x32xf32>
    %246 = vector.extract_strided_slice %241 {offsets = [0, 96], sizes = [1, 32], strides = [1, 1]} : vector<1x128xf32> to vector<1x32xf32>
    %247 = arith.mulf %245, %232 : vector<1x32xf32>
    %248 = arith.mulf %244, %243 : vector<1x32xf32>
    %249 = arith.addf %247, %248 : vector<1x32xf32>
    %250 = math.tanh %249 : vector<1x32xf32>
    %251 = arith.mulf %246, %250 : vector<1x32xf32>
    %252 = tpu.concatenate %132, %149, %166, %183, %200, %217, %234, %251 in 1 : vector<1x32xf32>, vector<1x32xf32>, vector<1x32xf32>, vector<1x32xf32>, vector<1x32xf32>, vector<1x32xf32>, vector<1x32xf32>, vector<1x32xf32> -> vector<1x256xf32>
    %c320 = arith.constant 320 : index
    %c0_63 = arith.constant 0 : index
    %253 = vector.load %arg2[%c320, %c0_63] : memref<896x128xf32, #tpu.memory_space<vmem>>, vector<256x64xf32>
    %cst_64 = arith.constant dense<0.000000e+00> : vector<1x64xf32>
    %254 = tpu.matmul %252, %253, %cst_64 {dimension_numbers = #tpu.dot_dimension_numbers<[1], [0], [0], [1], [0, 0, 1, 1], [], []>} : vector<1x256xf32>, vector<256x64xf32>, vector<1x64xf32> -> vector<1x64xf32>
    %c576 = arith.constant 576 : index
    %c0_65 = arith.constant 0 : index
    %255 = vector.load %arg2[%c576, %c0_65] : memref<896x128xf32, #tpu.memory_space<vmem>>, vector<1x64xf32>
    %256 = arith.addf %254, %255 : vector<1x64xf32>
    %cst_66 = arith.constant 0.000000e+00 : f32
    %257 = vector.broadcast %cst_66 : f32 to vector<1x64xf32>
    %258 = arith.maximumf %256, %257 : vector<1x64xf32>
    %c584 = arith.constant 584 : index
    %c0_67 = arith.constant 0 : index
    %259 = vector.load %arg2[%c584, %c0_67] : memref<896x128xf32, #tpu.memory_space<vmem>>, vector<64x32xf32>
    %cst_68 = arith.constant dense<0.000000e+00> : vector<1x32xf32>
    %260 = tpu.matmul %258, %259, %cst_68 {dimension_numbers = #tpu.dot_dimension_numbers<[1], [0], [0], [1], [0, 0, 1, 1], [], []>} : vector<1x64xf32>, vector<64x32xf32>, vector<1x32xf32> -> vector<1x32xf32>
    %c648 = arith.constant 648 : index
    %c0_69 = arith.constant 0 : index
    %261 = vector.load %arg2[%c648, %c0_69] : memref<896x128xf32, #tpu.memory_space<vmem>>, vector<1x32xf32>
    %262 = arith.addf %260, %261 : vector<1x32xf32>
    %c656 = arith.constant 656 : index
    %c0_70 = arith.constant 0 : index
    %263 = vector.load %arg2[%c656, %c0_70] : memref<896x128xf32, #tpu.memory_space<vmem>>, vector<32x64xf32>
    %cst_71 = arith.constant dense<0.000000e+00> : vector<1x64xf32>
    %264 = tpu.matmul %262, %263, %cst_71 {dimension_numbers = #tpu.dot_dimension_numbers<[1], [0], [0], [1], [0, 0, 1, 1], [], []>} : vector<1x32xf32>, vector<32x64xf32>, vector<1x64xf32> -> vector<1x64xf32>
    %c688 = arith.constant 688 : index
    %c0_72 = arith.constant 0 : index
    %265 = vector.load %arg2[%c688, %c0_72] : memref<896x128xf32, #tpu.memory_space<vmem>>, vector<1x64xf32>
    %266 = arith.addf %264, %265 : vector<1x64xf32>
    %cst_73 = arith.constant 0.000000e+00 : f32
    %267 = vector.broadcast %cst_73 : f32 to vector<1x64xf32>
    %268 = arith.maximumf %266, %267 : vector<1x64xf32>
    %c0_74 = arith.constant 0 : index
    %c0_75 = arith.constant 0 : index
    %269 = vector.load %arg3[%c0_74, %c0_75] : memref<72x1024xf32, #tpu.memory_space<vmem>>, vector<64x1024xf32>
    %cst_76 = arith.constant dense<0.000000e+00> : vector<1x1024xf32>
    %270 = tpu.matmul %268, %269, %cst_76 {dimension_numbers = #tpu.dot_dimension_numbers<[1], [0], [0], [1], [0, 0, 1, 1], [], []>} : vector<1x64xf32>, vector<64x1024xf32>, vector<1x1024xf32> -> vector<1x1024xf32>
    %c64_77 = arith.constant 64 : index
    %c0_78 = arith.constant 0 : index
    %271 = vector.load %arg3[%c64_77, %c0_78] : memref<72x1024xf32, #tpu.memory_space<vmem>>, vector<1x1024xf32>
    %272 = arith.addf %270, %271 : vector<1x1024xf32>
    %273 = vector.extract_strided_slice %272 {offsets = [0, 0], sizes = [1, 128], strides = [1, 1]} : vector<1x1024xf32> to vector<1x128xf32>
    %274 = vector.extract_strided_slice %272 {offsets = [0, 128], sizes = [1, 128], strides = [1, 1]} : vector<1x1024xf32> to vector<1x128xf32>
    %275 = vector.extract_strided_slice %272 {offsets = [0, 256], sizes = [1, 128], strides = [1, 1]} : vector<1x1024xf32> to vector<1x128xf32>
    %276 = vector.extract_strided_slice %272 {offsets = [0, 384], sizes = [1, 128], strides = [1, 1]} : vector<1x1024xf32> to vector<1x128xf32>
    %277 = vector.extract_strided_slice %272 {offsets = [0, 512], sizes = [1, 128], strides = [1, 1]} : vector<1x1024xf32> to vector<1x128xf32>
    %278 = vector.extract_strided_slice %272 {offsets = [0, 640], sizes = [1, 128], strides = [1, 1]} : vector<1x1024xf32> to vector<1x128xf32>
    %279 = vector.extract_strided_slice %272 {offsets = [0, 768], sizes = [1, 128], strides = [1, 1]} : vector<1x1024xf32> to vector<1x128xf32>
    %280 = vector.extract_strided_slice %272 {offsets = [0, 896], sizes = [1, 128], strides = [1, 1]} : vector<1x1024xf32> to vector<1x128xf32>
    %c696 = arith.constant 696 : index
    %c0_79 = arith.constant 0 : index
    %281 = vector.load %arg2[%c696, %c0_79] : memref<896x128xf32, #tpu.memory_space<vmem>>, vector<32x128xf32>
    %282 = arith.negf %273 : vector<1x128xf32>
    %283 = math.exp %282 : vector<1x128xf32>
    %cst_80 = arith.constant 1.000000e+00 : f32
    %284 = vector.broadcast %cst_80 : f32 to vector<1x128xf32>
    %285 = arith.addf %284, %283 : vector<1x128xf32>
    %286 = arith.divf %284, %285 : vector<1x128xf32>
    %287 = vector.extract_strided_slice %273 {offsets = [0, 64], sizes = [1, 32], strides = [1, 1]} : vector<1x128xf32> to vector<1x32xf32>
    %288 = math.tanh %287 : vector<1x32xf32>
    %289 = vector.extract_strided_slice %286 {offsets = [0, 0], sizes = [1, 32], strides = [1, 1]} : vector<1x128xf32> to vector<1x32xf32>
    %290 = vector.extract_strided_slice %286 {offsets = [0, 96], sizes = [1, 32], strides = [1, 1]} : vector<1x128xf32> to vector<1x32xf32>
    %291 = arith.mulf %289, %288 : vector<1x32xf32>
    %292 = math.tanh %291 : vector<1x32xf32>
    %293 = arith.mulf %290, %292 : vector<1x32xf32>
    %cst_81 = arith.constant dense<0.000000e+00> : vector<1x128xf32>
    %294 = tpu.matmul %293, %281, %cst_81 {dimension_numbers = #tpu.dot_dimension_numbers<[1], [0], [0], [1], [0, 0, 1, 1], [], []>} : vector<1x32xf32>, vector<32x128xf32>, vector<1x128xf32> -> vector<1x128xf32>
    %295 = arith.addf %274, %294 : vector<1x128xf32>
    %296 = arith.negf %295 : vector<1x128xf32>
    %297 = math.exp %296 : vector<1x128xf32>
    %cst_82 = arith.constant 1.000000e+00 : f32
    %298 = vector.broadcast %cst_82 : f32 to vector<1x128xf32>
    %299 = arith.addf %298, %297 : vector<1x128xf32>
    %300 = arith.divf %298, %299 : vector<1x128xf32>
    %301 = vector.extract_strided_slice %295 {offsets = [0, 64], sizes = [1, 32], strides = [1, 1]} : vector<1x128xf32> to vector<1x32xf32>
    %302 = math.tanh %301 : vector<1x32xf32>
    %303 = vector.extract_strided_slice %300 {offsets = [0, 0], sizes = [1, 32], strides = [1, 1]} : vector<1x128xf32> to vector<1x32xf32>
    %304 = vector.extract_strided_slice %300 {offsets = [0, 32], sizes = [1, 32], strides = [1, 1]} : vector<1x128xf32> to vector<1x32xf32>
    %305 = vector.extract_strided_slice %300 {offsets = [0, 96], sizes = [1, 32], strides = [1, 1]} : vector<1x128xf32> to vector<1x32xf32>
    %306 = arith.mulf %304, %291 : vector<1x32xf32>
    %307 = arith.mulf %303, %302 : vector<1x32xf32>
    %308 = arith.addf %306, %307 : vector<1x32xf32>
    %309 = math.tanh %308 : vector<1x32xf32>
    %310 = arith.mulf %305, %309 : vector<1x32xf32>
    %cst_83 = arith.constant dense<0.000000e+00> : vector<1x128xf32>
    %311 = tpu.matmul %310, %281, %cst_83 {dimension_numbers = #tpu.dot_dimension_numbers<[1], [0], [0], [1], [0, 0, 1, 1], [], []>} : vector<1x32xf32>, vector<32x128xf32>, vector<1x128xf32> -> vector<1x128xf32>
    %312 = arith.addf %275, %311 : vector<1x128xf32>
    %313 = arith.negf %312 : vector<1x128xf32>
    %314 = math.exp %313 : vector<1x128xf32>
    %cst_84 = arith.constant 1.000000e+00 : f32
    %315 = vector.broadcast %cst_84 : f32 to vector<1x128xf32>
    %316 = arith.addf %315, %314 : vector<1x128xf32>
    %317 = arith.divf %315, %316 : vector<1x128xf32>
    %318 = vector.extract_strided_slice %312 {offsets = [0, 64], sizes = [1, 32], strides = [1, 1]} : vector<1x128xf32> to vector<1x32xf32>
    %319 = math.tanh %318 : vector<1x32xf32>
    %320 = vector.extract_strided_slice %317 {offsets = [0, 0], sizes = [1, 32], strides = [1, 1]} : vector<1x128xf32> to vector<1x32xf32>
    %321 = vector.extract_strided_slice %317 {offsets = [0, 32], sizes = [1, 32], strides = [1, 1]} : vector<1x128xf32> to vector<1x32xf32>
    %322 = vector.extract_strided_slice %317 {offsets = [0, 96], sizes = [1, 32], strides = [1, 1]} : vector<1x128xf32> to vector<1x32xf32>
    %323 = arith.mulf %321, %308 : vector<1x32xf32>
    %324 = arith.mulf %320, %319 : vector<1x32xf32>
    %325 = arith.addf %323, %324 : vector<1x32xf32>
    %326 = math.tanh %325 : vector<1x32xf32>
    %327 = arith.mulf %322, %326 : vector<1x32xf32>
    %cst_85 = arith.constant dense<0.000000e+00> : vector<1x128xf32>
    %328 = tpu.matmul %327, %281, %cst_85 {dimension_numbers = #tpu.dot_dimension_numbers<[1], [0], [0], [1], [0, 0, 1, 1], [], []>} : vector<1x32xf32>, vector<32x128xf32>, vector<1x128xf32> -> vector<1x128xf32>
    %329 = arith.addf %276, %328 : vector<1x128xf32>
    %330 = arith.negf %329 : vector<1x128xf32>
    %331 = math.exp %330 : vector<1x128xf32>
    %cst_86 = arith.constant 1.000000e+00 : f32
    %332 = vector.broadcast %cst_86 : f32 to vector<1x128xf32>
    %333 = arith.addf %332, %331 : vector<1x128xf32>
    %334 = arith.divf %332, %333 : vector<1x128xf32>
    %335 = vector.extract_strided_slice %329 {offsets = [0, 64], sizes = [1, 32], strides = [1, 1]} : vector<1x128xf32> to vector<1x32xf32>
    %336 = math.tanh %335 : vector<1x32xf32>
    %337 = vector.extract_strided_slice %334 {offsets = [0, 0], sizes = [1, 32], strides = [1, 1]} : vector<1x128xf32> to vector<1x32xf32>
    %338 = vector.extract_strided_slice %334 {offsets = [0, 32], sizes = [1, 32], strides = [1, 1]} : vector<1x128xf32> to vector<1x32xf32>
    %339 = vector.extract_strided_slice %334 {offsets = [0, 96], sizes = [1, 32], strides = [1, 1]} : vector<1x128xf32> to vector<1x32xf32>
    %340 = arith.mulf %338, %325 : vector<1x32xf32>
    %341 = arith.mulf %337, %336 : vector<1x32xf32>
    %342 = arith.addf %340, %341 : vector<1x32xf32>
    %343 = math.tanh %342 : vector<1x32xf32>
    %344 = arith.mulf %339, %343 : vector<1x32xf32>
    %cst_87 = arith.constant dense<0.000000e+00> : vector<1x128xf32>
    %345 = tpu.matmul %344, %281, %cst_87 {dimension_numbers = #tpu.dot_dimension_numbers<[1], [0], [0], [1], [0, 0, 1, 1], [], []>} : vector<1x32xf32>, vector<32x128xf32>, vector<1x128xf32> -> vector<1x128xf32>
    %346 = arith.addf %277, %345 : vector<1x128xf32>
    %347 = arith.negf %346 : vector<1x128xf32>
    %348 = math.exp %347 : vector<1x128xf32>
    %cst_88 = arith.constant 1.000000e+00 : f32
    %349 = vector.broadcast %cst_88 : f32 to vector<1x128xf32>
    %350 = arith.addf %349, %348 : vector<1x128xf32>
    %351 = arith.divf %349, %350 : vector<1x128xf32>
    %352 = vector.extract_strided_slice %346 {offsets = [0, 64], sizes = [1, 32], strides = [1, 1]} : vector<1x128xf32> to vector<1x32xf32>
    %353 = math.tanh %352 : vector<1x32xf32>
    %354 = vector.extract_strided_slice %351 {offsets = [0, 0], sizes = [1, 32], strides = [1, 1]} : vector<1x128xf32> to vector<1x32xf32>
    %355 = vector.extract_strided_slice %351 {offsets = [0, 32], sizes = [1, 32], strides = [1, 1]} : vector<1x128xf32> to vector<1x32xf32>
    %356 = vector.extract_strided_slice %351 {offsets = [0, 96], sizes = [1, 32], strides = [1, 1]} : vector<1x128xf32> to vector<1x32xf32>
    %357 = arith.mulf %355, %342 : vector<1x32xf32>
    %358 = arith.mulf %354, %353 : vector<1x32xf32>
    %359 = arith.addf %357, %358 : vector<1x32xf32>
    %360 = math.tanh %359 : vector<1x32xf32>
    %361 = arith.mulf %356, %360 : vector<1x32xf32>
    %cst_89 = arith.constant dense<0.000000e+00> : vector<1x128xf32>
    %362 = tpu.matmul %361, %281, %cst_89 {dimension_numbers = #tpu.dot_dimension_numbers<[1], [0], [0], [1], [0, 0, 1, 1], [], []>} : vector<1x32xf32>, vector<32x128xf32>, vector<1x128xf32> -> vector<1x128xf32>
    %363 = arith.addf %278, %362 : vector<1x128xf32>
    %364 = arith.negf %363 : vector<1x128xf32>
    %365 = math.exp %364 : vector<1x128xf32>
    %cst_90 = arith.constant 1.000000e+00 : f32
    %366 = vector.broadcast %cst_90 : f32 to vector<1x128xf32>
    %367 = arith.addf %366, %365 : vector<1x128xf32>
    %368 = arith.divf %366, %367 : vector<1x128xf32>
    %369 = vector.extract_strided_slice %363 {offsets = [0, 64], sizes = [1, 32], strides = [1, 1]} : vector<1x128xf32> to vector<1x32xf32>
    %370 = math.tanh %369 : vector<1x32xf32>
    %371 = vector.extract_strided_slice %368 {offsets = [0, 0], sizes = [1, 32], strides = [1, 1]} : vector<1x128xf32> to vector<1x32xf32>
    %372 = vector.extract_strided_slice %368 {offsets = [0, 32], sizes = [1, 32], strides = [1, 1]} : vector<1x128xf32> to vector<1x32xf32>
    %373 = vector.extract_strided_slice %368 {offsets = [0, 96], sizes = [1, 32], strides = [1, 1]} : vector<1x128xf32> to vector<1x32xf32>
    %374 = arith.mulf %372, %359 : vector<1x32xf32>
    %375 = arith.mulf %371, %370 : vector<1x32xf32>
    %376 = arith.addf %374, %375 : vector<1x32xf32>
    %377 = math.tanh %376 : vector<1x32xf32>
    %378 = arith.mulf %373, %377 : vector<1x32xf32>
    %cst_91 = arith.constant dense<0.000000e+00> : vector<1x128xf32>
    %379 = tpu.matmul %378, %281, %cst_91 {dimension_numbers = #tpu.dot_dimension_numbers<[1], [0], [0], [1], [0, 0, 1, 1], [], []>} : vector<1x32xf32>, vector<32x128xf32>, vector<1x128xf32> -> vector<1x128xf32>
    %380 = arith.addf %279, %379 : vector<1x128xf32>
    %381 = arith.negf %380 : vector<1x128xf32>
    %382 = math.exp %381 : vector<1x128xf32>
    %cst_92 = arith.constant 1.000000e+00 : f32
    %383 = vector.broadcast %cst_92 : f32 to vector<1x128xf32>
    %384 = arith.addf %383, %382 : vector<1x128xf32>
    %385 = arith.divf %383, %384 : vector<1x128xf32>
    %386 = vector.extract_strided_slice %380 {offsets = [0, 64], sizes = [1, 32], strides = [1, 1]} : vector<1x128xf32> to vector<1x32xf32>
    %387 = math.tanh %386 : vector<1x32xf32>
    %388 = vector.extract_strided_slice %385 {offsets = [0, 0], sizes = [1, 32], strides = [1, 1]} : vector<1x128xf32> to vector<1x32xf32>
    %389 = vector.extract_strided_slice %385 {offsets = [0, 32], sizes = [1, 32], strides = [1, 1]} : vector<1x128xf32> to vector<1x32xf32>
    %390 = vector.extract_strided_slice %385 {offsets = [0, 96], sizes = [1, 32], strides = [1, 1]} : vector<1x128xf32> to vector<1x32xf32>
    %391 = arith.mulf %389, %376 : vector<1x32xf32>
    %392 = arith.mulf %388, %387 : vector<1x32xf32>
    %393 = arith.addf %391, %392 : vector<1x32xf32>
    %394 = math.tanh %393 : vector<1x32xf32>
    %395 = arith.mulf %390, %394 : vector<1x32xf32>
    %cst_93 = arith.constant dense<0.000000e+00> : vector<1x128xf32>
    %396 = tpu.matmul %395, %281, %cst_93 {dimension_numbers = #tpu.dot_dimension_numbers<[1], [0], [0], [1], [0, 0, 1, 1], [], []>} : vector<1x32xf32>, vector<32x128xf32>, vector<1x128xf32> -> vector<1x128xf32>
    %397 = arith.addf %280, %396 : vector<1x128xf32>
    %398 = arith.negf %397 : vector<1x128xf32>
    %399 = math.exp %398 : vector<1x128xf32>
    %cst_94 = arith.constant 1.000000e+00 : f32
    %400 = vector.broadcast %cst_94 : f32 to vector<1x128xf32>
    %401 = arith.addf %400, %399 : vector<1x128xf32>
    %402 = arith.divf %400, %401 : vector<1x128xf32>
    %403 = vector.extract_strided_slice %397 {offsets = [0, 64], sizes = [1, 32], strides = [1, 1]} : vector<1x128xf32> to vector<1x32xf32>
    %404 = math.tanh %403 : vector<1x32xf32>
    %405 = vector.extract_strided_slice %402 {offsets = [0, 0], sizes = [1, 32], strides = [1, 1]} : vector<1x128xf32> to vector<1x32xf32>
    %406 = vector.extract_strided_slice %402 {offsets = [0, 32], sizes = [1, 32], strides = [1, 1]} : vector<1x128xf32> to vector<1x32xf32>
    %407 = vector.extract_strided_slice %402 {offsets = [0, 96], sizes = [1, 32], strides = [1, 1]} : vector<1x128xf32> to vector<1x32xf32>
    %408 = arith.mulf %406, %393 : vector<1x32xf32>
    %409 = arith.mulf %405, %404 : vector<1x32xf32>
    %410 = arith.addf %408, %409 : vector<1x32xf32>
    %411 = math.tanh %410 : vector<1x32xf32>
    %412 = arith.mulf %407, %411 : vector<1x32xf32>
    %413 = vector.shape_cast %293 : vector<1x32xf32> to vector<1x1x32xf32>
    %414 = vector.shape_cast %310 : vector<1x32xf32> to vector<1x1x32xf32>
    %415 = vector.shape_cast %327 : vector<1x32xf32> to vector<1x1x32xf32>
    %416 = vector.shape_cast %344 : vector<1x32xf32> to vector<1x1x32xf32>
    %417 = vector.shape_cast %361 : vector<1x32xf32> to vector<1x1x32xf32>
    %418 = vector.shape_cast %378 : vector<1x32xf32> to vector<1x1x32xf32>
    %419 = vector.shape_cast %395 : vector<1x32xf32> to vector<1x1x32xf32>
    %420 = vector.shape_cast %412 : vector<1x32xf32> to vector<1x1x32xf32>
    %421 = tpu.concatenate %413, %414, %415, %416, %417, %418, %419, %420 in 1 : vector<1x1x32xf32>, vector<1x1x32xf32>, vector<1x1x32xf32>, vector<1x1x32xf32>, vector<1x1x32xf32>, vector<1x1x32xf32>, vector<1x1x32xf32>, vector<1x1x32xf32> -> vector<1x8x32xf32>
    %c728 = arith.constant 728 : index
    %c0_95 = arith.constant 0 : index
    %422 = vector.load %arg2[%c728, %c0_95] : memref<896x128xf32, #tpu.memory_space<vmem>>, vector<32x16xf32>
    %cst_96 = arith.constant dense<0.000000e+00> : vector<1x8x16xf32>
    %423 = tpu.matmul %421, %422, %cst_96 {dimension_numbers = #tpu.dot_dimension_numbers<[2], [0], [0, 1], [1], [0, 0, 0, 1, 1, 1], [], []>} : vector<1x8x32xf32>, vector<32x16xf32>, vector<1x8x16xf32> -> vector<1x8x16xf32>
    %c760 = arith.constant 760 : index
    %c0_97 = arith.constant 0 : index
    %424 = vector.load %arg2[%c760, %c0_97] : memref<896x128xf32, #tpu.memory_space<vmem>>, vector<1x16xf32>
    %425 = vector.shape_cast %424 : vector<1x16xf32> to vector<1x1x16xf32>
    %426 = vector.broadcast %425 : vector<1x1x16xf32> to vector<1x8x16xf32>
    %427 = arith.addf %423, %426 : vector<1x8x16xf32>
    %cst_98 = arith.constant 0.000000e+00 : f32
    %428 = vector.broadcast %cst_98 : f32 to vector<1x8x16xf32>
    %429 = arith.maximumf %427, %428 : vector<1x8x16xf32>
    %c768 = arith.constant 768 : index
    %c0_99 = arith.constant 0 : index
    %430 = vector.load %arg2[%c768, %c0_99] : memref<896x128xf32, #tpu.memory_space<vmem>>, vector<16x4xf32>
    %cst_100 = arith.constant dense<0.000000e+00> : vector<1x8x4xf32>
    %431 = tpu.matmul %429, %430, %cst_100 {dimension_numbers = #tpu.dot_dimension_numbers<[2], [0], [0, 1], [1], [0, 0, 0, 1, 1, 1], [], []>} : vector<1x8x16xf32>, vector<16x4xf32>, vector<1x8x4xf32> -> vector<1x8x4xf32>
    %c784 = arith.constant 784 : index
    %c0_101 = arith.constant 0 : index
    %432 = vector.load %arg2[%c784, %c0_101] : memref<896x128xf32, #tpu.memory_space<vmem>>, vector<1x4xf32>
    %433 = vector.shape_cast %432 : vector<1x4xf32> to vector<1x1x4xf32>
    %434 = vector.broadcast %433 : vector<1x1x4xf32> to vector<1x8x4xf32>
    %435 = arith.addf %431, %434 : vector<1x8x4xf32>
    %c864 = arith.constant 864 : index
    %c0_102 = arith.constant 0 : index
    %436 = vector.load %arg2[%c864, %c0_102] : memref<896x128xf32, #tpu.memory_space<vmem>>, vector<4x4xf32>
    %c872 = arith.constant 872 : index
    %c0_103 = arith.constant 0 : index
    %437 = vector.load %arg2[%c872, %c0_103] : memref<896x128xf32, #tpu.memory_space<vmem>>, vector<4x4xf32>
    %c880 = arith.constant 880 : index
    %c0_104 = arith.constant 0 : index
    %438 = vector.load %arg2[%c880, %c0_104] : memref<896x128xf32, #tpu.memory_space<vmem>>, vector<4x4xf32>
    %c888 = arith.constant 888 : index
    %c0_105 = arith.constant 0 : index
    %439 = vector.load %arg2[%c888, %c0_105] : memref<896x128xf32, #tpu.memory_space<vmem>>, vector<1x4xf32>
    %cst_106 = arith.constant dense<0.000000e+00> : vector<1x8x4xf32>
    %440 = tpu.matmul %435, %437, %cst_106 {dimension_numbers = #tpu.dot_dimension_numbers<[2], [0], [0, 1], [1], [0, 0, 0, 1, 1, 1], [], []>} : vector<1x8x4xf32>, vector<4x4xf32>, vector<1x8x4xf32> -> vector<1x8x4xf32>
    %cst_107 = arith.constant 0.000000e+00 : f32
    %441 = vector.broadcast %cst_107 : f32 to vector<1x1x4xf32>
    %442 = vector.extract_strided_slice %435 {offsets = [0, 0, 0], sizes = [1, 7, 4], strides = [1, 1, 1]} : vector<1x8x4xf32> to vector<1x7x4xf32>
    %443 = tpu.concatenate %441, %442 in 1 : vector<1x1x4xf32>, vector<1x7x4xf32> -> vector<1x8x4xf32>
    %cst_108 = arith.constant dense<0.000000e+00> : vector<1x8x4xf32>
    %444 = tpu.matmul %443, %436, %cst_108 {dimension_numbers = #tpu.dot_dimension_numbers<[2], [0], [0, 1], [1], [0, 0, 0, 1, 1, 1], [], []>} : vector<1x8x4xf32>, vector<4x4xf32>, vector<1x8x4xf32> -> vector<1x8x4xf32>
    %445 = arith.addf %440, %444 : vector<1x8x4xf32>
    %cst_109 = arith.constant 0.000000e+00 : f32
    %446 = vector.broadcast %cst_109 : f32 to vector<1x1x4xf32>
    %447 = vector.extract_strided_slice %435 {offsets = [0, 1, 0], sizes = [1, 7, 4], strides = [1, 1, 1]} : vector<1x8x4xf32> to vector<1x7x4xf32>
    %448 = tpu.concatenate %447, %446 in 1 : vector<1x7x4xf32>, vector<1x1x4xf32> -> vector<1x8x4xf32>
    %cst_110 = arith.constant dense<0.000000e+00> : vector<1x8x4xf32>
    %449 = tpu.matmul %448, %438, %cst_110 {dimension_numbers = #tpu.dot_dimension_numbers<[2], [0], [0, 1], [1], [0, 0, 0, 1, 1, 1], [], []>} : vector<1x8x4xf32>, vector<4x4xf32>, vector<1x8x4xf32> -> vector<1x8x4xf32>
    %450 = arith.addf %445, %449 : vector<1x8x4xf32>
    %451 = vector.shape_cast %439 : vector<1x4xf32> to vector<1x1x4xf32>
    %452 = vector.broadcast %451 : vector<1x1x4xf32> to vector<1x8x4xf32>
    %453 = arith.addf %450, %452 : vector<1x8x4xf32>
    %454 = arith.subf %0, %453 : vector<1x8x4xf32>
    %455 = math.absf %454 : vector<1x8x4xf32>
    %c792 = arith.constant 792 : index
    %c0_111 = arith.constant 0 : index
    %456 = vector.load %arg2[%c792, %c0_111] : memref<896x128xf32, #tpu.memory_space<vmem>>, vector<4x8xf32>
    %cst_112 = arith.constant dense<0.000000e+00> : vector<1x8x8xf32>
    %457 = tpu.matmul %455, %456, %cst_112 {dimension_numbers = #tpu.dot_dimension_numbers<[2], [0], [0, 1], [1], [0, 0, 0, 1, 1, 1], [], []>} : vector<1x8x4xf32>, vector<4x8xf32>, vector<1x8x8xf32> -> vector<1x8x8xf32>
    %c800 = arith.constant 800 : index
    %c0_113 = arith.constant 0 : index
    %458 = vector.load %arg2[%c800, %c0_113] : memref<896x128xf32, #tpu.memory_space<vmem>>, vector<1x8xf32>
    %459 = vector.shape_cast %458 : vector<1x8xf32> to vector<1x1x8xf32>
    %460 = vector.broadcast %459 : vector<1x1x8xf32> to vector<1x8x8xf32>
    %461 = arith.addf %457, %460 : vector<1x8x8xf32>
    %cst_114 = arith.constant 0.000000e+00 : f32
    %462 = vector.broadcast %cst_114 : f32 to vector<1x8x8xf32>
    %463 = arith.maximumf %461, %462 : vector<1x8x8xf32>
    %c808 = arith.constant 808 : index
    %c0_115 = arith.constant 0 : index
    %464 = vector.load %arg2[%c808, %c0_115] : memref<896x128xf32, #tpu.memory_space<vmem>>, vector<8x4xf32>
    %cst_116 = arith.constant dense<0.000000e+00> : vector<1x8x4xf32>
    %465 = tpu.matmul %463, %464, %cst_116 {dimension_numbers = #tpu.dot_dimension_numbers<[2], [0], [0, 1], [1], [0, 0, 0, 1, 1, 1], [], []>} : vector<1x8x8xf32>, vector<8x4xf32>, vector<1x8x4xf32> -> vector<1x8x4xf32>
    %c816 = arith.constant 816 : index
    %c0_117 = arith.constant 0 : index
    %466 = vector.load %arg2[%c816, %c0_117] : memref<896x128xf32, #tpu.memory_space<vmem>>, vector<1x4xf32>
    %467 = vector.shape_cast %466 : vector<1x4xf32> to vector<1x1x4xf32>
    %468 = vector.broadcast %467 : vector<1x1x4xf32> to vector<1x8x4xf32>
    %469 = arith.addf %465, %468 : vector<1x8x4xf32>
    %470 = arith.negf %469 : vector<1x8x4xf32>
    %471 = math.exp %470 : vector<1x8x4xf32>
    %cst_118 = arith.constant 1.000000e+00 : f32
    %472 = vector.broadcast %cst_118 : f32 to vector<1x8x4xf32>
    %473 = arith.addf %472, %471 : vector<1x8x4xf32>
    %474 = arith.divf %472, %473 : vector<1x8x4xf32>
    %475 = arith.mulf %455, %474 : vector<1x8x4xf32>
    %cst_119 = arith.constant dense<0.000000e+00> : vector<1x8xf32>
    %476 = vector.multi_reduction <add>, %475, %cst_119 [2] : vector<1x8x4xf32> to vector<1x8xf32>
    %477 = vector.shape_cast %476 : vector<1x8xf32> to vector<1x8x1xf32>
    %cst_120 = arith.constant 4.000000e+00 : f32
    %478 = vector.broadcast %cst_120 : f32 to vector<1x8x1xf32>
    %479 = arith.divf %477, %478 : vector<1x8x1xf32>
    %c824 = arith.constant 824 : index
    %c0_121 = arith.constant 0 : index
    %480 = vector.load %arg2[%c824, %c0_121] : memref<896x128xf32, #tpu.memory_space<vmem>>, vector<1x32xf32>
    %481 = vector.shape_cast %480 : vector<1x32xf32> to vector<1x1x32xf32>
    %482 = vector.broadcast %479 : vector<1x8x1xf32> to vector<1x8x32xf32>
    %483 = vector.broadcast %481 : vector<1x1x32xf32> to vector<1x8x32xf32>
    %484 = arith.mulf %482, %483 : vector<1x8x32xf32>
    %c840 = arith.constant 840 : index
    %c0_122 = arith.constant 0 : index
    %485 = vector.load %arg2[%c840, %c0_122] : memref<896x128xf32, #tpu.memory_space<vmem>>, vector<1x32xf32>
    %486 = vector.shape_cast %485 : vector<1x32xf32> to vector<1x1x32xf32>
    %487 = vector.broadcast %486 : vector<1x1x32xf32> to vector<1x8x32xf32>
    %488 = arith.addf %484, %487 : vector<1x8x32xf32>
    %489 = vector.extract_strided_slice %488 {offsets = [0, 0, 0], sizes = [1, 1, 32], strides = [1, 1, 1]} : vector<1x8x32xf32> to vector<1x1x32xf32>
    %490 = vector.shape_cast %489 : vector<1x1x32xf32> to vector<1x32xf32>
    %491 = vector.extract_strided_slice %488 {offsets = [0, 1, 0], sizes = [1, 1, 32], strides = [1, 1, 1]} : vector<1x8x32xf32> to vector<1x1x32xf32>
    %492 = vector.shape_cast %491 : vector<1x1x32xf32> to vector<1x32xf32>
    %493 = vector.extract_strided_slice %488 {offsets = [0, 2, 0], sizes = [1, 1, 32], strides = [1, 1, 1]} : vector<1x8x32xf32> to vector<1x1x32xf32>
    %494 = vector.shape_cast %493 : vector<1x1x32xf32> to vector<1x32xf32>
    %495 = vector.extract_strided_slice %488 {offsets = [0, 3, 0], sizes = [1, 1, 32], strides = [1, 1, 1]} : vector<1x8x32xf32> to vector<1x1x32xf32>
    %496 = vector.shape_cast %495 : vector<1x1x32xf32> to vector<1x32xf32>
    %497 = vector.extract_strided_slice %488 {offsets = [0, 4, 0], sizes = [1, 1, 32], strides = [1, 1, 1]} : vector<1x8x32xf32> to vector<1x1x32xf32>
    %498 = vector.shape_cast %497 : vector<1x1x32xf32> to vector<1x32xf32>
    %499 = vector.extract_strided_slice %488 {offsets = [0, 5, 0], sizes = [1, 1, 32], strides = [1, 1, 1]} : vector<1x8x32xf32> to vector<1x1x32xf32>
    %500 = vector.shape_cast %499 : vector<1x1x32xf32> to vector<1x32xf32>
    %501 = vector.extract_strided_slice %488 {offsets = [0, 6, 0], sizes = [1, 1, 32], strides = [1, 1, 1]} : vector<1x8x32xf32> to vector<1x1x32xf32>
    %502 = vector.shape_cast %501 : vector<1x1x32xf32> to vector<1x32xf32>
    %503 = vector.extract_strided_slice %488 {offsets = [0, 7, 0], sizes = [1, 1, 32], strides = [1, 1, 1]} : vector<1x8x32xf32> to vector<1x1x32xf32>
    %504 = vector.shape_cast %503 : vector<1x1x32xf32> to vector<1x32xf32>
    %c832 = arith.constant 832 : index
    %c0_123 = arith.constant 0 : index
    %505 = vector.load %arg2[%c832, %c0_123] : memref<896x128xf32, #tpu.memory_space<vmem>>, vector<8x32xf32>
    %506 = arith.negf %490 : vector<1x32xf32>
    %507 = math.exp %506 : vector<1x32xf32>
    %cst_124 = arith.constant 1.000000e+00 : f32
    %508 = vector.broadcast %cst_124 : f32 to vector<1x32xf32>
    %509 = arith.addf %508, %507 : vector<1x32xf32>
    %510 = arith.divf %508, %509 : vector<1x32xf32>
    %511 = vector.extract_strided_slice %490 {offsets = [0, 16], sizes = [1, 8], strides = [1, 1]} : vector<1x32xf32> to vector<1x8xf32>
    %512 = math.tanh %511 : vector<1x8xf32>
    %513 = vector.extract_strided_slice %510 {offsets = [0, 0], sizes = [1, 8], strides = [1, 1]} : vector<1x32xf32> to vector<1x8xf32>
    %514 = vector.extract_strided_slice %510 {offsets = [0, 24], sizes = [1, 8], strides = [1, 1]} : vector<1x32xf32> to vector<1x8xf32>
    %515 = arith.mulf %513, %512 : vector<1x8xf32>
    %516 = math.tanh %515 : vector<1x8xf32>
    %517 = arith.mulf %514, %516 : vector<1x8xf32>
    %cst_125 = arith.constant dense<0.000000e+00> : vector<1x32xf32>
    %518 = tpu.matmul %517, %505, %cst_125 {dimension_numbers = #tpu.dot_dimension_numbers<[1], [0], [0], [1], [0, 0, 1, 1], [], []>} : vector<1x8xf32>, vector<8x32xf32>, vector<1x32xf32> -> vector<1x32xf32>
    %519 = arith.addf %492, %518 : vector<1x32xf32>
    %520 = arith.negf %519 : vector<1x32xf32>
    %521 = math.exp %520 : vector<1x32xf32>
    %cst_126 = arith.constant 1.000000e+00 : f32
    %522 = vector.broadcast %cst_126 : f32 to vector<1x32xf32>
    %523 = arith.addf %522, %521 : vector<1x32xf32>
    %524 = arith.divf %522, %523 : vector<1x32xf32>
    %525 = vector.extract_strided_slice %519 {offsets = [0, 16], sizes = [1, 8], strides = [1, 1]} : vector<1x32xf32> to vector<1x8xf32>
    %526 = math.tanh %525 : vector<1x8xf32>
    %527 = vector.extract_strided_slice %524 {offsets = [0, 0], sizes = [1, 8], strides = [1, 1]} : vector<1x32xf32> to vector<1x8xf32>
    %528 = vector.extract_strided_slice %524 {offsets = [0, 8], sizes = [1, 8], strides = [1, 1]} : vector<1x32xf32> to vector<1x8xf32>
    %529 = vector.extract_strided_slice %524 {offsets = [0, 24], sizes = [1, 8], strides = [1, 1]} : vector<1x32xf32> to vector<1x8xf32>
    %530 = arith.mulf %528, %515 : vector<1x8xf32>
    %531 = arith.mulf %527, %526 : vector<1x8xf32>
    %532 = arith.addf %530, %531 : vector<1x8xf32>
    %533 = math.tanh %532 : vector<1x8xf32>
    %534 = arith.mulf %529, %533 : vector<1x8xf32>
    %cst_127 = arith.constant dense<0.000000e+00> : vector<1x32xf32>
    %535 = tpu.matmul %534, %505, %cst_127 {dimension_numbers = #tpu.dot_dimension_numbers<[1], [0], [0], [1], [0, 0, 1, 1], [], []>} : vector<1x8xf32>, vector<8x32xf32>, vector<1x32xf32> -> vector<1x32xf32>
    %536 = arith.addf %494, %535 : vector<1x32xf32>
    %537 = arith.negf %536 : vector<1x32xf32>
    %538 = math.exp %537 : vector<1x32xf32>
    %cst_128 = arith.constant 1.000000e+00 : f32
    %539 = vector.broadcast %cst_128 : f32 to vector<1x32xf32>
    %540 = arith.addf %539, %538 : vector<1x32xf32>
    %541 = arith.divf %539, %540 : vector<1x32xf32>
    %542 = vector.extract_strided_slice %536 {offsets = [0, 16], sizes = [1, 8], strides = [1, 1]} : vector<1x32xf32> to vector<1x8xf32>
    %543 = math.tanh %542 : vector<1x8xf32>
    %544 = vector.extract_strided_slice %541 {offsets = [0, 0], sizes = [1, 8], strides = [1, 1]} : vector<1x32xf32> to vector<1x8xf32>
    %545 = vector.extract_strided_slice %541 {offsets = [0, 8], sizes = [1, 8], strides = [1, 1]} : vector<1x32xf32> to vector<1x8xf32>
    %546 = vector.extract_strided_slice %541 {offsets = [0, 24], sizes = [1, 8], strides = [1, 1]} : vector<1x32xf32> to vector<1x8xf32>
    %547 = arith.mulf %545, %532 : vector<1x8xf32>
    %548 = arith.mulf %544, %543 : vector<1x8xf32>
    %549 = arith.addf %547, %548 : vector<1x8xf32>
    %550 = math.tanh %549 : vector<1x8xf32>
    %551 = arith.mulf %546, %550 : vector<1x8xf32>
    %cst_129 = arith.constant dense<0.000000e+00> : vector<1x32xf32>
    %552 = tpu.matmul %551, %505, %cst_129 {dimension_numbers = #tpu.dot_dimension_numbers<[1], [0], [0], [1], [0, 0, 1, 1], [], []>} : vector<1x8xf32>, vector<8x32xf32>, vector<1x32xf32> -> vector<1x32xf32>
    %553 = arith.addf %496, %552 : vector<1x32xf32>
    %554 = arith.negf %553 : vector<1x32xf32>
    %555 = math.exp %554 : vector<1x32xf32>
    %cst_130 = arith.constant 1.000000e+00 : f32
    %556 = vector.broadcast %cst_130 : f32 to vector<1x32xf32>
    %557 = arith.addf %556, %555 : vector<1x32xf32>
    %558 = arith.divf %556, %557 : vector<1x32xf32>
    %559 = vector.extract_strided_slice %553 {offsets = [0, 16], sizes = [1, 8], strides = [1, 1]} : vector<1x32xf32> to vector<1x8xf32>
    %560 = math.tanh %559 : vector<1x8xf32>
    %561 = vector.extract_strided_slice %558 {offsets = [0, 0], sizes = [1, 8], strides = [1, 1]} : vector<1x32xf32> to vector<1x8xf32>
    %562 = vector.extract_strided_slice %558 {offsets = [0, 8], sizes = [1, 8], strides = [1, 1]} : vector<1x32xf32> to vector<1x8xf32>
    %563 = vector.extract_strided_slice %558 {offsets = [0, 24], sizes = [1, 8], strides = [1, 1]} : vector<1x32xf32> to vector<1x8xf32>
    %564 = arith.mulf %562, %549 : vector<1x8xf32>
    %565 = arith.mulf %561, %560 : vector<1x8xf32>
    %566 = arith.addf %564, %565 : vector<1x8xf32>
    %567 = math.tanh %566 : vector<1x8xf32>
    %568 = arith.mulf %563, %567 : vector<1x8xf32>
    %cst_131 = arith.constant dense<0.000000e+00> : vector<1x32xf32>
    %569 = tpu.matmul %568, %505, %cst_131 {dimension_numbers = #tpu.dot_dimension_numbers<[1], [0], [0], [1], [0, 0, 1, 1], [], []>} : vector<1x8xf32>, vector<8x32xf32>, vector<1x32xf32> -> vector<1x32xf32>
    %570 = arith.addf %498, %569 : vector<1x32xf32>
    %571 = arith.negf %570 : vector<1x32xf32>
    %572 = math.exp %571 : vector<1x32xf32>
    %cst_132 = arith.constant 1.000000e+00 : f32
    %573 = vector.broadcast %cst_132 : f32 to vector<1x32xf32>
    %574 = arith.addf %573, %572 : vector<1x32xf32>
    %575 = arith.divf %573, %574 : vector<1x32xf32>
    %576 = vector.extract_strided_slice %570 {offsets = [0, 16], sizes = [1, 8], strides = [1, 1]} : vector<1x32xf32> to vector<1x8xf32>
    %577 = math.tanh %576 : vector<1x8xf32>
    %578 = vector.extract_strided_slice %575 {offsets = [0, 0], sizes = [1, 8], strides = [1, 1]} : vector<1x32xf32> to vector<1x8xf32>
    %579 = vector.extract_strided_slice %575 {offsets = [0, 8], sizes = [1, 8], strides = [1, 1]} : vector<1x32xf32> to vector<1x8xf32>
    %580 = vector.extract_strided_slice %575 {offsets = [0, 24], sizes = [1, 8], strides = [1, 1]} : vector<1x32xf32> to vector<1x8xf32>
    %581 = arith.mulf %579, %566 : vector<1x8xf32>
    %582 = arith.mulf %578, %577 : vector<1x8xf32>
    %583 = arith.addf %581, %582 : vector<1x8xf32>
    %584 = math.tanh %583 : vector<1x8xf32>
    %585 = arith.mulf %580, %584 : vector<1x8xf32>
    %cst_133 = arith.constant dense<0.000000e+00> : vector<1x32xf32>
    %586 = tpu.matmul %585, %505, %cst_133 {dimension_numbers = #tpu.dot_dimension_numbers<[1], [0], [0], [1], [0, 0, 1, 1], [], []>} : vector<1x8xf32>, vector<8x32xf32>, vector<1x32xf32> -> vector<1x32xf32>
    %587 = arith.addf %500, %586 : vector<1x32xf32>
    %588 = arith.negf %587 : vector<1x32xf32>
    %589 = math.exp %588 : vector<1x32xf32>
    %cst_134 = arith.constant 1.000000e+00 : f32
    %590 = vector.broadcast %cst_134 : f32 to vector<1x32xf32>
    %591 = arith.addf %590, %589 : vector<1x32xf32>
    %592 = arith.divf %590, %591 : vector<1x32xf32>
    %593 = vector.extract_strided_slice %587 {offsets = [0, 16], sizes = [1, 8], strides = [1, 1]} : vector<1x32xf32> to vector<1x8xf32>
    %594 = math.tanh %593 : vector<1x8xf32>
    %595 = vector.extract_strided_slice %592 {offsets = [0, 0], sizes = [1, 8], strides = [1, 1]} : vector<1x32xf32> to vector<1x8xf32>
    %596 = vector.extract_strided_slice %592 {offsets = [0, 8], sizes = [1, 8], strides = [1, 1]} : vector<1x32xf32> to vector<1x8xf32>
    %597 = vector.extract_strided_slice %592 {offsets = [0, 24], sizes = [1, 8], strides = [1, 1]} : vector<1x32xf32> to vector<1x8xf32>
    %598 = arith.mulf %596, %583 : vector<1x8xf32>
    %599 = arith.mulf %595, %594 : vector<1x8xf32>
    %600 = arith.addf %598, %599 : vector<1x8xf32>
    %601 = math.tanh %600 : vector<1x8xf32>
    %602 = arith.mulf %597, %601 : vector<1x8xf32>
    %cst_135 = arith.constant dense<0.000000e+00> : vector<1x32xf32>
    %603 = tpu.matmul %602, %505, %cst_135 {dimension_numbers = #tpu.dot_dimension_numbers<[1], [0], [0], [1], [0, 0, 1, 1], [], []>} : vector<1x8xf32>, vector<8x32xf32>, vector<1x32xf32> -> vector<1x32xf32>
    %604 = arith.addf %502, %603 : vector<1x32xf32>
    %605 = arith.negf %604 : vector<1x32xf32>
    %606 = math.exp %605 : vector<1x32xf32>
    %cst_136 = arith.constant 1.000000e+00 : f32
    %607 = vector.broadcast %cst_136 : f32 to vector<1x32xf32>
    %608 = arith.addf %607, %606 : vector<1x32xf32>
    %609 = arith.divf %607, %608 : vector<1x32xf32>
    %610 = vector.extract_strided_slice %604 {offsets = [0, 16], sizes = [1, 8], strides = [1, 1]} : vector<1x32xf32> to vector<1x8xf32>
    %611 = math.tanh %610 : vector<1x8xf32>
    %612 = vector.extract_strided_slice %609 {offsets = [0, 0], sizes = [1, 8], strides = [1, 1]} : vector<1x32xf32> to vector<1x8xf32>
    %613 = vector.extract_strided_slice %609 {offsets = [0, 8], sizes = [1, 8], strides = [1, 1]} : vector<1x32xf32> to vector<1x8xf32>
    %614 = vector.extract_strided_slice %609 {offsets = [0, 24], sizes = [1, 8], strides = [1, 1]} : vector<1x32xf32> to vector<1x8xf32>
    %615 = arith.mulf %613, %600 : vector<1x8xf32>
    %616 = arith.mulf %612, %611 : vector<1x8xf32>
    %617 = arith.addf %615, %616 : vector<1x8xf32>
    %618 = math.tanh %617 : vector<1x8xf32>
    %619 = arith.mulf %614, %618 : vector<1x8xf32>
    %cst_137 = arith.constant dense<0.000000e+00> : vector<1x32xf32>
    %620 = tpu.matmul %619, %505, %cst_137 {dimension_numbers = #tpu.dot_dimension_numbers<[1], [0], [0], [1], [0, 0, 1, 1], [], []>} : vector<1x8xf32>, vector<8x32xf32>, vector<1x32xf32> -> vector<1x32xf32>
    %621 = arith.addf %504, %620 : vector<1x32xf32>
    %622 = arith.negf %621 : vector<1x32xf32>
    %623 = math.exp %622 : vector<1x32xf32>
    %cst_138 = arith.constant 1.000000e+00 : f32
    %624 = vector.broadcast %cst_138 : f32 to vector<1x32xf32>
    %625 = arith.addf %624, %623 : vector<1x32xf32>
    %626 = arith.divf %624, %625 : vector<1x32xf32>
    %627 = vector.extract_strided_slice %621 {offsets = [0, 16], sizes = [1, 8], strides = [1, 1]} : vector<1x32xf32> to vector<1x8xf32>
    %628 = math.tanh %627 : vector<1x8xf32>
    %629 = vector.extract_strided_slice %626 {offsets = [0, 0], sizes = [1, 8], strides = [1, 1]} : vector<1x32xf32> to vector<1x8xf32>
    %630 = vector.extract_strided_slice %626 {offsets = [0, 8], sizes = [1, 8], strides = [1, 1]} : vector<1x32xf32> to vector<1x8xf32>
    %631 = vector.extract_strided_slice %626 {offsets = [0, 24], sizes = [1, 8], strides = [1, 1]} : vector<1x32xf32> to vector<1x8xf32>
    %632 = arith.mulf %630, %617 : vector<1x8xf32>
    %633 = arith.mulf %629, %628 : vector<1x8xf32>
    %634 = arith.addf %632, %633 : vector<1x8xf32>
    %635 = math.tanh %634 : vector<1x8xf32>
    %636 = arith.mulf %631, %635 : vector<1x8xf32>
    %637 = vector.shape_cast %517 : vector<1x8xf32> to vector<1x1x8xf32>
    %638 = vector.shape_cast %534 : vector<1x8xf32> to vector<1x1x8xf32>
    %639 = vector.shape_cast %551 : vector<1x8xf32> to vector<1x1x8xf32>
    %640 = vector.shape_cast %568 : vector<1x8xf32> to vector<1x1x8xf32>
    %641 = vector.shape_cast %585 : vector<1x8xf32> to vector<1x1x8xf32>
    %642 = vector.shape_cast %602 : vector<1x8xf32> to vector<1x1x8xf32>
    %643 = vector.shape_cast %619 : vector<1x8xf32> to vector<1x1x8xf32>
    %644 = vector.shape_cast %636 : vector<1x8xf32> to vector<1x1x8xf32>
    %645 = tpu.concatenate %637, %638, %639, %640, %641, %642, %643, %644 in 1 : vector<1x1x8xf32>, vector<1x1x8xf32>, vector<1x1x8xf32>, vector<1x1x8xf32>, vector<1x1x8xf32>, vector<1x1x8xf32>, vector<1x1x8xf32>, vector<1x1x8xf32> -> vector<1x8x8xf32>
    %c848 = arith.constant 848 : index
    %c0_139 = arith.constant 0 : index
    %646 = vector.load %arg2[%c848, %c0_139] : memref<896x128xf32, #tpu.memory_space<vmem>>, vector<1x8xf32>
    %647 = vector.shape_cast %646 : vector<1x8xf32> to vector<1x1x8xf32>
    %648 = vector.broadcast %647 : vector<1x1x8xf32> to vector<1x8x8xf32>
    %649 = arith.mulf %645, %648 : vector<1x8x8xf32>
    %cst_140 = arith.constant dense<0.000000e+00> : vector<1x8xf32>
    %650 = vector.multi_reduction <add>, %649, %cst_140 [2] : vector<1x8x8xf32> to vector<1x8xf32>
    %651 = vector.shape_cast %650 : vector<1x8xf32> to vector<1x8x1xf32>
    %c856 = arith.constant 856 : index
    %c0_141 = arith.constant 0 : index
    %652 = vector.load %arg2[%c856, %c0_141] : memref<896x128xf32, #tpu.memory_space<vmem>>, vector<1x1xf32>
    %653 = vector.shape_cast %652 : vector<1x1xf32> to vector<1x1x1xf32>
    %654 = vector.broadcast %653 : vector<1x1x1xf32> to vector<1x8x1xf32>
    %655 = arith.addf %651, %654 : vector<1x8x1xf32>
    %656 = arith.addf %479, %655 : vector<1x8x1xf32>
    %657 = arith.negf %656 : vector<1x8x1xf32>
    %658 = math.exp %657 : vector<1x8x1xf32>
    %cst_142 = arith.constant 1.000000e+00 : f32
    %659 = vector.broadcast %cst_142 : f32 to vector<1x8x1xf32>
    %660 = arith.addf %659, %658 : vector<1x8x1xf32>
    %661 = arith.divf %659, %660 : vector<1x8x1xf32>
    %662 = vector.extract_strided_slice %453 {offsets = [0, 0, 0], sizes = [1, 1, 4], strides = [1, 1, 1]} : vector<1x8x4xf32> to vector<1x1x4xf32>
    %663 = vector.shape_cast %662 : vector<1x1x4xf32> to vector<1x4xf32>
    %664 = vector.extract_strided_slice %453 {offsets = [0, 1, 0], sizes = [1, 1, 4], strides = [1, 1, 1]} : vector<1x8x4xf32> to vector<1x1x4xf32>
    %665 = vector.shape_cast %664 : vector<1x1x4xf32> to vector<1x4xf32>
    %666 = vector.extract_strided_slice %453 {offsets = [0, 2, 0], sizes = [1, 1, 4], strides = [1, 1, 1]} : vector<1x8x4xf32> to vector<1x1x4xf32>
    %667 = vector.shape_cast %666 : vector<1x1x4xf32> to vector<1x4xf32>
    %668 = vector.extract_strided_slice %453 {offsets = [0, 3, 0], sizes = [1, 1, 4], strides = [1, 1, 1]} : vector<1x8x4xf32> to vector<1x1x4xf32>
    %669 = vector.shape_cast %668 : vector<1x1x4xf32> to vector<1x4xf32>
    %670 = vector.extract_strided_slice %453 {offsets = [0, 4, 0], sizes = [1, 1, 4], strides = [1, 1, 1]} : vector<1x8x4xf32> to vector<1x1x4xf32>
    %671 = vector.shape_cast %670 : vector<1x1x4xf32> to vector<1x4xf32>
    %672 = vector.extract_strided_slice %453 {offsets = [0, 5, 0], sizes = [1, 1, 4], strides = [1, 1, 1]} : vector<1x8x4xf32> to vector<1x1x4xf32>
    %673 = vector.shape_cast %672 : vector<1x1x4xf32> to vector<1x4xf32>
    %674 = vector.extract_strided_slice %453 {offsets = [0, 6, 0], sizes = [1, 1, 4], strides = [1, 1, 1]} : vector<1x8x4xf32> to vector<1x1x4xf32>
    %675 = vector.shape_cast %674 : vector<1x1x4xf32> to vector<1x4xf32>
    %676 = vector.extract_strided_slice %453 {offsets = [0, 7, 0], sizes = [1, 1, 4], strides = [1, 1, 1]} : vector<1x8x4xf32> to vector<1x1x4xf32>
    %677 = vector.shape_cast %676 : vector<1x1x4xf32> to vector<1x4xf32>
    %678 = tpu.concatenate %663, %665, %667, %669, %671, %673, %675, %677 in 1 : vector<1x4xf32>, vector<1x4xf32>, vector<1x4xf32>, vector<1x4xf32>, vector<1x4xf32>, vector<1x4xf32>, vector<1x4xf32>, vector<1x4xf32> -> vector<1x32xf32>
    %679 = vector.extract_strided_slice %661 {offsets = [0, 0, 0], sizes = [1, 1, 1], strides = [1, 1, 1]} : vector<1x8x1xf32> to vector<1x1x1xf32>
    %680 = vector.shape_cast %679 : vector<1x1x1xf32> to vector<1x1xf32>
    %681 = vector.extract_strided_slice %661 {offsets = [0, 1, 0], sizes = [1, 1, 1], strides = [1, 1, 1]} : vector<1x8x1xf32> to vector<1x1x1xf32>
    %682 = vector.shape_cast %681 : vector<1x1x1xf32> to vector<1x1xf32>
    %683 = vector.extract_strided_slice %661 {offsets = [0, 2, 0], sizes = [1, 1, 1], strides = [1, 1, 1]} : vector<1x8x1xf32> to vector<1x1x1xf32>
    %684 = vector.shape_cast %683 : vector<1x1x1xf32> to vector<1x1xf32>
    %685 = vector.extract_strided_slice %661 {offsets = [0, 3, 0], sizes = [1, 1, 1], strides = [1, 1, 1]} : vector<1x8x1xf32> to vector<1x1x1xf32>
    %686 = vector.shape_cast %685 : vector<1x1x1xf32> to vector<1x1xf32>
    %687 = vector.extract_strided_slice %661 {offsets = [0, 4, 0], sizes = [1, 1, 1], strides = [1, 1, 1]} : vector<1x8x1xf32> to vector<1x1x1xf32>
    %688 = vector.shape_cast %687 : vector<1x1x1xf32> to vector<1x1xf32>
    %689 = vector.extract_strided_slice %661 {offsets = [0, 5, 0], sizes = [1, 1, 1], strides = [1, 1, 1]} : vector<1x8x1xf32> to vector<1x1x1xf32>
    %690 = vector.shape_cast %689 : vector<1x1x1xf32> to vector<1x1xf32>
    %691 = vector.extract_strided_slice %661 {offsets = [0, 6, 0], sizes = [1, 1, 1], strides = [1, 1, 1]} : vector<1x8x1xf32> to vector<1x1x1xf32>
    %692 = vector.shape_cast %691 : vector<1x1x1xf32> to vector<1x1xf32>
    %693 = vector.extract_strided_slice %661 {offsets = [0, 7, 0], sizes = [1, 1, 1], strides = [1, 1, 1]} : vector<1x8x1xf32> to vector<1x1x1xf32>
    %694 = vector.shape_cast %693 : vector<1x1x1xf32> to vector<1x1xf32>
    %695 = tpu.concatenate %680, %682, %684, %686, %688, %690, %692, %694 in 1 : vector<1x1xf32>, vector<1x1xf32>, vector<1x1xf32>, vector<1x1xf32>, vector<1x1xf32>, vector<1x1xf32>, vector<1x1xf32>, vector<1x1xf32> -> vector<1x8xf32>
    %cst_143 = arith.constant 0.000000e+00 : f32
    %696 = vector.broadcast %cst_143 : f32 to vector<1x56xf32>
    %697 = tpu.concatenate %678, %695, %262, %696 in 1 : vector<1x32xf32>, vector<1x8xf32>, vector<1x32xf32>, vector<1x56xf32> -> vector<1x128xf32>
    %c0_144 = arith.constant 0 : index
    %c0_145 = arith.constant 0 : index
    %c0_146 = arith.constant 0 : index
    %698 = vector.load %arg4[%c0_144, %c0_145, %c0_146] : memref<1x1x128xf32, #tpu.memory_space<vmem>>, vector<1x1x128xf32>
    %699 = vector.shape_cast %698 : vector<1x1x128xf32> to vector<1x128xf32>
    %700 = vector.shape_cast %697 : vector<1x128xf32> to vector<1x1x128xf32>
    tpu.vector_store %arg4[%c0_144, %c0_145, %c0_146], %700 {strides = array<i32>} : memref<1x1x128xf32, #tpu.memory_space<vmem>>, vector<1x1x128xf32>,
    return
  }
  func.func @transform_0(%arg0: i32) -> (i32, i32, i32) {
    %c0_i32 = arith.constant 0 : i32
    %c0_i32_0 = arith.constant 0 : i32
    %c0_i32_1 = arith.constant 0 : i32
    return %arg0, %c0_i32, %c0_i32_0 : i32, i32, i32
  }
  func.func @transform_1(%arg0: i32) -> (i32, i32) {
    %c0_i32 = arith.constant 0 : i32
    %c0_i32_0 = arith.constant 0 : i32
    %c0_i32_1 = arith.constant 0 : i32
    return %c0_i32, %c0_i32_0 : i32, i32
  }
  func.func @transform_2(%arg0: i32) -> (i32, i32) {
    %c0_i32 = arith.constant 0 : i32
    %c0_i32_0 = arith.constant 0 : i32
    %c0_i32_1 = arith.constant 0 : i32
    return %c0_i32, %c0_i32_0 : i32, i32
  }
  func.func @transform_3(%arg0: i32) -> (i32, i32, i32) {
    %c0_i32 = arith.constant 0 : i32
    %c0_i32_0 = arith.constant 0 : i32
    %c0_i32_1 = arith.constant 0 : i32
    return %arg0, %c0_i32, %c0_i32_0 : i32, i32, i32
  }
}

</mosaic_0001>

<llo_original>
// kernel: tpu_custom_call.1
$region0: #{tpu_custom_call.1}
  #allocation0 [shape = 'u32[]', space=smem, size = 0x4, offset = 0x4, fixed_abs, tag = 'smem constant byte address 0x4 - core index']
  #allocation1 [shape = 'u32[144,128]{1,0:T(1,128)}', space=vmem, size = 0x12000, scoped, tag = 'internal scratch']
  %s0 = inlined_call_operand.vmem [shape: f32[2,8,4], index: 0, kind: input, shape index: {}]
  %s1 = inlined_call_operand.hbm [shape: f32[896,128], index: 1, kind: input, shape index: {}]
  %s2 = inlined_call_operand.hbm [shape: f32[72,1024], index: 2, kind: input, shape index: {}]
  %s3 = inlined_call_operand.hbm [shape: f32[2,1,128], index: 3, kind: output, shape index: {}]
  %s4 = sld [smem:[#allocation0]]
  $region53: #{tpu_custom_call.1} parent=0
    _
  %s6 = ssub.s32 1, %s4
  %s7 = scalar_select 0, %s6, %s4
  $region1: #{tpu_custom_call.1} parent=0
    #allocation2 [shape = 'u8[458752]{0}', space=vmem, size = 0x70000, scoped, tag = 'input window, operand 1, single buffered']
    #allocation3 [shape = 's32[2]{0}', space=sflag, size = 0x8, scoped, tag = 'scoped memory for tpu_custom_call.1']
    #allocation4 [shape = 's32[2]{0}', space=sflag, size = 0x8, scoped, tag = 'scoped memory for tpu_custom_call.1']
    #allocation5 [shape = 'u8[294912]{0}', space=vmem, size = 0x48000, scoped, tag = 'input window, operand 2, single buffered']
    #allocation6 [shape = 's32[1]{0}', space=sflag, size = 0x4, scoped, tag = 'scoped memory for tpu_custom_call.1']
    #allocation7 [shape = 'u8[1024]{0}', space=vmem, size = 0x400, scoped, tag = 'output window, operand 0']
    %8 = vsyncpa [#allocation3], 0
    %9 = vsyncpa [#allocation6], 0
    %10 = vsyncpa [#allocation4], 0
    %s11 = scalar_lea.sflag [#allocation4], 1
    %12 = vsyncpa %s11, 0
    loop: start=0, step=1, limit=4
    $region2: #{tpu_custom_call.1} parent=1 // loop_pre_header
      _
    $region3: #{tpu_custom_call.1} parent=1 // loop_header
      %s14 = sphi 0, %s18
      %p15 = scmp.ge.s32.totalorder %s14, 4
      %s24 = sphi 0, %s26
      %s27 = sphi 0, %s24
      %s28 = sphi 0, %s27
      %s44 = sphi 0, %s28
      %s48 = sphi 0, %s48
      %s50 = sphi 0, %s48
      %s51 = sphi 0, %s50
      %s65 = sphi 0, %s51
      %s69 = sphi 0, %s69
      %s71 = sphi 0, %s69
      %s72 = sphi 0, %s71
      %s86 = sphi 0, %s72
      %s92 = sphi 0, %s94
      %s95 = sphi 0, %s92
      %s96 = sphi 0, %s95
      %s112 = sphi 0, %s96
    $region4: #{tpu_custom_call.1} parent=1 // loop_header_branch
      %17 = sbr.rel (%p15) target = $region8
    $region5: #{tpu_custom_call.1} parent=1 // loop_body
      %s19 = ssub.s32 %s14, 1
      %s20 = ssub.s32 %s14, 2
      %s21 = sadd.s32 %s14, 1
      %s22 = ssub.s32 %s14, %s21
      %p23 = scmp.eq.s32.totalorder %s22, 0
      %s25 = sadd.s32 %s24, 1
      %s26 = scalar_select %p23, %s24, %s25
      %p29 = pneg %p23
      %p30 = scmp.eq.s32.totalorder %s14, 1
      %p31 = por %p29, %p30
      %p32 = scmp.ne.s32.totalorder %s24, %s27
      %p33 = scmp.eq.s32.totalorder %s14, 0
      %p34 = por %p32, %p33
      %p35 = scmp.ne.s32.totalorder %s24, %s27
      %p36 = scmp.eq.s32.totalorder %s19, 1
      %p37 = por %p35, %p36
      %p38 = scmp.ne.s32.totalorder %s27, %s28
      %p39 = scmp.eq.s32.totalorder %s19, 0
      %p40 = por %p38, %p39
      %p41 = scmp.ne.s32.totalorder %s27, %s28
      %p42 = scmp.eq.s32.totalorder %s20, 1
      %p43 = por %p41, %p42
      %p45 = scmp.ne.s32.totalorder %s28, %s44
      %p46 = scmp.eq.s32.totalorder %s20, 0
      %p47 = por %p45, %p46
      %s49 = sadd.s32 %s48, 1
      %p52 = scmp.eq.s32.totalorder %s14, 1
      %p53 = scmp.ne.s32.totalorder %s48, %s50
      %p54 = scmp.eq.s32.totalorder %s14, 0
      %p55 = por %p53, %p54
      %p56 = scmp.ne.s32.totalorder %s48, %s50
      %p57 = scmp.eq.s32.totalorder %s19, 1
      %p58 = por %p56, %p57
      %p59 = scmp.ne.s32.totalorder %s50, %s51
      %p60 = scmp.eq.s32.totalorder %s19, 0
      %p61 = por %p59, %p60
      %p62 = scmp.ne.s32.totalorder %s50, %s51
      %p63 = scmp.eq.s32.totalorder %s20, 1
      %p64 = por %p62, %p63
      %p66 = scmp.ne.s32.totalorder %s51, %s65
      %p67 = scmp.eq.s32.totalorder %s20, 0
      %p68 = por %p66, %p67
      %s70 = sadd.s32 %s69, 1
      %p73 = scmp.eq.s32.totalorder %s14, 1
      %p74 = scmp.ne.s32.totalorder %s69, %s71
      %p75 = scmp.eq.s32.totalorder %s14, 0
      %p76 = por %p74, %p75
      %p77 = scmp.ne.s32.totalorder %s69, %s71
      %p78 = scmp.eq.s32.totalorder %s19, 1
      %p79 = por %p77, %p78
      %p80 = scmp.ne.s32.totalorder %s71, %s72
      %p81 = scmp.eq.s32.totalorder %s19, 0
      %p82 = por %p80, %p81
      %p83 = scmp.ne.s32.totalorder %s71, %s72
      %p84 = scmp.eq.s32.totalorder %s20, 1
      %p85 = por %p83, %p84
      %p87 = scmp.ne.s32.totalorder %s72, %s86
      %p88 = scmp.eq.s32.totalorder %s20, 0
      %p89 = por %p87, %p88
      %s90 = ssub.s32 %s14, %s21
      %p91 = scmp.eq.s32.totalorder %s90, 0
      %s93 = sadd.s32 %s92, 1
      %s94 = scalar_select %p91, %s92, %s93
      %p97 = pneg %p91
      %p98 = scmp.eq.s32.totalorder %s14, 1
      %p99 = por %p97, %p98
      %p100 = scmp.ne.s32.totalorder %s92, %s95
      %p101 = scmp.eq.s32.totalorder %s14, 0
      %p102 = por %p100, %p101
      %p103 = scmp.ne.s32.totalorder %s92, %s95
      %p104 = scmp.eq.s32.totalorder %s19, 1
      %p105 = por %p103, %p104
      %p106 = scmp.ne.s32.totalorder %s95, %s96
      %p107 = scmp.eq.s32.totalorder %s19, 0
      %p108 = por %p106, %p107
      %p109 = scmp.ne.s32.totalorder %s95, %s96
      %p110 = scmp.eq.s32.totalorder %s20, 1
      %p111 = por %p109, %p110
      %p113 = scmp.ne.s32.totalorder %s96, %s112
      %p114 = scmp.eq.s32.totalorder %s20, 0
      %p115 = por %p113, %p114
      %p116 = scmp.le.s32.totalorder 1, %s14
      %p117 = scmp.lt.s32.totalorder %s14, 3
      %p118 = pnand %p116, %p117
      %p119 = pneg %p118
      // Predicated region
      $region9: #{tpu_custom_call.1} parent=5 // pred_check
        _
      $region10: #{tpu_custom_call.1} parent=5 // pred_check_branch
        %121 = sbr.rel (%p118) target = $region12
      $region11: #{tpu_custom_call.1} parent=5 // pred_region
        %s122 = ssub.s32 %s14, 1
        // Predicated region
        $region13: #{tpu_custom_call.1} parent=11 // pred_check
          %p123 = pneg %p61
        $region14: #{tpu_custom_call.1} parent=11 // pred_check_branch
          %125 = sbr.rel (%p123) target = $region16
        $region15: #{tpu_custom_call.1} parent=11 // pred_region
          %s127 = ssub.s32 14336, 14336
          %128 = vsyncadd [#allocation3], %s127
          %s129 = sshll.u32 [#allocation2], 4
          %s130 = int_to_ptr.vmem [resolvable:$true] %s129
          %135 = dma.hbm_to_vmem [thread:$0]  %s1, 14336, %s130, [#allocation3], 128, 128, 8
        $region16: #{tpu_custom_call.1} parent=11 // pred_fallthru
          _
        // Predicated region
        $region17: #{tpu_custom_call.1} parent=11 // pred_check
          %p136 = pneg %p82
        $region18: #{tpu_custom_call.1} parent=11 // pred_check_branch
          %138 = sbr.rel (%p136) target = $region20
        $region19: #{tpu_custom_call.1} parent=11 // pred_region
          %s140 = ssub.s32 9216, 9216
          %141 = vsyncadd [#allocation6], %s140
          %s142 = sshll.u32 [#allocation5], 4
          %s143 = int_to_ptr.vmem [resolvable:$true] %s142
          %148 = dma.hbm_to_vmem [thread:$0]  %s2, 9216, %s143, [#allocation6], 1024, 1024, 64
        $region20: #{tpu_custom_call.1} parent=11 // pred_fallthru
          _
      $region12: #{tpu_custom_call.1} parent=5 // pred_fallthru
        _
      %p149 = scmp.lt.s32.totalorder %s14, 2
      // Predicated region
      $region21: #{tpu_custom_call.1} parent=5 // pred_check
        %p150 = pneg %p149
      $region22: #{tpu_custom_call.1} parent=5 // pred_check_branch
        %152 = sbr.rel (%p150) target = $region24
      $region23: #{tpu_custom_call.1} parent=5 // pred_region
        // Predicated region
        $region25: #{tpu_custom_call.1} parent=23 // pred_check
          %p153 = pneg %p34
        $region26: #{tpu_custom_call.1} parent=23 // pred_check_branch
          %155 = sbr.rel (%p153) target = $region28
        $region27: #{tpu_custom_call.1} parent=23 // pred_region
          %p156 = scmp.lt.s32.totalorder %s14, 1
          %s157 = scalar_select %p156, %s14, 1
          %s158 = smul.addr %s157, 8
          %s159 = scalar_lea.vmem %s0, %s158
        $region28: #{tpu_custom_call.1} parent=23 // pred_fallthru
          _
      $region24: #{tpu_custom_call.1} parent=5 // pred_fallthru
        _
      %p160 = scmp.le.s32.totalorder 1, %s14
      %p161 = scmp.lt.s32.totalorder %s14, 3
      %p162 = pnand %p160, %p161
      %p163 = pneg %p162
      // Predicated region
      $region29: #{tpu_custom_call.1} parent=5 // pred_check
        _
      $region30: #{tpu_custom_call.1} parent=5 // pred_check_branch
        %165 = sbr.rel (%p162) target = $region32
      $region31: #{tpu_custom_call.1} parent=5 // pred_region
        %s166 = ssub.s32 %s14, 1
        // Predicated region
        $region33: #{tpu_custom_call.1} parent=31 // pred_check
          %p167 = pneg %p61
        $region34: #{tpu_custom_call.1} parent=31 // pred_check_branch
          %169 = sbr.rel (%p167) target = $region36
        $region35: #{tpu_custom_call.1} parent=31 // pred_region
          %170 = dma.done [#allocation3], 14336
        $region36: #{tpu_custom_call.1} parent=31 // pred_fallthru
          _
        // Predicated region
        $region37: #{tpu_custom_call.1} parent=31 // pred_check
          %p171 = pneg %p82
        $region38: #{tpu_custom_call.1} parent=31 // pred_check_branch
          %173 = sbr.rel (%p171) target = $region40
        $region39: #{tpu_custom_call.1} parent=31 // pred_region
          %174 = dma.done [#allocation6], 9216
        $region40: #{tpu_custom_call.1} parent=31 // pred_fallthru
          _
        %p175 = scmp.lt.s32.totalorder %s19, 1
        %s176 = scalar_select %p175, %s19, 1
        %s177 = smul.addr %s176, 8
        %s178 = scalar_lea.vmem %s0, %s177
        %p179 = pneg %p40
        %p180 = pneg %p37
        %p181 = pneg %p61
        %p182 = pneg %p58
        %p183 = pneg %p82
        %p184 = pneg %p79
        %p185 = pneg %p108
        %p186 = pneg %p105
        %s187 = sand.u32 %s95, 1
        %s188 = scalar_lea.sflag [#allocation4], %s187
        %s189 = sand.u32 %s95, 1
        %s190 = scalar_lea.vmem [#allocation7], %s189
        %p191 = scmp.lt.s32.totalorder %s19, 1
        %s192 = scalar_select %p191, %s19, 1
        %s193 = smul.addr %s192, 8
        %s194 = scalar_lea.vmem %s0, %s193
        %v195 = vld [vmem:[%s194] sm:$0xff]
        %v196 = vld [vmem:[#allocation2] sm:$0xf]
        %v197 = vld [vmem:[#allocation2 + $0x8] sm:$0xf]
        %v198 = vld [vmem:[#allocation2 + $0x10] sm:$0xf]
        %v199 = vld [vmem:[#allocation2 + $0x18] sm:$0x1]
        %v201 = vrot.slane %v195, 7
        %vm203 = vcmask 1040384
        %v204 = vsel %vm203, 0.0, %v201
        %vm205 = vcmask 31744
        %v207 = vsel %vm205, %v204, 0
        %vm209 = vcmask 1043456
        %v211 = vsel %vm209, %v196, 0
        %213 = vmatprep.subr.mxu0 0.0
        %214 = vmatpush1.msra.mxu0 0.0
        %215 = vmatprep.subr.mxu0 0.0
        %216 = vmatpush1.msra.mxu0 0.0
        %217 = vmatprep.subr.mxu0 0.0
        %218 = vmatpush1.msra.mxu0 0.0
        %219 = vmatprep.subr.mxu0 0.0
        %220 = vmatpush1.msra.mxu0 0.0
        %221 = vmatprep.subr.mxu0 0.0
        %222 = vmatpush1.msra.mxu0 0.0
        %223 = vmatprep.subr.mxu0 0.0
        %224 = vmatpush1.msra.mxu0 0.0
        %225 = vmatprep.subr.mxu0 0.0
        %226 = vmatpush1.msra.mxu0 0.0
        %227 = vmatprep.subr.mxu0 0.0
        %228 = vmatpush1.msra.mxu0 0.0
        %229 = vmatprep.subr.mxu0 0.0
        %230 = vmatpush1.msra.mxu0 0.0
        %231 = vmatprep.subr.mxu0 0.0
        %232 = vmatpush1.msra.mxu0 0.0
        %233 = vmatprep.subr.mxu0 0.0
        %234 = vmatpush1.msra.mxu0 0.0
        %235 = vmatprep.subr.mxu0 0.0
        %236 = vmatpush1.msra.mxu0 0.0
        %237 = vmatprep.subr.mxu0 0.0
        %238 = vmatpush1.msra.mxu0 0.0
        %239 = vmatprep.subr.mxu0 0.0
        %240 = vmatpush1.msra.mxu0 0.0
        %241 = vmatprep.subr.mxu0 0.0
        %242 = vmatpush1.msra.mxu0 0.0
        %243 = vmatprep.subr.mxu0 0.0
        %244 = vmatpush1.msra.mxu0 %v211
        %245 = vmatprep.subr.mxu0 0.0
        %246 = vmatpush2.msra.mxu0 0.0
        %247 = vmatprep.subr.mxu0 0.0
        %248 = vmatpush2.msra.mxu0 0.0
        %249 = vmatprep.subr.mxu0 0.0
        %250 = vmatpush2.msra.mxu0 0.0
        %251 = vmatprep.subr.mxu0 0.0
        %252 = vmatpush2.msra.mxu0 0.0
        %253 = vmatprep.subr.mxu0 0.0
        %254 = vmatpush2.msra.mxu0 0.0
        %255 = vmatprep.subr.mxu0 0.0
        %256 = vmatpush2.msra.mxu0 0.0
        %257 = vmatprep.subr.mxu0 0.0
        %258 = vmatpush2.msra.mxu0 0.0
        %259 = vmatprep.subr.mxu0 0.0
        %260 = vmatpush2.msra.mxu0 0.0
        %261 = vmatprep.subr.mxu0 0.0
        %262 = vmatpush2.msra.mxu0 0.0
        %263 = vmatprep.subr.mxu0 0.0
        %264 = vmatpush2.msra.mxu0 0.0
        %265 = vmatprep.subr.mxu0 0.0
        %266 = vmatpush2.msra.mxu0 0.0
        %267 = vmatprep.subr.mxu0 0.0
        %268 = vmatpush2.msra.mxu0 0.0
        %269 = vmatprep.subr.mxu0 0.0
        %270 = vmatpush2.msra.mxu0 0.0
        %271 = vmatprep.subr.mxu0 0.0
        %272 = vmatpush2.msra.mxu0 0.0
        %273 = vmatprep.subr.mxu0 0.0
        %274 = vmatpush2.msra.mxu0 0.0
        %275 = vmatprep.subr.mxu0 0.0
        %276 = vmatpush2.msra.mxu0 0.0
        %277 = vmatprep.mubr.f32.mxu0 0.0
        %278 = vmatmul.mubr.f32.gmra.mxu0 %v207
        %v279 = vpop.f32.mrf.mxu0
        %v280 = vadd.f32 0.0, %v279
        %v281 = vpop.f32.mrf.mxu0
        %282 = vdwg.mxu0
        %v283 = vsel %vm205, %v195, 0
        %v286 = vsel %vm209, %v197, 0
        %288 = vmatprep.subr.mxu0 0.0
        %289 = vmatpush1.msra.mxu0 0.0
        %290 = vmatprep.subr.mxu0 0.0
        %291 = vmatpush1.msra.mxu0 0.0
        %292 = vmatprep.subr.mxu0 0.0
        %293 = vmatpush1.msra.mxu0 0.0
        %294 = vmatprep.subr.mxu0 0.0
        %295 = vmatpush1.msra.mxu0 0.0
        %296 = vmatprep.subr.mxu0 0.0
        %297 = vmatpush1.msra.mxu0 0.0
        %298 = vmatprep.subr.mxu0 0.0
        %299 = vmatpush1.msra.mxu0 0.0
        %300 = vmatprep.subr.mxu0 0.0
        %301 = vmatpush1.msra.mxu0 0.0
        %302 = vmatprep.subr.mxu0 0.0
        %303 = vmatpush1.msra.mxu0 0.0
        %304 = vmatprep.subr.mxu0 0.0
        %305 = vmatpush1.msra.mxu0 0.0
        %306 = vmatprep.subr.mxu0 0.0
        %307 = vmatpush1.msra.mxu0 0.0
        %308 = vmatprep.subr.mxu0 0.0
        %309 = vmatpush1.msra.mxu0 0.0
        %310 = vmatprep.subr.mxu0 0.0
        %311 = vmatpush1.msra.mxu0 0.0
        %312 = vmatprep.subr.mxu0 0.0
        %313 = vmatpush1.msra.mxu0 0.0
        %314 = vmatprep.subr.mxu0 0.0
        %315 = vmatpush1.msra.mxu0 0.0
        %316 = vmatprep.subr.mxu0 0.0
        %317 = vmatpush1.msra.mxu0 0.0
        %318 = vmatprep.subr.mxu0 0.0
        %319 = vmatpush1.msra.mxu0 %v286
        %320 = vmatprep.subr.mxu0 0.0
        %321 = vmatpush2.msra.mxu0 0.0
        %322 = vmatprep.subr.mxu0 0.0
        %323 = vmatpush2.msra.mxu0 0.0
        %324 = vmatprep.subr.mxu0 0.0
        %325 = vmatpush2.msra.mxu0 0.0
        %326 = vmatprep.subr.mxu0 0.0
        %327 = vmatpush2.msra.mxu0 0.0
        %328 = vmatprep.subr.mxu0 0.0
        %329 = vmatpush2.msra.mxu0 0.0
        %330 = vmatprep.subr.mxu0 0.0
        %331 = vmatpush2.msra.mxu0 0.0
        %332 = vmatprep.subr.mxu0 0.0
        %333 = vmatpush2.msra.mxu0 0.0
        %334 = vmatprep.subr.mxu0 0.0
        %335 = vmatpush2.msra.mxu0 0.0
        %336 = vmatprep.subr.mxu0 0.0
        %337 = vmatpush2.msra.mxu0 0.0
        %338 = vmatprep.subr.mxu0 0.0
        %339 = vmatpush2.msra.mxu0 0.0
        %340 = vmatprep.subr.mxu0 0.0
        %341 = vmatpush2.msra.mxu0 0.0
        %342 = vmatprep.subr.mxu0 0.0
        %343 = vmatpush2.msra.mxu0 0.0
        %344 = vmatprep.subr.mxu0 0.0
        %345 = vmatpush2.msra.mxu0 0.0
        %346 = vmatprep.subr.mxu0 0.0
        %347 = vmatpush2.msra.mxu0 0.0
        %348 = vmatprep.subr.mxu0 0.0
        %349 = vmatpush2.msra.mxu0 0.0
        %350 = vmatprep.subr.mxu0 0.0
        %351 = vmatpush2.msra.mxu0 0.0
        %352 = vmatprep.mubr.f32.mxu0 0.0
        %353 = vmatmul.mubr.f32.gmra.mxu0 %v283
        %v354 = vpop.f32.mrf.mxu0
        %v355 = vadd.f32 %v280, %v354
        %v356 = vpop.f32.mrf.mxu0
        %357 = vdwg.mxu0
        %v358 = vrot.slane %v195, 1
        %vm360 = vcmask 1046528
        %v361 = vsel %vm360, %v358, 0.0
        %v363 = vsel %vm205, %v361, 0
        %v366 = vsel %vm209, %v198, 0
        %368 = vmatprep.subr.mxu0 0.0
        %369 = vmatpush1.msra.mxu0 0.0
        %370 = vmatprep.subr.mxu0 0.0
        %371 = vmatpush1.msra.mxu0 0.0
        %372 = vmatprep.subr.mxu0 0.0
        %373 = vmatpush1.msra.mxu0 0.0
        %374 = vmatprep.subr.mxu0 0.0
        %375 = vmatpush1.msra.mxu0 0.0
        %376 = vmatprep.subr.mxu0 0.0
        %377 = vmatpush1.msra.mxu0 0.0
        %378 = vmatprep.subr.mxu0 0.0
        %379 = vmatpush1.msra.mxu0 0.0
        %380 = vmatprep.subr.mxu0 0.0
        %381 = vmatpush1.msra.mxu0 0.0
        %382 = vmatprep.subr.mxu0 0.0
        %383 = vmatpush1.msra.mxu0 0.0
        %384 = vmatprep.subr.mxu0 0.0
        %385 = vmatpush1.msra.mxu0 0.0
        %386 = vmatprep.subr.mxu0 0.0
        %387 = vmatpush1.msra.mxu0 0.0
        %388 = vmatprep.subr.mxu0 0.0
        %389 = vmatpush1.msra.mxu0 0.0
        %390 = vmatprep.subr.mxu0 0.0
        %391 = vmatpush1.msra.mxu0 0.0
        %392 = vmatprep.subr.mxu0 0.0
        %393 = vmatpush1.msra.mxu0 0.0
        %394 = vmatprep.subr.mxu0 0.0
        %395 = vmatpush1.msra.mxu0 0.0
        %396 = vmatprep.subr.mxu0 0.0
        %397 = vmatpush1.msra.mxu0 0.0
        %398 = vmatprep.subr.mxu0 0.0
        %399 = vmatpush1.msra.mxu0 %v366
        %400 = vmatprep.subr.mxu0 0.0
        %401 = vmatpush2.msra.mxu0 0.0
        %402 = vmatprep.subr.mxu0 0.0
        %403 = vmatpush2.msra.mxu0 0.0
        %404 = vmatprep.subr.mxu0 0.0
        %405 = vmatpush2.msra.mxu0 0.0
        %406 = vmatprep.subr.mxu0 0.0
        %407 = vmatpush2.msra.mxu0 0.0
        %408 = vmatprep.subr.mxu0 0.0
        %409 = vmatpush2.msra.mxu0 0.0
        %410 = vmatprep.subr.mxu0 0.0
        %411 = vmatpush2.msra.mxu0 0.0
        %412 = vmatprep.subr.mxu0 0.0
        %413 = vmatpush2.msra.mxu0 0.0
        %414 = vmatprep.subr.mxu0 0.0
        %415 = vmatpush2.msra.mxu0 0.0
        %416 = vmatprep.subr.mxu0 0.0
        %417 = vmatpush2.msra.mxu0 0.0
        %418 = vmatprep.subr.mxu0 0.0
        %419 = vmatpush2.msra.mxu0 0.0
        %420 = vmatprep.subr.mxu0 0.0
        %421 = vmatpush2.msra.mxu0 0.0
        %422 = vmatprep.subr.mxu0 0.0
        %423 = vmatpush2.msra.mxu0 0.0
        %424 = vmatprep.subr.mxu0 0.0
        %425 = vmatpush2.msra.mxu0 0.0
        %426 = vmatprep.subr.mxu0 0.0
        %427 = vmatpush2.msra.mxu0 0.0
        %428 = vmatprep.subr.mxu0 0.0
        %429 = vmatpush2.msra.mxu0 0.0
        %430 = vmatprep.subr.mxu0 0.0
        %431 = vmatpush2.msra.mxu0 0.0
        %432 = vmatprep.mubr.f32.mxu0 0.0
        %433 = vmatmul.mubr.f32.gmra.mxu0 %v363
        %v434 = vpop.f32.mrf.mxu0
        %v435 = vadd.f32 0.0, %v434
        %v436 = vpop.f32.mrf.mxu0
        %437 = vdwg.mxu0
        %v438 = vadd.f32 %v355, %v435
        %v439 = vlaneseq
        %v440 = vshrl.u32 %v439, 7
        %v441 = vsub.s32 0, %v440
        %v442 = vrot.slane %v199, %v441
        %v443 = vadd.f32 %v438, %v442
        %v444 = vmax.f32 %v443, 0.0
        %v445 = vld [vmem:[#allocation2 + $0x20] sm:$0xff]
        %v446 = vld [vmem:[#allocation2 + $0x28] sm:$0xff]
        %v447 = vld [vmem:[#allocation2 + $0x30] sm:$0xff]
        %v448 = vld [vmem:[#allocation2 + $0x38] sm:$0xff]
        %v449 = vld [vmem:[#allocation2 + $0x40] sm:$0xff]
        %v450 = vld [vmem:[#allocation2 + $0x48] sm:$0xff]
        %v451 = vld [vmem:[#allocation2 + $0x50] sm:$0x1]
        %v453 = vrot.slane %v444, 7
        %v455 = vsel %vm203, 0.0, %v453
        %vm456 = vcmask 130048
        %v458 = vsel %vm456, %v455, 0
        %460 = vmatprep.subr.mxu0 0.0
        %461 = vmatpush1.msra.mxu0 0.0
        %462 = vmatprep.subr.mxu0 0.0
        %463 = vmatpush1.msra.mxu0 0.0
        %464 = vmatprep.subr.mxu0 0.0
        %465 = vmatpush1.msra.mxu0 0.0
        %466 = vmatprep.subr.mxu0 0.0
        %467 = vmatpush1.msra.mxu0 0.0
        %468 = vmatprep.subr.mxu0 0.0
        %469 = vmatpush1.msra.mxu0 0.0
        %470 = vmatprep.subr.mxu0 0.0
        %471 = vmatpush1.msra.mxu0 0.0
        %472 = vmatprep.subr.mxu0 0.0
        %473 = vmatpush1.msra.mxu0 0.0
        %474 = vmatprep.subr.mxu0 0.0
        %475 = vmatpush1.msra.mxu0 0.0
        %476 = vmatprep.subr.mxu0 0.0
        %477 = vmatpush1.msra.mxu0 0.0
        %478 = vmatprep.subr.mxu0 0.0
        %479 = vmatpush1.msra.mxu0 0.0
        %480 = vmatprep.subr.mxu0 0.0
        %481 = vmatpush1.msra.mxu0 0.0
        %482 = vmatprep.subr.mxu0 0.0
        %483 = vmatpush1.msra.mxu0 0.0
        %484 = vmatprep.subr.mxu0 0.0
        %485 = vmatpush1.msra.mxu0 0.0
        %486 = vmatprep.subr.mxu0 0.0
        %487 = vmatpush1.msra.mxu0 0.0
        %488 = vmatprep.subr.mxu0 0.0
        %489 = vmatpush1.msra.mxu0 %v446
        %490 = vmatprep.subr.mxu0 0.0
        %491 = vmatpush1.msra.mxu0 %v445
        %492 = vmatprep.subr.mxu0 0.0
        %493 = vmatpush2.msra.mxu0 0.0
        %494 = vmatprep.subr.mxu0 0.0
        %495 = vmatpush2.msra.mxu0 0.0
        %496 = vmatprep.subr.mxu0 0.0
        %497 = vmatpush2.msra.mxu0 0.0
        %498 = vmatprep.subr.mxu0 0.0
        %499 = vmatpush2.msra.mxu0 0.0
        %500 = vmatprep.subr.mxu0 0.0
        %501 = vmatpush2.msra.mxu0 0.0
        %502 = vmatprep.subr.mxu0 0.0
        %503 = vmatpush2.msra.mxu0 0.0
        %504 = vmatprep.subr.mxu0 0.0
        %505 = vmatpush2.msra.mxu0 0.0
        %506 = vmatprep.subr.mxu0 0.0
        %507 = vmatpush2.msra.mxu0 0.0
        %508 = vmatprep.subr.mxu0 0.0
        %509 = vmatpush2.msra.mxu0 0.0
        %510 = vmatprep.subr.mxu0 0.0
        %511 = vmatpush2.msra.mxu0 0.0
        %512 = vmatprep.subr.mxu0 0.0
        %513 = vmatpush2.msra.mxu0 0.0
        %514 = vmatprep.subr.mxu0 0.0
        %515 = vmatpush2.msra.mxu0 0.0
        %516 = vmatprep.subr.mxu0 0.0
        %517 = vmatpush2.msra.mxu0 0.0
        %518 = vmatprep.subr.mxu0 0.0
        %519 = vmatpush2.msra.mxu0 0.0
        %520 = vmatprep.subr.mxu0 0.0
        %521 = vmatpush2.msra.mxu0 0.0
        %522 = vmatprep.subr.mxu0 0.0
        %523 = vmatpush2.msra.mxu0 0.0
        %524 = vmatprep.mubr.f32.mxu0 0.0
        %525 = vmatmul.mubr.f32.gmra.mxu0 %v458
        %v526 = vpop.f32.mrf.mxu0
        %v527 = vadd.f32 0.0, %v526
        %v528 = vpop.f32.mrf.mxu0
        %529 = vdwg.mxu0
        %v530 = vsel %vm456, %v444, 0
        %532 = vmatprep.subr.mxu0 0.0
        %533 = vmatpush1.msra.mxu0 0.0
        %534 = vmatprep.subr.mxu0 0.0
        %535 = vmatpush1.msra.mxu0 0.0
        %536 = vmatprep.subr.mxu0 0.0
        %537 = vmatpush1.msra.mxu0 0.0
        %538 = vmatprep.subr.mxu0 0.0
        %539 = vmatpush1.msra.mxu0 0.0
        %540 = vmatprep.subr.mxu0 0.0
        %541 = vmatpush1.msra.mxu0 0.0
        %542 = vmatprep.subr.mxu0 0.0
        %543 = vmatpush1.msra.mxu0 0.0
        %544 = vmatprep.subr.mxu0 0.0
        %545 = vmatpush1.msra.mxu0 0.0
        %546 = vmatprep.subr.mxu0 0.0
        %547 = vmatpush1.msra.mxu0 0.0
        %548 = vmatprep.subr.mxu0 0.0
        %549 = vmatpush1.msra.mxu0 0.0
        %550 = vmatprep.subr.mxu0 0.0
        %551 = vmatpush1.msra.mxu0 0.0
        %552 = vmatprep.subr.mxu0 0.0
        %553 = vmatpush1.msra.mxu0 0.0
        %554 = vmatprep.subr.mxu0 0.0
        %555 = vmatpush1.msra.mxu0 0.0
        %556 = vmatprep.subr.mxu0 0.0
        %557 = vmatpush1.msra.mxu0 0.0
        %558 = vmatprep.subr.mxu0 0.0
        %559 = vmatpush1.msra.mxu0 0.0
        %560 = vmatprep.subr.mxu0 0.0
        %561 = vmatpush1.msra.mxu0 %v448
        %562 = vmatprep.subr.mxu0 0.0
        %563 = vmatpush1.msra.mxu0 %v447
        %564 = vmatprep.subr.mxu0 0.0
        %565 = vmatpush2.msra.mxu0 0.0
        %566 = vmatprep.subr.mxu0 0.0
        %567 = vmatpush2.msra.mxu0 0.0
        %568 = vmatprep.subr.mxu0 0.0
        %569 = vmatpush2.msra.mxu0 0.0
        %570 = vmatprep.subr.mxu0 0.0
        %571 = vmatpush2.msra.mxu0 0.0
        %572 = vmatprep.subr.mxu0 0.0
        %573 = vmatpush2.msra.mxu0 0.0
        %574 = vmatprep.subr.mxu0 0.0
        %575 = vmatpush2.msra.mxu0 0.0
        %576 = vmatprep.subr.mxu0 0.0
        %577 = vmatpush2.msra.mxu0 0.0
        %578 = vmatprep.subr.mxu0 0.0
        %579 = vmatpush2.msra.mxu0 0.0
        %580 = vmatprep.subr.mxu0 0.0
        %581 = vmatpush2.msra.mxu0 0.0
        %582 = vmatprep.subr.mxu0 0.0
        %583 = vmatpush2.msra.mxu0 0.0
        %584 = vmatprep.subr.mxu0 0.0
        %585 = vmatpush2.msra.mxu0 0.0
        %586 = vmatprep.subr.mxu0 0.0
        %587 = vmatpush2.msra.mxu0 0.0
        %588 = vmatprep.subr.mxu0 0.0
        %589 = vmatpush2.msra.mxu0 0.0
        %590 = vmatprep.subr.mxu0 0.0
        %591 = vmatpush2.msra.mxu0 0.0
        %592 = vmatprep.subr.mxu0 0.0
        %593 = vmatpush2.msra.mxu0 0.0
        %594 = vmatprep.subr.mxu0 0.0
        %595 = vmatpush2.msra.mxu0 0.0
        %596 = vmatprep.mubr.f32.mxu0 0.0
        %597 = vmatmul.mubr.f32.gmra.mxu0 %v530
        %v598 = vpop.f32.mrf.mxu0
        %v599 = vadd.f32 %v527, %v598
        %v600 = vpop.f32.mrf.mxu0
        %601 = vdwg.mxu0
        %v602 = vrot.slane %v444, 1
        %v604 = vsel %vm360, %v602, 0.0
        %v606 = vsel %vm456, %v604, 0
        %608 = vmatprep.subr.mxu0 0.0
        %609 = vmatpush1.msra.mxu0 0.0
        %610 = vmatprep.subr.mxu0 0.0
        %611 = vmatpush1.msra.mxu0 0.0
        %612 = vmatprep.subr.mxu0 0.0
        %613 = vmatpush1.msra.mxu0 0.0
        %614 = vmatprep.subr.mxu0 0.0
        %615 = vmatpush1.msra.mxu0 0.0
        %616 = vmatprep.subr.mxu0 0.0
        %617 = vmatpush1.msra.mxu0 0.0
        %618 = vmatprep.subr.mxu0 0.0
        %619 = vmatpush1.msra.mxu0 0.0
        %620 = vmatprep.subr.mxu0 0.0
        %621 = vmatpush1.msra.mxu0 0.0
        %622 = vmatprep.subr.mxu0 0.0
        %623 = vmatpush1.msra.mxu0 0.0
        %624 = vmatprep.subr.mxu0 0.0
        %625 = vmatpush1.msra.mxu0 0.0
        %626 = vmatprep.subr.mxu0 0.0
        %627 = vmatpush1.msra.mxu0 0.0
        %628 = vmatprep.subr.mxu0 0.0
        %629 = vmatpush1.msra.mxu0 0.0
        %630 = vmatprep.subr.mxu0 0.0
        %631 = vmatpush1.msra.mxu0 0.0
        %632 = vmatprep.subr.mxu0 0.0
        %633 = vmatpush1.msra.mxu0 0.0
        %634 = vmatprep.subr.mxu0 0.0
        %635 = vmatpush1.msra.mxu0 0.0
        %636 = vmatprep.subr.mxu0 0.0
        %637 = vmatpush1.msra.mxu0 %v450
        %638 = vmatprep.subr.mxu0 0.0
        %639 = vmatpush1.msra.mxu0 %v449
        %640 = vmatprep.subr.mxu0 0.0
        %641 = vmatpush2.msra.mxu0 0.0
        %642 = vmatprep.subr.mxu0 0.0
        %643 = vmatpush2.msra.mxu0 0.0
        %644 = vmatprep.subr.mxu0 0.0
        %645 = vmatpush2.msra.mxu0 0.0
        %646 = vmatprep.subr.mxu0 0.0
        %647 = vmatpush2.msra.mxu0 0.0
        %648 = vmatprep.subr.mxu0 0.0
        %649 = vmatpush2.msra.mxu0 0.0
        %650 = vmatprep.subr.mxu0 0.0
        %651 = vmatpush2.msra.mxu0 0.0
        %652 = vmatprep.subr.mxu0 0.0
        %653 = vmatpush2.msra.mxu0 0.0
        %654 = vmatprep.subr.mxu0 0.0
        %655 = vmatpush2.msra.mxu0 0.0
        %656 = vmatprep.subr.mxu0 0.0
        %657 = vmatpush2.msra.mxu0 0.0
        %658 = vmatprep.subr.mxu0 0.0
        %659 = vmatpush2.msra.mxu0 0.0
        %660 = vmatprep.subr.mxu0 0.0
        %661 = vmatpush2.msra.mxu0 0.0
        %662 = vmatprep.subr.mxu0 0.0
        %663 = vmatpush2.msra.mxu0 0.0
        %664 = vmatprep.subr.mxu0 0.0
        %665 = vmatpush2.msra.mxu0 0.0
        %666 = vmatprep.subr.mxu0 0.0
        %667 = vmatpush2.msra.mxu0 0.0
        %668 = vmatprep.subr.mxu0 0.0
        %669 = vmatpush2.msra.mxu0 0.0
        %670 = vmatprep.subr.mxu0 0.0
        %671 = vmatpush2.msra.mxu0 0.0
        %672 = vmatprep.mubr.f32.mxu0 0.0
        %673 = vmatmul.mubr.f32.gmra.mxu0 %v606
        %v674 = vpop.f32.mrf.mxu0
        %v675 = vadd.f32 0.0, %v674
        %v676 = vpop.f32.mrf.mxu0
        %677 = vdwg.mxu0
        %v678 = vadd.f32 %v599, %v675
        %v679 = vlaneseq
        %v680 = vshrl.u32 %v679, 7
        %v681 = vsub.s32 0, %v680
        %v682 = vrot.slane %v451, %v681
        %v683 = vadd.f32 %v678, %v682
        %v684 = vmax.f32 %v683, 0.0
        %v685 = vld [vmem:[#allocation2 + $0x58] sm:$0xff]
        %v686 = vld [vmem:[#allocation2 + $0x60] sm:$0xff]
        %v687 = vld [vmem:[#allocation2 + $0x68] sm:$0xff]
        %v688 = vld [vmem:[#allocation2 + $0x70] sm:$0xff]
        %v689 = vld [vmem:[#allocation2 + $0x78] sm:$0xff]
        %v690 = vld [vmem:[#allocation2 + $0x80] sm:$0xff]
        %v691 = vld [vmem:[#allocation2 + $0x88] sm:$0xff]
        %v692 = vld [vmem:[#allocation2 + $0x90] sm:$0xff]
        %v693 = vld [vmem:[#allocation2 + $0x98] sm:$0xff]
        %v694 = vld [vmem:[#allocation2 + $0xa0] sm:$0xff]
        %v695 = vld [vmem:[#allocation2 + $0xa8] sm:$0xff]
        %v696 = vld [vmem:[#allocation2 + $0xb0] sm:$0xff]
        %v697 = vld [vmem:[#allocation2 + $0xb8] sm:$0x1]
        %v698 = vld [vmem:[#allocation2 + $0xc0] sm:$0x1]
        %v699 = vld [vmem:[#allocation2 + $0xc8] sm:$0x1]
        %v700 = vld [vmem:[#allocation2 + $0xd0] sm:$0xff]
        %v701 = vld [vmem:[#allocation2 + $0xd8] sm:$0xff]
        %v702 = vld [vmem:[#allocation2 + $0xe0] sm:$0xff]
        %v703 = vld [vmem:[#allocation2 + $0xe8] sm:$0xff]
        %v704 = vld [vmem:[#allocation2 + $0xf0] sm:$0x1]
        %v705 = vlaneseq
        %v706 = vshrl.u32 %v705, 7
        %v707 = vsub.s32 0, %v706
        %v708 = vrot.slane %v697, %v707
        %vm709 = vcmask 261120
        %v711 = vsel %vm709, %v684, 0
        %713 = vmatprep.subr.mxu0 0.0
        %714 = vmatpush1.msra.mxu0 0.0
        %715 = vmatprep.subr.mxu0 0.0
        %716 = vmatpush1.msra.mxu0 0.0
        %717 = vmatprep.subr.mxu0 0.0
        %718 = vmatpush1.msra.mxu0 0.0
        %719 = vmatprep.subr.mxu0 0.0
        %720 = vmatpush1.msra.mxu0 0.0
        %721 = vmatprep.subr.mxu0 0.0
        %722 = vmatpush1.msra.mxu0 0.0
        %723 = vmatprep.subr.mxu0 0.0
        %724 = vmatpush1.msra.mxu0 0.0
        %725 = vmatprep.subr.mxu0 0.0
        %726 = vmatpush1.msra.mxu0 0.0
        %727 = vmatprep.subr.mxu0 0.0
        %728 = vmatpush1.msra.mxu0 0.0
        %729 = vmatprep.subr.mxu0 0.0
        %730 = vmatpush1.msra.mxu0 0.0
        %731 = vmatprep.subr.mxu0 0.0
        %732 = vmatpush1.msra.mxu0 0.0
        %733 = vmatprep.subr.mxu0 0.0
        %734 = vmatpush1.msra.mxu0 0.0
        %735 = vmatprep.subr.mxu0 0.0
        %736 = vmatpush1.msra.mxu0 0.0
        %737 = vmatprep.subr.mxu0 0.0
        %738 = vmatpush1.msra.mxu0 %v688
        %739 = vmatprep.subr.mxu0 0.0
        %740 = vmatpush1.msra.mxu0 %v687
        %741 = vmatprep.subr.mxu0 0.0
        %742 = vmatpush1.msra.mxu0 %v686
        %743 = vmatprep.subr.mxu0 0.0
        %744 = vmatpush1.msra.mxu0 %v685
        %745 = vmatprep.subr.mxu0 0.0
        %746 = vmatpush2.msra.mxu0 0.0
        %747 = vmatprep.subr.mxu0 0.0
        %748 = vmatpush2.msra.mxu0 0.0
        %749 = vmatprep.subr.mxu0 0.0
        %750 = vmatpush2.msra.mxu0 0.0
        %751 = vmatprep.subr.mxu0 0.0
        %752 = vmatpush2.msra.mxu0 0.0
        %753 = vmatprep.subr.mxu0 0.0
        %754 = vmatpush2.msra.mxu0 0.0
        %755 = vmatprep.subr.mxu0 0.0
        %756 = vmatpush2.msra.mxu0 0.0
        %757 = vmatprep.subr.mxu0 0.0
        %758 = vmatpush2.msra.mxu0 0.0
        %759 = vmatprep.subr.mxu0 0.0
        %760 = vmatpush2.msra.mxu0 0.0
        %761 = vmatprep.subr.mxu0 0.0
        %762 = vmatpush2.msra.mxu0 0.0
        %763 = vmatprep.subr.mxu0 0.0
        %764 = vmatpush2.msra.mxu0 0.0
        %765 = vmatprep.subr.mxu0 0.0
        %766 = vmatpush2.msra.mxu0 0.0
        %767 = vmatprep.subr.mxu0 0.0
        %768 = vmatpush2.msra.mxu0 0.0
        %769 = vmatprep.subr.mxu0 0.0
        %770 = vmatpush2.msra.mxu0 0.0
        %771 = vmatprep.subr.mxu0 0.0
        %772 = vmatpush2.msra.mxu0 0.0
        %773 = vmatprep.subr.mxu0 0.0
        %774 = vmatpush2.msra.mxu0 0.0
        %775 = vmatprep.subr.mxu0 0.0
        %776 = vmatpush2.msra.mxu0 0.0
        %777 = vmatprep.mubr.f32.mxu0 0.0
        %778 = vmatmul.mubr.f32.gmra.mxu0 %v711
        %v779 = vpop.f32.mrf.mxu0
        %v780 = vadd.f32 %v708, %v779
        %v781 = vpop.f32.mrf.mxu0
        %782 = vdwg.mxu0
        %v783 = vlaneseq
        %v784 = vshrl.u32 %v783, 7
        %v785 = vsub.s32 0, %v784
        %v786 = vrot.slane %v698, %v785
        %787 = vmatprep.subr.mxu0 0.0
        %788 = vmatpush1.msra.mxu0 0.0
        %789 = vmatprep.subr.mxu0 0.0
        %790 = vmatpush1.msra.mxu0 0.0
        %791 = vmatprep.subr.mxu0 0.0
        %792 = vmatpush1.msra.mxu0 0.0
        %793 = vmatprep.subr.mxu0 0.0
        %794 = vmatpush1.msra.mxu0 0.0
        %795 = vmatprep.subr.mxu0 0.0
        %796 = vmatpush1.msra.mxu0 0.0
        %797 = vmatprep.subr.mxu0 0.0
        %798 = vmatpush1.msra.mxu0 0.0
        %799 = vmatprep.subr.mxu0 0.0
        %800 = vmatpush1.msra.mxu0 0.0
        %801 = vmatprep.subr.mxu0 0.0
        %802 = vmatpush1.msra.mxu0 0.0
        %803 = vmatprep.subr.mxu0 0.0
        %804 = vmatpush1.msra.mxu0 0.0
        %805 = vmatprep.subr.mxu0 0.0
        %806 = vmatpush1.msra.mxu0 0.0
        %807 = vmatprep.subr.mxu0 0.0
        %808 = vmatpush1.msra.mxu0 0.0
        %809 = vmatprep.subr.mxu0 0.0
        %810 = vmatpush1.msra.mxu0 0.0
        %811 = vmatprep.subr.mxu0 0.0
        %812 = vmatpush1.msra.mxu0 %v692
        %813 = vmatprep.subr.mxu0 0.0
        %814 = vmatpush1.msra.mxu0 %v691
        %815 = vmatprep.subr.mxu0 0.0
        %816 = vmatpush1.msra.mxu0 %v690
        %817 = vmatprep.subr.mxu0 0.0
        %818 = vmatpush1.msra.mxu0 %v689
        %819 = vmatprep.subr.mxu0 0.0
        %820 = vmatpush2.msra.mxu0 0.0
        %821 = vmatprep.subr.mxu0 0.0
        %822 = vmatpush2.msra.mxu0 0.0
        %823 = vmatprep.subr.mxu0 0.0
        %824 = vmatpush2.msra.mxu0 0.0
        %825 = vmatprep.subr.mxu0 0.0
        %826 = vmatpush2.msra.mxu0 0.0
        %827 = vmatprep.subr.mxu0 0.0
        %828 = vmatpush2.msra.mxu0 0.0
        %829 = vmatprep.subr.mxu0 0.0
        %830 = vmatpush2.msra.mxu0 0.0
        %831 = vmatprep.subr.mxu0 0.0
        %832 = vmatpush2.msra.mxu0 0.0
        %833 = vmatprep.subr.mxu0 0.0
        %834 = vmatpush2.msra.mxu0 0.0
        %835 = vmatprep.subr.mxu0 0.0
        %836 = vmatpush2.msra.mxu0 0.0
        %837 = vmatprep.subr.mxu0 0.0
        %838 = vmatpush2.msra.mxu0 0.0
        %839 = vmatprep.subr.mxu0 0.0
        %840 = vmatpush2.msra.mxu0 0.0
        %841 = vmatprep.subr.mxu0 0.0
        %842 = vmatpush2.msra.mxu0 0.0
        %843 = vmatprep.subr.mxu0 0.0
        %844 = vmatpush2.msra.mxu0 0.0
        %845 = vmatprep.subr.mxu0 0.0
        %846 = vmatpush2.msra.mxu0 0.0
        %847 = vmatprep.subr.mxu0 0.0
        %848 = vmatpush2.msra.mxu0 0.0
        %849 = vmatprep.subr.mxu0 0.0
        %850 = vmatpush2.msra.mxu0 0.0
        %851 = vmatprep.mubr.f32.mxu0 0.0
        %852 = vmatmul.mubr.f32.gmra.mxu0 %v711
        %v853 = vpop.f32.mrf.mxu0
        %v854 = vadd.f32 %v786, %v853
        %v855 = vpop.f32.mrf.mxu0
        %856 = vdwg.mxu0
        %v857 = vlaneseq
        %v858 = vshrl.u32 %v857, 7
        %v859 = vsub.s32 0, %v858
        %v860 = vrot.slane %v699, %v859
        %861 = vmatprep.subr.mxu0 0.0
        %862 = vmatpush1.msra.mxu0 0.0
        %863 = vmatprep.subr.mxu0 0.0
        %864 = vmatpush1.msra.mxu0 0.0
        %865 = vmatprep.subr.mxu0 0.0
        %866 = vmatpush1.msra.mxu0 0.0
        %867 = vmatprep.subr.mxu0 0.0
        %868 = vmatpush1.msra.mxu0 0.0
        %869 = vmatprep.subr.mxu0 0.0
        %870 = vmatpush1.msra.mxu0 0.0
        %871 = vmatprep.subr.mxu0 0.0
        %872 = vmatpush1.msra.mxu0 0.0
        %873 = vmatprep.subr.mxu0 0.0
        %874 = vmatpush1.msra.mxu0 0.0
        %875 = vmatprep.subr.mxu0 0.0
        %876 = vmatpush1.msra.mxu0 0.0
        %877 = vmatprep.subr.mxu0 0.0
        %878 = vmatpush1.msra.mxu0 0.0
        %879 = vmatprep.subr.mxu0 0.0
        %880 = vmatpush1.msra.mxu0 0.0
        %881 = vmatprep.subr.mxu0 0.0
        %882 = vmatpush1.msra.mxu0 0.0
        %883 = vmatprep.subr.mxu0 0.0
        %884 = vmatpush1.msra.mxu0 0.0
        %885 = vmatprep.subr.mxu0 0.0
        %886 = vmatpush1.msra.mxu0 %v696
        %887 = vmatprep.subr.mxu0 0.0
        %888 = vmatpush1.msra.mxu0 %v695
        %889 = vmatprep.subr.mxu0 0.0
        %890 = vmatpush1.msra.mxu0 %v694
        %891 = vmatprep.subr.mxu0 0.0
        %892 = vmatpush1.msra.mxu0 %v693
        %893 = vmatprep.subr.mxu0 0.0
        %894 = vmatpush2.msra.mxu0 0.0
        %895 = vmatprep.subr.mxu0 0.0
        %896 = vmatpush2.msra.mxu0 0.0
        %897 = vmatprep.subr.mxu0 0.0
        %898 = vmatpush2.msra.mxu0 0.0
        %899 = vmatprep.subr.mxu0 0.0
        %900 = vmatpush2.msra.mxu0 0.0
        %901 = vmatprep.subr.mxu0 0.0
        %902 = vmatpush2.msra.mxu0 0.0
        %903 = vmatprep.subr.mxu0 0.0
        %904 = vmatpush2.msra.mxu0 0.0
        %905 = vmatprep.subr.mxu0 0.0
        %906 = vmatpush2.msra.mxu0 0.0
        %907 = vmatprep.subr.mxu0 0.0
        %908 = vmatpush2.msra.mxu0 0.0
        %909 = vmatprep.subr.mxu0 0.0
        %910 = vmatpush2.msra.mxu0 0.0
        %911 = vmatprep.subr.mxu0 0.0
        %912 = vmatpush2.msra.mxu0 0.0
        %913 = vmatprep.subr.mxu0 0.0
        %914 = vmatpush2.msra.mxu0 0.0
        %915 = vmatprep.subr.mxu0 0.0
        %916 = vmatpush2.msra.mxu0 0.0
        %917 = vmatprep.subr.mxu0 0.0
        %918 = vmatpush2.msra.mxu0 0.0
        %919 = vmatprep.subr.mxu0 0.0
        %920 = vmatpush2.msra.mxu0 0.0
        %921 = vmatprep.subr.mxu0 0.0
        %922 = vmatpush2.msra.mxu0 0.0
        %923 = vmatprep.subr.mxu0 0.0
        %924 = vmatpush2.msra.mxu0 0.0
        %925 = vmatprep.mubr.f32.mxu0 0.0
        %926 = vmatmul.mubr.f32.gmra.mxu0 %v711
        %v927 = vpop.f32.mrf.mxu0
        %v928 = vadd.f32 %v860, %v927
        %v929 = vpop.f32.mrf.mxu0
        %930 = vdwg.mxu0
        %v932 = vsel %vm456, %v780, 0
        %v935 = vsel %vm456, %v854, 0
        %937 = vmatprep.subr.mxu0 0.0
        %938 = vmatpush1.xpose.msra.mxu0 0.0
        %939 = vmatprep.subr.mxu0 0.0
        %940 = vmatpush1.xpose.msra.mxu0 0.0
        %941 = vmatprep.subr.mxu0 0.0
        %942 = vmatpush1.xpose.msra.mxu0 0.0
        %943 = vmatprep.subr.mxu0 0.0
        %944 = vmatpush1.xpose.msra.mxu0 0.0
        %945 = vmatprep.subr.mxu0 0.0
        %946 = vmatpush1.xpose.msra.mxu0 0.0
        %947 = vmatprep.subr.mxu0 0.0
        %948 = vmatpush1.xpose.msra.mxu0 0.0
        %949 = vmatprep.subr.mxu0 0.0
        %950 = vmatpush1.xpose.msra.mxu0 0.0
        %951 = vmatprep.subr.mxu0 0.0
        %952 = vmatpush1.xpose.msra.mxu0 0.0
        %953 = vmatprep.subr.mxu0 0.0
        %954 = vmatpush1.xpose.msra.mxu0 0.0
        %955 = vmatprep.subr.mxu0 0.0
        %956 = vmatpush1.xpose.msra.mxu0 0.0
        %957 = vmatprep.subr.mxu0 0.0
        %958 = vmatpush1.xpose.msra.mxu0 0.0
        %959 = vmatprep.subr.mxu0 0.0
        %960 = vmatpush1.xpose.msra.mxu0 0.0
        %961 = vmatprep.subr.mxu0 0.0
        %962 = vmatpush1.xpose.msra.mxu0 0.0
        %963 = vmatprep.subr.mxu0 0.0
        %964 = vmatpush1.xpose.msra.mxu0 0.0
        %965 = vmatprep.subr.mxu0 0.0
        %966 = vmatpush1.xpose.msra.mxu0 0.0
        %967 = vmatprep.subr.mxu0 0.0
        %968 = vmatpush1.xpose.msra.mxu0 %v935
        %969 = vmatprep.subr.mxu0 0.0
        %970 = vmatpush2.xpose.msra.mxu0 0.0
        %971 = vmatprep.subr.mxu0 0.0
        %972 = vmatpush2.xpose.msra.mxu0 0.0
        %973 = vmatprep.subr.mxu0 0.0
        %974 = vmatpush2.xpose.msra.mxu0 0.0
        %975 = vmatprep.subr.mxu0 0.0
        %976 = vmatpush2.xpose.msra.mxu0 0.0
        %977 = vmatprep.subr.mxu0 0.0
        %978 = vmatpush2.xpose.msra.mxu0 0.0
        %979 = vmatprep.subr.mxu0 0.0
        %980 = vmatpush2.xpose.msra.mxu0 0.0
        %981 = vmatprep.subr.mxu0 0.0
        %982 = vmatpush2.xpose.msra.mxu0 0.0
        %983 = vmatprep.subr.mxu0 0.0
        %984 = vmatpush2.xpose.msra.mxu0 0.0
        %985 = vmatprep.subr.mxu0 0.0
        %986 = vmatpush2.xpose.msra.mxu0 0.0
        %987 = vmatprep.subr.mxu0 0.0
        %988 = vmatpush2.xpose.msra.mxu0 0.0
        %989 = vmatprep.subr.mxu0 0.0
        %990 = vmatpush2.xpose.msra.mxu0 0.0
        %991 = vmatprep.subr.mxu0 0.0
        %992 = vmatpush2.xpose.msra.mxu0 0.0
        %993 = vmatprep.subr.mxu0 0.0
        %994 = vmatpush2.xpose.msra.mxu0 0.0
        %995 = vmatprep.subr.mxu0 0.0
        %996 = vmatpush2.xpose.msra.mxu0 0.0
        %997 = vmatprep.subr.mxu0 0.0
        %998 = vmatpush2.xpose.msra.mxu0 0.0
        %999 = vmatprep.subr.mxu0 0.0
        %1000 = vmatpush2.xpose.msra.mxu0 0.0
        %1001 = vmatprep.mubr.f32.mxu0 0.0
        %1002 = vmatmul.mubr.f32.gmra.mxu0 %v932
        %v1003 = vpop.f32.mrf.mxu0
        %v1004 = vadd.f32 0.0, %v1003
        %v1005 = vpop.f32.mrf.mxu0
        %1006 = vdwg.mxu0
        %v1007 = vmul.f32 %v1004, 0.25
        %vm1008 = vcmask 64512
        %v1009 = vsel %vm1008, %v1007, -inf
        %1010 = vmax.xlane.f32.xlu0 %v1009
        %v1011 = vpop.xlane.xlu0 %1010
        %v1012 = vsub.f32 %v1007, %v1011
        %v1013 = vmul.f32 %v1012, 1.442695
        %v1014 = vpow.pop %v1013
        %v1015 = vsel %vm1008, %v1014, 0.0
        %1016 = vadd.xlane.f32.xlu0 %v1015
        %v1017 = vpop.xlane.xlu0 %1016
        %v1018 = vrcp.pop %v1017
        %v1019 = vmul.f32 %v1014, %v1018
        %v1021 = vsel %vm1008, %v1019, 0
        %1023 = vmatprep.subr.mxu0 0.0
        %1024 = vmatpush1.msra.mxu0 0.0
        %1025 = vmatprep.subr.mxu0 0.0
        %1026 = vmatpush1.msra.mxu0 0.0
        %1027 = vmatprep.subr.mxu0 0.0
        %1028 = vmatpush1.msra.mxu0 0.0
        %1029 = vmatprep.subr.mxu0 0.0
        %1030 = vmatpush1.msra.mxu0 0.0
        %1031 = vmatprep.subr.mxu0 0.0
        %1032 = vmatpush1.msra.mxu0 0.0
        %1033 = vmatprep.subr.mxu0 0.0
        %1034 = vmatpush1.msra.mxu0 0.0
        %1035 = vmatprep.subr.mxu0 0.0
        %1036 = vmatpush1.msra.mxu0 0.0
        %1037 = vmatprep.subr.mxu0 0.0
        %1038 = vmatpush1.msra.mxu0 0.0
        %1039 = vmatprep.subr.mxu0 0.0
        %1040 = vmatpush1.msra.mxu0 0.0
        %1041 = vmatprep.subr.mxu0 0.0
        %1042 = vmatpush1.msra.mxu0 0.0
        %1043 = vmatprep.subr.mxu0 0.0
        %1044 = vmatpush1.msra.mxu0 0.0
        %1045 = vmatprep.subr.mxu0 0.0
        %1046 = vmatpush1.msra.mxu0 0.0
        %1047 = vmatprep.subr.mxu0 0.0
        %1048 = vmatpush1.msra.mxu0 0.0
        %1049 = vmatprep.subr.mxu0 0.0
        %1050 = vmatpush1.msra.mxu0 0.0
        %1051 = vmatprep.subr.mxu0 0.0
        %1052 = vmatpush1.msra.mxu0 0.0
        %1053 = vmatprep.subr.mxu0 0.0
        %1054 = vmatpush1.msra.mxu0 %v928
        %1055 = vmatprep.subr.mxu0 0.0
        %1056 = vmatpush2.msra.mxu0 0.0
        %1057 = vmatprep.subr.mxu0 0.0
        %1058 = vmatpush2.msra.mxu0 0.0
        %1059 = vmatprep.subr.mxu0 0.0
        %1060 = vmatpush2.msra.mxu0 0.0
        %1061 = vmatprep.subr.mxu0 0.0
        %1062 = vmatpush2.msra.mxu0 0.0
        %1063 = vmatprep.subr.mxu0 0.0
        %1064 = vmatpush2.msra.mxu0 0.0
        %1065 = vmatprep.subr.mxu0 0.0
        %1066 = vmatpush2.msra.mxu0 0.0
        %1067 = vmatprep.subr.mxu0 0.0
        %1068 = vmatpush2.msra.mxu0 0.0
        %1069 = vmatprep.subr.mxu0 0.0
        %1070 = vmatpush2.msra.mxu0 0.0
        %1071 = vmatprep.subr.mxu0 0.0
        %1072 = vmatpush2.msra.mxu0 0.0
        %1073 = vmatprep.subr.mxu0 0.0
        %1074 = vmatpush2.msra.mxu0 0.0
        %1075 = vmatprep.subr.mxu0 0.0
        %1076 = vmatpush2.msra.mxu0 0.0
        %1077 = vmatprep.subr.mxu0 0.0
        %1078 = vmatpush2.msra.mxu0 0.0
        %1079 = vmatprep.subr.mxu0 0.0
        %1080 = vmatpush2.msra.mxu0 0.0
        %1081 = vmatprep.subr.mxu0 0.0
        %1082 = vmatpush2.msra.mxu0 0.0
        %1083 = vmatprep.subr.mxu0 0.0
        %1084 = vmatpush2.msra.mxu0 0.0
        %1085 = vmatprep.subr.mxu0 0.0
        %1086 = vmatpush2.msra.mxu0 0.0
        %1087 = vmatprep.mubr.f32.mxu0 0.0
        %1088 = vmatmul.mubr.f32.gmra.mxu0 %v1021
        %v1089 = vpop.f32.mrf.mxu0
        %v1090 = vadd.f32 0.0, %v1089
        %v1091 = vpop.f32.mrf.mxu0
        %1092 = vdwg.mxu0
        %1093 = vrot.lane.b32.xlu0 %v780, 112
        %v1094 = vpop.permute.xlu0 %1093
        %1095 = vrot.lane.b32.xlu0 %v854, 112
        %v1096 = vpop.permute.xlu0 %1095
        %v1097 = vsel %vm456, %v1094, 0
        %v1099 = vsel %vm456, %v1096, 0
        %1101 = vmatprep.subr.mxu0 0.0
        %1102 = vmatpush1.xpose.msra.mxu0 0.0
        %1103 = vmatprep.subr.mxu0 0.0
        %1104 = vmatpush1.xpose.msra.mxu0 0.0
        %1105 = vmatprep.subr.mxu0 0.0
        %1106 = vmatpush1.xpose.msra.mxu0 0.0
        %1107 = vmatprep.subr.mxu0 0.0
        %1108 = vmatpush1.xpose.msra.mxu0 0.0
        %1109 = vmatprep.subr.mxu0 0.0
        %1110 = vmatpush1.xpose.msra.mxu0 0.0
        %1111 = vmatprep.subr.mxu0 0.0
        %1112 = vmatpush1.xpose.msra.mxu0 0.0
        %1113 = vmatprep.subr.mxu0 0.0
        %1114 = vmatpush1.xpose.msra.mxu0 0.0
        %1115 = vmatprep.subr.mxu0 0.0
        %1116 = vmatpush1.xpose.msra.mxu0 0.0
        %1117 = vmatprep.subr.mxu0 0.0
        %1118 = vmatpush1.xpose.msra.mxu0 0.0
        %1119 = vmatprep.subr.mxu0 0.0
        %1120 = vmatpush1.xpose.msra.mxu0 0.0
        %1121 = vmatprep.subr.mxu0 0.0
        %1122 = vmatpush1.xpose.msra.mxu0 0.0
        %1123 = vmatprep.subr.mxu0 0.0
        %1124 = vmatpush1.xpose.msra.mxu0 0.0
        %1125 = vmatprep.subr.mxu0 0.0
        %1126 = vmatpush1.xpose.msra.mxu0 0.0
        %1127 = vmatprep.subr.mxu0 0.0
        %1128 = vmatpush1.xpose.msra.mxu0 0.0
        %1129 = vmatprep.subr.mxu0 0.0
        %1130 = vmatpush1.xpose.msra.mxu0 0.0
        %1131 = vmatprep.subr.mxu0 0.0
        %1132 = vmatpush1.xpose.msra.mxu0 %v1099
        %1133 = vmatprep.subr.mxu0 0.0
        %1134 = vmatpush2.xpose.msra.mxu0 0.0
        %1135 = vmatprep.subr.mxu0 0.0
        %1136 = vmatpush2.xpose.msra.mxu0 0.0
        %1137 = vmatprep.subr.mxu0 0.0
        %1138 = vmatpush2.xpose.msra.mxu0 0.0
        %1139 = vmatprep.subr.mxu0 0.0
        %1140 = vmatpush2.xpose.msra.mxu0 0.0
        %1141 = vmatprep.subr.mxu0 0.0
        %1142 = vmatpush2.xpose.msra.mxu0 0.0
        %1143 = vmatprep.subr.mxu0 0.0
        %1144 = vmatpush2.xpose.msra.mxu0 0.0
        %1145 = vmatprep.subr.mxu0 0.0
        %1146 = vmatpush2.xpose.msra.mxu0 0.0
        %1147 = vmatprep.subr.mxu0 0.0
        %1148 = vmatpush2.xpose.msra.mxu0 0.0
        %1149 = vmatprep.subr.mxu0 0.0
        %1150 = vmatpush2.xpose.msra.mxu0 0.0
        %1151 = vmatprep.subr.mxu0 0.0
        %1152 = vmatpush2.xpose.msra.mxu0 0.0
        %1153 = vmatprep.subr.mxu0 0.0
        %1154 = vmatpush2.xpose.msra.mxu0 0.0
        %1155 = vmatprep.subr.mxu0 0.0
        %1156 = vmatpush2.xpose.msra.mxu0 0.0
        %1157 = vmatprep.subr.mxu0 0.0
        %1158 = vmatpush2.xpose.msra.mxu0 0.0
        %1159 = vmatprep.subr.mxu0 0.0
        %1160 = vmatpush2.xpose.msra.mxu0 0.0
        %1161 = vmatprep.subr.mxu0 0.0
        %1162 = vmatpush2.xpose.msra.mxu0 0.0
        %1163 = vmatprep.subr.mxu0 0.0
        %1164 = vmatpush2.xpose.msra.mxu0 0.0
        %1165 = vmatprep.mubr.f32.mxu0 0.0
        %1166 = vmatmul.mubr.f32.gmra.mxu0 %v1097
        %v1167 = vpop.f32.mrf.mxu0
        %v1168 = vadd.f32 0.0, %v1167
        %v1169 = vpop.f32.mrf.mxu0
        %1170 = vdwg.mxu0
        %v1171 = vmul.f32 %v1168, 0.25
        %v1172 = vsel %vm1008, %v1171, -inf
        %1173 = vmax.xlane.f32.xlu0 %v1172
        %v1174 = vpop.xlane.xlu0 %1173
        %v1175 = vsub.f32 %v1171, %v1174
        %v1176 = vmul.f32 %v1175, 1.442695
        %v1177 = vpow.pop %v1176
        %v1178 = vsel %vm1008, %v1177, 0.0
        %1179 = vadd.xlane.f32.xlu0 %v1178
        %v1180 = vpop.xlane.xlu0 %1179
        %v1181 = vrcp.pop %v1180
        %v1182 = vmul.f32 %v1177, %v1181
        %1184 = vrot.lane.b32.xlu0 %v928, 112
        %v1185 = vpop.permute.xlu0 %1184
        %v1188 = vsel %vm1008, %v1182, 0
        %1190 = vmatprep.subr.mxu0 0.0
        %1191 = vmatpush1.msra.mxu0 0.0
        %1192 = vmatprep.subr.mxu0 0.0
        %1193 = vmatpush1.msra.mxu0 0.0
        %1194 = vmatprep.subr.mxu0 0.0
        %1195 = vmatpush1.msra.mxu0 0.0
        %1196 = vmatprep.subr.mxu0 0.0
        %1197 = vmatpush1.msra.mxu0 0.0
        %1198 = vmatprep.subr.mxu0 0.0
        %1199 = vmatpush1.msra.mxu0 0.0
        %1200 = vmatprep.subr.mxu0 0.0
        %1201 = vmatpush1.msra.mxu0 0.0
        %1202 = vmatprep.subr.mxu0 0.0
        %1203 = vmatpush1.msra.mxu0 0.0
        %1204 = vmatprep.subr.mxu0 0.0
        %1205 = vmatpush1.msra.mxu0 0.0
        %1206 = vmatprep.subr.mxu0 0.0
        %1207 = vmatpush1.msra.mxu0 0.0
        %1208 = vmatprep.subr.mxu0 0.0
        %1209 = vmatpush1.msra.mxu0 0.0
        %1210 = vmatprep.subr.mxu0 0.0
        %1211 = vmatpush1.msra.mxu0 0.0
        %1212 = vmatprep.subr.mxu0 0.0
        %1213 = vmatpush1.msra.mxu0 0.0
        %1214 = vmatprep.subr.mxu0 0.0
        %1215 = vmatpush1.msra.mxu0 0.0
        %1216 = vmatprep.subr.mxu0 0.0
        %1217 = vmatpush1.msra.mxu0 0.0
        %1218 = vmatprep.subr.mxu0 0.0
        %1219 = vmatpush1.msra.mxu0 0.0
        %1220 = vmatprep.subr.mxu0 0.0
        %1221 = vmatpush1.msra.mxu0 %v1185
        %1222 = vmatprep.subr.mxu0 0.0
        %1223 = vmatpush2.msra.mxu0 0.0
        %1224 = vmatprep.subr.mxu0 0.0
        %1225 = vmatpush2.msra.mxu0 0.0
        %1226 = vmatprep.subr.mxu0 0.0
        %1227 = vmatpush2.msra.mxu0 0.0
        %1228 = vmatprep.subr.mxu0 0.0
        %1229 = vmatpush2.msra.mxu0 0.0
        %1230 = vmatprep.subr.mxu0 0.0
        %1231 = vmatpush2.msra.mxu0 0.0
        %1232 = vmatprep.subr.mxu0 0.0
        %1233 = vmatpush2.msra.mxu0 0.0
        %1234 = vmatprep.subr.mxu0 0.0
        %1235 = vmatpush2.msra.mxu0 0.0
        %1236 = vmatprep.subr.mxu0 0.0
        %1237 = vmatpush2.msra.mxu0 0.0
        %1238 = vmatprep.subr.mxu0 0.0
        %1239 = vmatpush2.msra.mxu0 0.0
        %1240 = vmatprep.subr.mxu0 0.0
        %1241 = vmatpush2.msra.mxu0 0.0
        %1242 = vmatprep.subr.mxu0 0.0
        %1243 = vmatpush2.msra.mxu0 0.0
        %1244 = vmatprep.subr.mxu0 0.0
        %1245 = vmatpush2.msra.mxu0 0.0
        %1246 = vmatprep.subr.mxu0 0.0
        %1247 = vmatpush2.msra.mxu0 0.0
        %1248 = vmatprep.subr.mxu0 0.0
        %1249 = vmatpush2.msra.mxu0 0.0
        %1250 = vmatprep.subr.mxu0 0.0
        %1251 = vmatpush2.msra.mxu0 0.0
        %1252 = vmatprep.subr.mxu0 0.0
        %1253 = vmatpush2.msra.mxu0 0.0
        %1254 = vmatprep.mubr.f32.mxu0 0.0
        %1255 = vmatmul.mubr.f32.gmra.mxu0 %v1188
        %v1256 = vpop.f32.mrf.mxu0
        %v1257 = vadd.f32 0.0, %v1256
        %v1258 = vpop.f32.mrf.mxu0
        %1259 = vdwg.mxu0
        %1261 = vrot.lane.b32.xlu0 %v1257, 16
        %v1262 = vpop.permute.xlu0 %1261
        %v1264 = vsel %vm456, %v1090, %v1262
        %v1265 = vlaneseq
        %v1266 = vshrl.u32 %v1265, 7
        %v1267 = vsub.s32 0, %v1266
        %v1268 = vrot.slane %v704, %v1267
        %v1270 = vsel %vm709, %v1264, 0
        %1272 = vmatprep.subr.mxu0 0.0
        %1273 = vmatpush1.msra.mxu0 0.0
        %1274 = vmatprep.subr.mxu0 0.0
        %1275 = vmatpush1.msra.mxu0 0.0
        %1276 = vmatprep.subr.mxu0 0.0
        %1277 = vmatpush1.msra.mxu0 0.0
        %1278 = vmatprep.subr.mxu0 0.0
        %1279 = vmatpush1.msra.mxu0 0.0
        %1280 = vmatprep.subr.mxu0 0.0
        %1281 = vmatpush1.msra.mxu0 0.0
        %1282 = vmatprep.subr.mxu0 0.0
        %1283 = vmatpush1.msra.mxu0 0.0
        %1284 = vmatprep.subr.mxu0 0.0
        %1285 = vmatpush1.msra.mxu0 0.0
        %1286 = vmatprep.subr.mxu0 0.0
        %1287 = vmatpush1.msra.mxu0 0.0
        %1288 = vmatprep.subr.mxu0 0.0
        %1289 = vmatpush1.msra.mxu0 0.0
        %1290 = vmatprep.subr.mxu0 0.0
        %1291 = vmatpush1.msra.mxu0 0.0
        %1292 = vmatprep.subr.mxu0 0.0
        %1293 = vmatpush1.msra.mxu0 0.0
        %1294 = vmatprep.subr.mxu0 0.0
        %1295 = vmatpush1.msra.mxu0 0.0
        %1296 = vmatprep.subr.mxu0 0.0
        %1297 = vmatpush1.msra.mxu0 %v703
        %1298 = vmatprep.subr.mxu0 0.0
        %1299 = vmatpush1.msra.mxu0 %v702
        %1300 = vmatprep.subr.mxu0 0.0
        %1301 = vmatpush1.msra.mxu0 %v701
        %1302 = vmatprep.subr.mxu0 0.0
        %1303 = vmatpush1.msra.mxu0 %v700
        %1304 = vmatprep.subr.mxu0 0.0
        %1305 = vmatpush2.msra.mxu0 0.0
        %1306 = vmatprep.subr.mxu0 0.0
        %1307 = vmatpush2.msra.mxu0 0.0
        %1308 = vmatprep.subr.mxu0 0.0
        %1309 = vmatpush2.msra.mxu0 0.0
        %1310 = vmatprep.subr.mxu0 0.0
        %1311 = vmatpush2.msra.mxu0 0.0
        %1312 = vmatprep.subr.mxu0 0.0
        %1313 = vmatpush2.msra.mxu0 0.0
        %1314 = vmatprep.subr.mxu0 0.0
        %1315 = vmatpush2.msra.mxu0 0.0
        %1316 = vmatprep.subr.mxu0 0.0
        %1317 = vmatpush2.msra.mxu0 0.0
        %1318 = vmatprep.subr.mxu0 0.0
        %1319 = vmatpush2.msra.mxu0 0.0
        %1320 = vmatprep.subr.mxu0 0.0
        %1321 = vmatpush2.msra.mxu0 0.0
        %1322 = vmatprep.subr.mxu0 0.0
        %1323 = vmatpush2.msra.mxu0 0.0
        %1324 = vmatprep.subr.mxu0 0.0
        %1325 = vmatpush2.msra.mxu0 0.0
        %1326 = vmatprep.subr.mxu0 0.0
        %1327 = vmatpush2.msra.mxu0 0.0
        %1328 = vmatprep.subr.mxu0 0.0
        %1329 = vmatpush2.msra.mxu0 0.0
        %1330 = vmatprep.subr.mxu0 0.0
        %1331 = vmatpush2.msra.mxu0 0.0
        %1332 = vmatprep.subr.mxu0 0.0
        %1333 = vmatpush2.msra.mxu0 0.0
        %1334 = vmatprep.subr.mxu0 0.0
        %1335 = vmatpush2.msra.mxu0 0.0
        %1336 = vmatprep.mubr.f32.mxu0 0.0
        %1337 = vmatmul.mubr.f32.gmra.mxu0 %v1270
        %v1338 = vpop.f32.mrf.mxu0
        %v1339 = vadd.f32 %v1268, %v1338
        %v1340 = vpop.f32.mrf.mxu0
        %1341 = vdwg.mxu0
        %v1342 = vld [vmem:[#allocation2 + $0xf8] sm:$0xff]
        %v1343 = vld [vmem:[#allocation2 + $0x100] sm:$0xff]
        %v1344 = vld [vmem:[#allocation2 + $0x108] sm:$0xff]
        %v1345 = vld [vmem:[#allocation2 + $0x110] sm:$0xff]
        %v1346 = vld [vmem:[#allocation2 + $0x138] sm:$0x1]
        %v1347 = vlaneseq
        %v1348 = vshrl.u32 %v1347, 7
        %v1349 = vsub.s32 0, %v1348
        %v1350 = vrot.slane %v1346, %v1349
        %v1352 = vsel %vm709, %v1339, 0
        %1354 = vmatprep.subr.mxu0 0.0
        %1355 = vmatpush1.msra.mxu0 0.0
        %1356 = vmatprep.subr.mxu0 0.0
        %1357 = vmatpush1.msra.mxu0 0.0
        %1358 = vmatprep.subr.mxu0 0.0
        %1359 = vmatpush1.msra.mxu0 0.0
        %1360 = vmatprep.subr.mxu0 0.0
        %1361 = vmatpush1.msra.mxu0 0.0
        %1362 = vmatprep.subr.mxu0 0.0
        %1363 = vmatpush1.msra.mxu0 0.0
        %1364 = vmatprep.subr.mxu0 0.0
        %1365 = vmatpush1.msra.mxu0 0.0
        %1366 = vmatprep.subr.mxu0 0.0
        %1367 = vmatpush1.msra.mxu0 0.0
        %1368 = vmatprep.subr.mxu0 0.0
        %1369 = vmatpush1.msra.mxu0 0.0
        %1370 = vmatprep.subr.mxu0 0.0
        %1371 = vmatpush1.msra.mxu0 0.0
        %1372 = vmatprep.subr.mxu0 0.0
        %1373 = vmatpush1.msra.mxu0 0.0
        %1374 = vmatprep.subr.mxu0 0.0
        %1375 = vmatpush1.msra.mxu0 0.0
        %1376 = vmatprep.subr.mxu0 0.0
        %1377 = vmatpush1.msra.mxu0 0.0
        %1378 = vmatprep.subr.mxu0 0.0
        %1379 = vmatpush1.msra.mxu0 %v1345
        %1380 = vmatprep.subr.mxu0 0.0
        %1381 = vmatpush1.msra.mxu0 %v1344
        %1382 = vmatprep.subr.mxu0 0.0
        %1383 = vmatpush1.msra.mxu0 %v1343
        %1384 = vmatprep.subr.mxu0 0.0
        %1385 = vmatpush1.msra.mxu0 %v1342
        %1386 = vmatprep.subr.mxu0 0.0
        %1387 = vmatpush2.msra.mxu0 0.0
        %1388 = vmatprep.subr.mxu0 0.0
        %1389 = vmatpush2.msra.mxu0 0.0
        %1390 = vmatprep.subr.mxu0 0.0
        %1391 = vmatpush2.msra.mxu0 0.0
        %1392 = vmatprep.subr.mxu0 0.0
        %1393 = vmatpush2.msra.mxu0 0.0
        %1394 = vmatprep.subr.mxu0 0.0
        %1395 = vmatpush2.msra.mxu0 0.0
        %1396 = vmatprep.subr.mxu0 0.0
        %1397 = vmatpush2.msra.mxu0 0.0
        %1398 = vmatprep.subr.mxu0 0.0
        %1399 = vmatpush2.msra.mxu0 0.0
        %1400 = vmatprep.subr.mxu0 0.0
        %1401 = vmatpush2.msra.mxu0 0.0
        %1402 = vmatprep.subr.mxu0 0.0
        %1403 = vmatpush2.msra.mxu0 0.0
        %1404 = vmatprep.subr.mxu0 0.0
        %1405 = vmatpush2.msra.mxu0 0.0
        %1406 = vmatprep.subr.mxu0 0.0
        %1407 = vmatpush2.msra.mxu0 0.0
        %1408 = vmatprep.subr.mxu0 0.0
        %1409 = vmatpush2.msra.mxu0 0.0
        %1410 = vmatprep.subr.mxu0 0.0
        %1411 = vmatpush2.msra.mxu0 0.0
        %1412 = vmatprep.subr.mxu0 0.0
        %1413 = vmatpush2.msra.mxu0 0.0
        %1414 = vmatprep.subr.mxu0 0.0
        %1415 = vmatpush2.msra.mxu0 0.0
        %1416 = vmatprep.subr.mxu0 0.0
        %1417 = vmatpush2.msra.mxu0 0.0
        %1418 = vmatprep.mubr.f32.mxu0 0.0
        %1419 = vmatmul.mubr.f32.gmra.mxu0 %v1352
        %v1420 = vpop.f32.mrf.mxu0
        %v1421 = vadd.f32 %v1350, %v1420
        %v1422 = vpop.f32.mrf.mxu0
        %1423 = vdwg.mxu0
        %v1424 = vld [vmem:[#allocation2 + $0x118] sm:$0xff]
        %v1425 = vld [vmem:[#allocation2 + $0x120] sm:$0xff]
        %v1426 = vld [vmem:[#allocation2 + $0x128] sm:$0xff]
        %v1427 = vld [vmem:[#allocation2 + $0x130] sm:$0xff]
        %v1428 = vxor.u32 %v1421, 2147483648
        %v1429 = vmul.f32 %v1428, 1.442695
        %v1430 = vpow.pop %v1429
        %v1431 = vadd.f32 %v1430, 1.0
        %v1432 = vrcp.pop %v1431
        %v1433 = vmul.f32 1.0, %v1432
        %v1434 = vtanh.pop %v1421
        %1436 = vrot.lane.b32.xlu0 %v1434, 64
        %v1437 = vpop.permute.xlu0 %1436
        %v1439 = vmul.f32 %v1433, %v1437
        %v1440 = vtanh.pop %v1439
        %1442 = vrot.lane.b32.xlu0 %v1440, 96
        %v1443 = vpop.permute.xlu0 %1442
        %v1445 = vmul.f32 %v1433, %v1443
        %1447 = vrot.lane.b32.xlu0 %v1445, 32
        %v1448 = vpop.permute.xlu0 %1447
        %v1449 = vsel %vm709, %v1448, 0
        %1451 = vmatprep.subr.mxu0 0.0
        %1452 = vmatpush1.msra.mxu0 0.0
        %1453 = vmatprep.subr.mxu0 0.0
        %1454 = vmatpush1.msra.mxu0 0.0
        %1455 = vmatprep.subr.mxu0 0.0
        %1456 = vmatpush1.msra.mxu0 0.0
        %1457 = vmatprep.subr.mxu0 0.0
        %1458 = vmatpush1.msra.mxu0 0.0
        %1459 = vmatprep.subr.mxu0 0.0
        %1460 = vmatpush1.msra.mxu0 0.0
        %1461 = vmatprep.subr.mxu0 0.0
        %1462 = vmatpush1.msra.mxu0 0.0
        %1463 = vmatprep.subr.mxu0 0.0
        %1464 = vmatpush1.msra.mxu0 0.0
        %1465 = vmatprep.subr.mxu0 0.0
        %1466 = vmatpush1.msra.mxu0 0.0
        %1467 = vmatprep.subr.mxu0 0.0
        %1468 = vmatpush1.msra.mxu0 0.0
        %1469 = vmatprep.subr.mxu0 0.0
        %1470 = vmatpush1.msra.mxu0 0.0
        %1471 = vmatprep.subr.mxu0 0.0
        %1472 = vmatpush1.msra.mxu0 0.0
        %1473 = vmatprep.subr.mxu0 0.0
        %1474 = vmatpush1.msra.mxu0 0.0
        %1475 = vmatprep.subr.mxu0 0.0
        %1476 = vmatpush1.msra.mxu0 %v1427
        %1477 = vmatprep.subr.mxu0 0.0
        %1478 = vmatpush1.msra.mxu0 %v1426
        %1479 = vmatprep.subr.mxu0 0.0
        %1480 = vmatpush1.msra.mxu0 %v1425
        %1481 = vmatprep.subr.mxu0 0.0
        %1482 = vmatpush1.msra.mxu0 %v1424
        %1483 = vmatprep.subr.mxu0 0.0
        %1484 = vmatpush2.msra.mxu0 0.0
        %1485 = vmatprep.subr.mxu0 0.0
        %1486 = vmatpush2.msra.mxu0 0.0
        %1487 = vmatprep.subr.mxu0 0.0
        %1488 = vmatpush2.msra.mxu0 0.0
        %1489 = vmatprep.subr.mxu0 0.0
        %1490 = vmatpush2.msra.mxu0 0.0
        %1491 = vmatprep.subr.mxu0 0.0
        %1492 = vmatpush2.msra.mxu0 0.0
        %1493 = vmatprep.subr.mxu0 0.0
        %1494 = vmatpush2.msra.mxu0 0.0
        %1495 = vmatprep.subr.mxu0 0.0
        %1496 = vmatpush2.msra.mxu0 0.0
        %1497 = vmatprep.subr.mxu0 0.0
        %1498 = vmatpush2.msra.mxu0 0.0
        %1499 = vmatprep.subr.mxu0 0.0
        %1500 = vmatpush2.msra.mxu0 0.0
        %1501 = vmatprep.subr.mxu0 0.0
        %1502 = vmatpush2.msra.mxu0 0.0
        %1503 = vmatprep.subr.mxu0 0.0
        %1504 = vmatpush2.msra.mxu0 0.0
        %1505 = vmatprep.subr.mxu0 0.0
        %1506 = vmatpush2.msra.mxu0 0.0
        %1507 = vmatprep.subr.mxu0 0.0
        %1508 = vmatpush2.msra.mxu0 0.0
        %1509 = vmatprep.subr.mxu0 0.0
        %1510 = vmatpush2.msra.mxu0 0.0
        %1511 = vmatprep.subr.mxu0 0.0
        %1512 = vmatpush2.msra.mxu0 0.0
        %1513 = vmatprep.subr.mxu0 0.0
        %1514 = vmatpush2.msra.mxu0 0.0
        %1515 = vmatprep.mubr.f32.mxu0 0.0
        %1516 = vmatmul.mubr.f32.gmra.mxu0 %v1449
        %v1517 = vpop.f32.mrf.mxu0
        %v1518 = vadd.f32 0.0, %v1517
        %v1519 = vpop.f32.mrf.mxu0
        %1520 = vdwg.mxu0
        %v1522 = vrot.slane %v1518, 7
        %v1524 = vadd.f32 %v1421, %v1522
        %v1525 = vxor.u32 %v1524, 2147483648
        %v1526 = vmul.f32 %v1525, 1.442695
        %v1527 = vpow.pop %v1526
        %v1528 = vadd.f32 %v1527, 1.0
        %v1529 = vrcp.pop %v1528
        %v1530 = vmul.f32 1.0, %v1529
        %v1531 = vtanh.pop %v1524
        %v1533 = vrot.slane %v1439, 7
        %1534 = vrot.lane.b32.xlu0 %v1533, 32
        %v1535 = vpop.permute.xlu0 %1534
        %v1537 = vmul.f32 %v1530, %v1535
        %1539 = vrot.lane.b32.xlu0 %v1531, 64
        %v1540 = vpop.permute.xlu0 %1539
        %v1542 = vmul.f32 %v1530, %v1540
        %1544 = vrot.lane.b32.xlu0 %v1542, 32
        %v1545 = vpop.permute.xlu0 %1544
        %v1547 = vadd.f32 %v1537, %v1545
        %v1548 = vtanh.pop %v1547
        %1550 = vrot.lane.b32.xlu0 %v1548, 64
        %v1551 = vpop.permute.xlu0 %1550
        %v1553 = vmul.f32 %v1530, %v1551
        %v1555 = vrot.slane %v1553, 1
        %1556 = vrot.lane.b32.xlu0 %v1555, 32
        %v1557 = vpop.permute.xlu0 %1556
        %v1558 = vsel %vm709, %v1557, 0
        %1560 = vmatprep.subr.mxu0 0.0
        %1561 = vmatpush1.msra.mxu0 0.0
        %1562 = vmatprep.subr.mxu0 0.0
        %1563 = vmatpush1.msra.mxu0 0.0
        %1564 = vmatprep.subr.mxu0 0.0
        %1565 = vmatpush1.msra.mxu0 0.0
        %1566 = vmatprep.subr.mxu0 0.0
        %1567 = vmatpush1.msra.mxu0 0.0
        %1568 = vmatprep.subr.mxu0 0.0
        %1569 = vmatpush1.msra.mxu0 0.0
        %1570 = vmatprep.subr.mxu0 0.0
        %1571 = vmatpush1.msra.mxu0 0.0
        %1572 = vmatprep.subr.mxu0 0.0
        %1573 = vmatpush1.msra.mxu0 0.0
        %1574 = vmatprep.subr.mxu0 0.0
        %1575 = vmatpush1.msra.mxu0 0.0
        %1576 = vmatprep.subr.mxu0 0.0
        %1577 = vmatpush1.msra.mxu0 0.0
        %1578 = vmatprep.subr.mxu0 0.0
        %1579 = vmatpush1.msra.mxu0 0.0
        %1580 = vmatprep.subr.mxu0 0.0
        %1581 = vmatpush1.msra.mxu0 0.0
        %1582 = vmatprep.subr.mxu0 0.0
        %1583 = vmatpush1.msra.mxu0 0.0
        %1584 = vmatprep.subr.mxu0 0.0
        %1585 = vmatpush1.msra.mxu0 %v1427
        %1586 = vmatprep.subr.mxu0 0.0
        %1587 = vmatpush1.msra.mxu0 %v1426
        %1588 = vmatprep.subr.mxu0 0.0
        %1589 = vmatpush1.msra.mxu0 %v1425
        %1590 = vmatprep.subr.mxu0 0.0
        %1591 = vmatpush1.msra.mxu0 %v1424
        %1592 = vmatprep.subr.mxu0 0.0
        %1593 = vmatpush2.msra.mxu0 0.0
        %1594 = vmatprep.subr.mxu0 0.0
        %1595 = vmatpush2.msra.mxu0 0.0
        %1596 = vmatprep.subr.mxu0 0.0
        %1597 = vmatpush2.msra.mxu0 0.0
        %1598 = vmatprep.subr.mxu0 0.0
        %1599 = vmatpush2.msra.mxu0 0.0
        %1600 = vmatprep.subr.mxu0 0.0
        %1601 = vmatpush2.msra.mxu0 0.0
        %1602 = vmatprep.subr.mxu0 0.0
        %1603 = vmatpush2.msra.mxu0 0.0
        %1604 = vmatprep.subr.mxu0 0.0
        %1605 = vmatpush2.msra.mxu0 0.0
        %1606 = vmatprep.subr.mxu0 0.0
        %1607 = vmatpush2.msra.mxu0 0.0
        %1608 = vmatprep.subr.mxu0 0.0
        %1609 = vmatpush2.msra.mxu0 0.0
        %1610 = vmatprep.subr.mxu0 0.0
        %1611 = vmatpush2.msra.mxu0 0.0
        %1612 = vmatprep.subr.mxu0 0.0
        %1613 = vmatpush2.msra.mxu0 0.0
        %1614 = vmatprep.subr.mxu0 0.0
        %1615 = vmatpush2.msra.mxu0 0.0
        %1616 = vmatprep.subr.mxu0 0.0
        %1617 = vmatpush2.msra.mxu0 0.0
        %1618 = vmatprep.subr.mxu0 0.0
        %1619 = vmatpush2.msra.mxu0 0.0
        %1620 = vmatprep.subr.mxu0 0.0
        %1621 = vmatpush2.msra.mxu0 0.0
        %1622 = vmatprep.subr.mxu0 0.0
        %1623 = vmatpush2.msra.mxu0 0.0
        %1624 = vmatprep.mubr.f32.mxu0 0.0
        %1625 = vmatmul.mubr.f32.gmra.mxu0 %v1558
        %v1626 = vpop.f32.mrf.mxu0
        %v1627 = vadd.f32 0.0, %v1626
        %v1628 = vpop.f32.mrf.mxu0
        %1629 = vdwg.mxu0
        %v1631 = vrot.slane %v1627, 6
        %v1633 = vadd.f32 %v1421, %v1631
        %v1634 = vxor.u32 %v1633, 2147483648
        %v1635 = vmul.f32 %v1634, 1.442695
        %v1636 = vpow.pop %v1635
        %v1637 = vadd.f32 %v1636, 1.0
        %v1638 = vrcp.pop %v1637
        %v1639 = vmul.f32 1.0, %v1638
        %v1640 = vtanh.pop %v1633
        %v1642 = vrot.slane %v1547, 7
        %v1644 = vmul.f32 %v1639, %v1642
        %1646 = vrot.lane.b32.xlu0 %v1640, 64
        %v1647 = vpop.permute.xlu0 %1646
        %v1649 = vmul.f32 %v1639, %v1647
        %1651 = vrot.lane.b32.xlu0 %v1649, 32
        %v1652 = vpop.permute.xlu0 %1651
        %v1654 = vadd.f32 %v1644, %v1652
        %v1655 = vtanh.pop %v1654
        %1657 = vrot.lane.b32.xlu0 %v1655, 64
        %v1658 = vpop.permute.xlu0 %1657
        %v1660 = vmul.f32 %v1639, %v1658
        %v1662 = vrot.slane %v1660, 2
        %1663 = vrot.lane.b32.xlu0 %v1662, 32
        %v1664 = vpop.permute.xlu0 %1663
        %v1665 = vsel %vm709, %v1664, 0
        %1667 = vmatprep.subr.mxu0 0.0
        %1668 = vmatpush1.msra.mxu0 0.0
        %1669 = vmatprep.subr.mxu0 0.0
        %1670 = vmatpush1.msra.mxu0 0.0
        %1671 = vmatprep.subr.mxu0 0.0
        %1672 = vmatpush1.msra.mxu0 0.0
        %1673 = vmatprep.subr.mxu0 0.0
        %1674 = vmatpush1.msra.mxu0 0.0
        %1675 = vmatprep.subr.mxu0 0.0
        %1676 = vmatpush1.msra.mxu0 0.0
        %1677 = vmatprep.subr.mxu0 0.0
        %1678 = vmatpush1.msra.mxu0 0.0
        %1679 = vmatprep.subr.mxu0 0.0
        %1680 = vmatpush1.msra.mxu0 0.0
        %1681 = vmatprep.subr.mxu0 0.0
        %1682 = vmatpush1.msra.mxu0 0.0
        %1683 = vmatprep.subr.mxu0 0.0
        %1684 = vmatpush1.msra.mxu0 0.0
        %1685 = vmatprep.subr.mxu0 0.0
        %1686 = vmatpush1.msra.mxu0 0.0
        %1687 = vmatprep.subr.mxu0 0.0
        %1688 = vmatpush1.msra.mxu0 0.0
        %1689 = vmatprep.subr.mxu0 0.0
        %1690 = vmatpush1.msra.mxu0 0.0
        %1691 = vmatprep.subr.mxu0 0.0
        %1692 = vmatpush1.msra.mxu0 %v1427
        %1693 = vmatprep.subr.mxu0 0.0
        %1694 = vmatpush1.msra.mxu0 %v1426
        %1695 = vmatprep.subr.mxu0 0.0
        %1696 = vmatpush1.msra.mxu0 %v1425
        %1697 = vmatprep.subr.mxu0 0.0
        %1698 = vmatpush1.msra.mxu0 %v1424
        %1699 = vmatprep.subr.mxu0 0.0
        %1700 = vmatpush2.msra.mxu0 0.0
        %1701 = vmatprep.subr.mxu0 0.0
        %1702 = vmatpush2.msra.mxu0 0.0
        %1703 = vmatprep.subr.mxu0 0.0
        %1704 = vmatpush2.msra.mxu0 0.0
        %1705 = vmatprep.subr.mxu0 0.0
        %1706 = vmatpush2.msra.mxu0 0.0
        %1707 = vmatprep.subr.mxu0 0.0
        %1708 = vmatpush2.msra.mxu0 0.0
        %1709 = vmatprep.subr.mxu0 0.0
        %1710 = vmatpush2.msra.mxu0 0.0
        %1711 = vmatprep.subr.mxu0 0.0
        %1712 = vmatpush2.msra.mxu0 0.0
        %1713 = vmatprep.subr.mxu0 0.0
        %1714 = vmatpush2.msra.mxu0 0.0
        %1715 = vmatprep.subr.mxu0 0.0
        %1716 = vmatpush2.msra.mxu0 0.0
        %1717 = vmatprep.subr.mxu0 0.0
        %1718 = vmatpush2.msra.mxu0 0.0
        %1719 = vmatprep.subr.mxu0 0.0
        %1720 = vmatpush2.msra.mxu0 0.0
        %1721 = vmatprep.subr.mxu0 0.0
        %1722 = vmatpush2.msra.mxu0 0.0
        %1723 = vmatprep.subr.mxu0 0.0
        %1724 = vmatpush2.msra.mxu0 0.0
        %1725 = vmatprep.subr.mxu0 0.0
        %1726 = vmatpush2.msra.mxu0 0.0
        %1727 = vmatprep.subr.mxu0 0.0
        %1728 = vmatpush2.msra.mxu0 0.0
        %1729 = vmatprep.subr.mxu0 0.0
        %1730 = vmatpush2.msra.mxu0 0.0
        %1731 = vmatprep.mubr.f32.mxu0 0.0
        %1732 = vmatmul.mubr.f32.gmra.mxu0 %v1665
        %v1733 = vpop.f32.mrf.mxu0
        %v1734 = vadd.f32 0.0, %v1733
        %v1735 = vpop.f32.mrf.mxu0
        %1736 = vdwg.mxu0
        %v1738 = vrot.slane %v1734, 5
        %v1740 = vadd.f32 %v1421, %v1738
        %v1741 = vxor.u32 %v1740, 2147483648
        %v1742 = vmul.f32 %v1741, 1.442695
        %v1743 = vpow.pop %v1742
        %v1744 = vadd.f32 %v1743, 1.0
        %v1745 = vrcp.pop %v1744
        %v1746 = vmul.f32 1.0, %v1745
        %v1747 = vtanh.pop %v1740
        %v1749 = vrot.slane %v1654, 7
        %v1751 = vmul.f32 %v1746, %v1749
        %1753 = vrot.lane.b32.xlu0 %v1747, 64
        %v1754 = vpop.permute.xlu0 %1753
        %v1756 = vmul.f32 %v1746, %v1754
        %1758 = vrot.lane.b32.xlu0 %v1756, 32
        %v1759 = vpop.permute.xlu0 %1758
        %v1761 = vadd.f32 %v1751, %v1759
        %v1762 = vtanh.pop %v1761
        %1764 = vrot.lane.b32.xlu0 %v1762, 64
        %v1765 = vpop.permute.xlu0 %1764
        %v1767 = vmul.f32 %v1746, %v1765
        %v1769 = vrot.slane %v1767, 3
        %1770 = vrot.lane.b32.xlu0 %v1769, 32
        %v1771 = vpop.permute.xlu0 %1770
        %v1772 = vsel %vm709, %v1771, 0
        %1774 = vmatprep.subr.mxu0 0.0
        %1775 = vmatpush1.msra.mxu0 0.0
        %1776 = vmatprep.subr.mxu0 0.0
        %1777 = vmatpush1.msra.mxu0 0.0
        %1778 = vmatprep.subr.mxu0 0.0
        %1779 = vmatpush1.msra.mxu0 0.0
        %1780 = vmatprep.subr.mxu0 0.0
        %1781 = vmatpush1.msra.mxu0 0.0
        %1782 = vmatprep.subr.mxu0 0.0
        %1783 = vmatpush1.msra.mxu0 0.0
        %1784 = vmatprep.subr.mxu0 0.0
        %1785 = vmatpush1.msra.mxu0 0.0
        %1786 = vmatprep.subr.mxu0 0.0
        %1787 = vmatpush1.msra.mxu0 0.0
        %1788 = vmatprep.subr.mxu0 0.0
        %1789 = vmatpush1.msra.mxu0 0.0
        %1790 = vmatprep.subr.mxu0 0.0
        %1791 = vmatpush1.msra.mxu0 0.0
        %1792 = vmatprep.subr.mxu0 0.0
        %1793 = vmatpush1.msra.mxu0 0.0
        %1794 = vmatprep.subr.mxu0 0.0
        %1795 = vmatpush1.msra.mxu0 0.0
        %1796 = vmatprep.subr.mxu0 0.0
        %1797 = vmatpush1.msra.mxu0 0.0
        %1798 = vmatprep.subr.mxu0 0.0
        %1799 = vmatpush1.msra.mxu0 %v1427
        %1800 = vmatprep.subr.mxu0 0.0
        %1801 = vmatpush1.msra.mxu0 %v1426
        %1802 = vmatprep.subr.mxu0 0.0
        %1803 = vmatpush1.msra.mxu0 %v1425
        %1804 = vmatprep.subr.mxu0 0.0
        %1805 = vmatpush1.msra.mxu0 %v1424
        %1806 = vmatprep.subr.mxu0 0.0
        %1807 = vmatpush2.msra.mxu0 0.0
        %1808 = vmatprep.subr.mxu0 0.0
        %1809 = vmatpush2.msra.mxu0 0.0
        %1810 = vmatprep.subr.mxu0 0.0
        %1811 = vmatpush2.msra.mxu0 0.0
        %1812 = vmatprep.subr.mxu0 0.0
        %1813 = vmatpush2.msra.mxu0 0.0
        %1814 = vmatprep.subr.mxu0 0.0
        %1815 = vmatpush2.msra.mxu0 0.0
        %1816 = vmatprep.subr.mxu0 0.0
        %1817 = vmatpush2.msra.mxu0 0.0
        %1818 = vmatprep.subr.mxu0 0.0
        %1819 = vmatpush2.msra.mxu0 0.0
        %1820 = vmatprep.subr.mxu0 0.0
        %1821 = vmatpush2.msra.mxu0 0.0
        %1822 = vmatprep.subr.mxu0 0.0
        %1823 = vmatpush2.msra.mxu0 0.0
        %1824 = vmatprep.subr.mxu0 0.0
        %1825 = vmatpush2.msra.mxu0 0.0
        %1826 = vmatprep.subr.mxu0 0.0
        %1827 = vmatpush2.msra.mxu0 0.0
        %1828 = vmatprep.subr.mxu0 0.0
        %1829 = vmatpush2.msra.mxu0 0.0
        %1830 = vmatprep.subr.mxu0 0.0
        %1831 = vmatpush2.msra.mxu0 0.0
        %1832 = vmatprep.subr.mxu0 0.0
        %1833 = vmatpush2.msra.mxu0 0.0
        %1834 = vmatprep.subr.mxu0 0.0
        %1835 = vmatpush2.msra.mxu0 0.0
        %1836 = vmatprep.subr.mxu0 0.0
        %1837 = vmatpush2.msra.mxu0 0.0
        %1838 = vmatprep.mubr.f32.mxu0 0.0
        %1839 = vmatmul.mubr.f32.gmra.mxu0 %v1772
        %v1840 = vpop.f32.mrf.mxu0
        %v1841 = vadd.f32 0.0, %v1840
        %v1842 = vpop.f32.mrf.mxu0
        %1843 = vdwg.mxu0
        %v1845 = vrot.slane %v1841, 4
        %v1847 = vadd.f32 %v1421, %v1845
        %v1848 = vxor.u32 %v1847, 2147483648
        %v1849 = vmul.f32 %v1848, 1.442695
        %v1850 = vpow.pop %v1849
        %v1851 = vadd.f32 %v1850, 1.0
        %v1852 = vrcp.pop %v1851
        %v1853 = vmul.f32 1.0, %v1852
        %v1854 = vtanh.pop %v1847
        %v1856 = vrot.slane %v1761, 7
        %v1858 = vmul.f32 %v1853, %v1856
        %1860 = vrot.lane.b32.xlu0 %v1854, 64
        %v1861 = vpop.permute.xlu0 %1860
        %v1863 = vmul.f32 %v1853, %v1861
        %1865 = vrot.lane.b32.xlu0 %v1863, 32
        %v1866 = vpop.permute.xlu0 %1865
        %v1868 = vadd.f32 %v1858, %v1866
        %v1869 = vtanh.pop %v1868
        %1871 = vrot.lane.b32.xlu0 %v1869, 64
        %v1872 = vpop.permute.xlu0 %1871
        %v1874 = vmul.f32 %v1853, %v1872
        %v1876 = vrot.slane %v1874, 4
        %1877 = vrot.lane.b32.xlu0 %v1876, 32
        %v1878 = vpop.permute.xlu0 %1877
        %v1879 = vsel %vm709, %v1878, 0
        %1881 = vmatprep.subr.mxu0 0.0
        %1882 = vmatpush1.msra.mxu0 0.0
        %1883 = vmatprep.subr.mxu0 0.0
        %1884 = vmatpush1.msra.mxu0 0.0
        %1885 = vmatprep.subr.mxu0 0.0
        %1886 = vmatpush1.msra.mxu0 0.0
        %1887 = vmatprep.subr.mxu0 0.0
        %1888 = vmatpush1.msra.mxu0 0.0
        %1889 = vmatprep.subr.mxu0 0.0
        %1890 = vmatpush1.msra.mxu0 0.0
        %1891 = vmatprep.subr.mxu0 0.0
        %1892 = vmatpush1.msra.mxu0 0.0
        %1893 = vmatprep.subr.mxu0 0.0
        %1894 = vmatpush1.msra.mxu0 0.0
        %1895 = vmatprep.subr.mxu0 0.0
        %1896 = vmatpush1.msra.mxu0 0.0
        %1897 = vmatprep.subr.mxu0 0.0
        %1898 = vmatpush1.msra.mxu0 0.0
        %1899 = vmatprep.subr.mxu0 0.0
        %1900 = vmatpush1.msra.mxu0 0.0
        %1901 = vmatprep.subr.mxu0 0.0
        %1902 = vmatpush1.msra.mxu0 0.0
        %1903 = vmatprep.subr.mxu0 0.0
        %1904 = vmatpush1.msra.mxu0 0.0
        %1905 = vmatprep.subr.mxu0 0.0
        %1906 = vmatpush1.msra.mxu0 %v1427
        %1907 = vmatprep.subr.mxu0 0.0
        %1908 = vmatpush1.msra.mxu0 %v1426
        %1909 = vmatprep.subr.mxu0 0.0
        %1910 = vmatpush1.msra.mxu0 %v1425
        %1911 = vmatprep.subr.mxu0 0.0
        %1912 = vmatpush1.msra.mxu0 %v1424
        %1913 = vmatprep.subr.mxu0 0.0
        %1914 = vmatpush2.msra.mxu0 0.0
        %1915 = vmatprep.subr.mxu0 0.0
        %1916 = vmatpush2.msra.mxu0 0.0
        %1917 = vmatprep.subr.mxu0 0.0
        %1918 = vmatpush2.msra.mxu0 0.0
        %1919 = vmatprep.subr.mxu0 0.0
        %1920 = vmatpush2.msra.mxu0 0.0
        %1921 = vmatprep.subr.mxu0 0.0
        %1922 = vmatpush2.msra.mxu0 0.0
        %1923 = vmatprep.subr.mxu0 0.0
        %1924 = vmatpush2.msra.mxu0 0.0
        %1925 = vmatprep.subr.mxu0 0.0
        %1926 = vmatpush2.msra.mxu0 0.0
        %1927 = vmatprep.subr.mxu0 0.0
        %1928 = vmatpush2.msra.mxu0 0.0
        %1929 = vmatprep.subr.mxu0 0.0
        %1930 = vmatpush2.msra.mxu0 0.0
        %1931 = vmatprep.subr.mxu0 0.0
        %1932 = vmatpush2.msra.mxu0 0.0
        %1933 = vmatprep.subr.mxu0 0.0
        %1934 = vmatpush2.msra.mxu0 0.0
        %1935 = vmatprep.subr.mxu0 0.0
        %1936 = vmatpush2.msra.mxu0 0.0
        %1937 = vmatprep.subr.mxu0 0.0
        %1938 = vmatpush2.msra.mxu0 0.0
        %1939 = vmatprep.subr.mxu0 0.0
        %1940 = vmatpush2.msra.mxu0 0.0
        %1941 = vmatprep.subr.mxu0 0.0
        %1942 = vmatpush2.msra.mxu0 0.0
        %1943 = vmatprep.subr.mxu0 0.0
        %1944 = vmatpush2.msra.mxu0 0.0
        %1945 = vmatprep.mubr.f32.mxu0 0.0
        %1946 = vmatmul.mubr.f32.gmra.mxu0 %v1879
        %v1947 = vpop.f32.mrf.mxu0
        %v1948 = vadd.f32 0.0, %v1947
        %v1949 = vpop.f32.mrf.mxu0
        %1950 = vdwg.mxu0
        %v1952 = vrot.slane %v1948, 3
        %v1954 = vadd.f32 %v1421, %v1952
        %v1955 = vxor.u32 %v1954, 2147483648
        %v1956 = vmul.f32 %v1955, 1.442695
        %v1957 = vpow.pop %v1956
        %v1958 = vadd.f32 %v1957, 1.0
        %v1959 = vrcp.pop %v1958
        %v1960 = vmul.f32 1.0, %v1959
        %v1961 = vtanh.pop %v1954
        %v1963 = vrot.slane %v1868, 7
        %v1965 = vmul.f32 %v1960, %v1963
        %1967 = vrot.lane.b32.xlu0 %v1961, 64
        %v1968 = vpop.permute.xlu0 %1967
        %v1970 = vmul.f32 %v1960, %v1968
        %1972 = vrot.lane.b32.xlu0 %v1970, 32
        %v1973 = vpop.permute.xlu0 %1972
        %v1975 = vadd.f32 %v1965, %v1973
        %v1976 = vtanh.pop %v1975
        %1978 = vrot.lane.b32.xlu0 %v1976, 64
        %v1979 = vpop.permute.xlu0 %1978
        %v1981 = vmul.f32 %v1960, %v1979
        %v1983 = vrot.slane %v1981, 5
        %1984 = vrot.lane.b32.xlu0 %v1983, 32
        %v1985 = vpop.permute.xlu0 %1984
        %v1986 = vsel %vm709, %v1985, 0
        %1988 = vmatprep.subr.mxu0 0.0
        %1989 = vmatpush1.msra.mxu0 0.0
        %1990 = vmatprep.subr.mxu0 0.0
        %1991 = vmatpush1.msra.mxu0 0.0
        %1992 = vmatprep.subr.mxu0 0.0
        %1993 = vmatpush1.msra.mxu0 0.0
        %1994 = vmatprep.subr.mxu0 0.0
        %1995 = vmatpush1.msra.mxu0 0.0
        %1996 = vmatprep.subr.mxu0 0.0
        %1997 = vmatpush1.msra.mxu0 0.0
        %1998 = vmatprep.subr.mxu0 0.0
        %1999 = vmatpush1.msra.mxu0 0.0
        %2000 = vmatprep.subr.mxu0 0.0
        %2001 = vmatpush1.msra.mxu0 0.0
        %2002 = vmatprep.subr.mxu0 0.0
        %2003 = vmatpush1.msra.mxu0 0.0
        %2004 = vmatprep.subr.mxu0 0.0
        %2005 = vmatpush1.msra.mxu0 0.0
        %2006 = vmatprep.subr.mxu0 0.0
        %2007 = vmatpush1.msra.mxu0 0.0
        %2008 = vmatprep.subr.mxu0 0.0
        %2009 = vmatpush1.msra.mxu0 0.0
        %2010 = vmatprep.subr.mxu0 0.0
        %2011 = vmatpush1.msra.mxu0 0.0
        %2012 = vmatprep.subr.mxu0 0.0
        %2013 = vmatpush1.msra.mxu0 %v1427
        %2014 = vmatprep.subr.mxu0 0.0
        %2015 = vmatpush1.msra.mxu0 %v1426
        %2016 = vmatprep.subr.mxu0 0.0
        %2017 = vmatpush1.msra.mxu0 %v1425
        %2018 = vmatprep.subr.mxu0 0.0
        %2019 = vmatpush1.msra.mxu0 %v1424
        %2020 = vmatprep.subr.mxu0 0.0
        %2021 = vmatpush2.msra.mxu0 0.0
        %2022 = vmatprep.subr.mxu0 0.0
        %2023 = vmatpush2.msra.mxu0 0.0
        %2024 = vmatprep.subr.mxu0 0.0
        %2025 = vmatpush2.msra.mxu0 0.0
        %2026 = vmatprep.subr.mxu0 0.0
        %2027 = vmatpush2.msra.mxu0 0.0
        %2028 = vmatprep.subr.mxu0 0.0
        %2029 = vmatpush2.msra.mxu0 0.0
        %2030 = vmatprep.subr.mxu0 0.0
        %2031 = vmatpush2.msra.mxu0 0.0
        %2032 = vmatprep.subr.mxu0 0.0
        %2033 = vmatpush2.msra.mxu0 0.0
        %2034 = vmatprep.subr.mxu0 0.0
        %2035 = vmatpush2.msra.mxu0 0.0
        %2036 = vmatprep.subr.mxu0 0.0
        %2037 = vmatpush2.msra.mxu0 0.0
        %2038 = vmatprep.subr.mxu0 0.0
        %2039 = vmatpush2.msra.mxu0 0.0
        %2040 = vmatprep.subr.mxu0 0.0
        %2041 = vmatpush2.msra.mxu0 0.0
        %2042 = vmatprep.subr.mxu0 0.0
        %2043 = vmatpush2.msra.mxu0 0.0
        %2044 = vmatprep.subr.mxu0 0.0
        %2045 = vmatpush2.msra.mxu0 0.0
        %2046 = vmatprep.subr.mxu0 0.0
        %2047 = vmatpush2.msra.mxu0 0.0
        %2048 = vmatprep.subr.mxu0 0.0
        %2049 = vmatpush2.msra.mxu0 0.0
        %2050 = vmatprep.subr.mxu0 0.0
        %2051 = vmatpush2.msra.mxu0 0.0
        %2052 = vmatprep.mubr.f32.mxu0 0.0
        %2053 = vmatmul.mubr.f32.gmra.mxu0 %v1986
        %v2054 = vpop.f32.mrf.mxu0
        %v2055 = vadd.f32 0.0, %v2054
        %v2056 = vpop.f32.mrf.mxu0
        %2057 = vdwg.mxu0
        %v2059 = vrot.slane %v2055, 2
        %v2061 = vadd.f32 %v1421, %v2059
        %v2062 = vxor.u32 %v2061, 2147483648
        %v2063 = vmul.f32 %v2062, 1.442695
        %v2064 = vpow.pop %v2063
        %v2065 = vadd.f32 %v2064, 1.0
        %v2066 = vrcp.pop %v2065
        %v2067 = vmul.f32 1.0, %v2066
        %v2068 = vtanh.pop %v2061
        %v2070 = vrot.slane %v1975, 7
        %v2072 = vmul.f32 %v2067, %v2070
        %2074 = vrot.lane.b32.xlu0 %v2068, 64
        %v2075 = vpop.permute.xlu0 %2074
        %v2077 = vmul.f32 %v2067, %v2075
        %2079 = vrot.lane.b32.xlu0 %v2077, 32
        %v2080 = vpop.permute.xlu0 %2079
        %v2082 = vadd.f32 %v2072, %v2080
        %v2083 = vtanh.pop %v2082
        %2085 = vrot.lane.b32.xlu0 %v2083, 64
        %v2086 = vpop.permute.xlu0 %2085
        %v2088 = vmul.f32 %v2067, %v2086
        %v2090 = vrot.slane %v2088, 6
        %2091 = vrot.lane.b32.xlu0 %v2090, 32
        %v2092 = vpop.permute.xlu0 %2091
        %v2093 = vsel %vm709, %v2092, 0
        %2095 = vmatprep.subr.mxu0 0.0
        %2096 = vmatpush1.msra.mxu0 0.0
        %2097 = vmatprep.subr.mxu0 0.0
        %2098 = vmatpush1.msra.mxu0 0.0
        %2099 = vmatprep.subr.mxu0 0.0
        %2100 = vmatpush1.msra.mxu0 0.0
        %2101 = vmatprep.subr.mxu0 0.0
        %2102 = vmatpush1.msra.mxu0 0.0
        %2103 = vmatprep.subr.mxu0 0.0
        %2104 = vmatpush1.msra.mxu0 0.0
        %2105 = vmatprep.subr.mxu0 0.0
        %2106 = vmatpush1.msra.mxu0 0.0
        %2107 = vmatprep.subr.mxu0 0.0
        %2108 = vmatpush1.msra.mxu0 0.0
        %2109 = vmatprep.subr.mxu0 0.0
        %2110 = vmatpush1.msra.mxu0 0.0
        %2111 = vmatprep.subr.mxu0 0.0
        %2112 = vmatpush1.msra.mxu0 0.0
        %2113 = vmatprep.subr.mxu0 0.0
        %2114 = vmatpush1.msra.mxu0 0.0
        %2115 = vmatprep.subr.mxu0 0.0
        %2116 = vmatpush1.msra.mxu0 0.0
        %2117 = vmatprep.subr.mxu0 0.0
        %2118 = vmatpush1.msra.mxu0 0.0
        %2119 = vmatprep.subr.mxu0 0.0
        %2120 = vmatpush1.msra.mxu0 %v1427
        %2121 = vmatprep.subr.mxu0 0.0
        %2122 = vmatpush1.msra.mxu0 %v1426
        %2123 = vmatprep.subr.mxu0 0.0
        %2124 = vmatpush1.msra.mxu0 %v1425
        %2125 = vmatprep.subr.mxu0 0.0
        %2126 = vmatpush1.msra.mxu0 %v1424
        %2127 = vmatprep.subr.mxu0 0.0
        %2128 = vmatpush2.msra.mxu0 0.0
        %2129 = vmatprep.subr.mxu0 0.0
        %2130 = vmatpush2.msra.mxu0 0.0
        %2131 = vmatprep.subr.mxu0 0.0
        %2132 = vmatpush2.msra.mxu0 0.0
        %2133 = vmatprep.subr.mxu0 0.0
        %2134 = vmatpush2.msra.mxu0 0.0
        %2135 = vmatprep.subr.mxu0 0.0
        %2136 = vmatpush2.msra.mxu0 0.0
        %2137 = vmatprep.subr.mxu0 0.0
        %2138 = vmatpush2.msra.mxu0 0.0
        %2139 = vmatprep.subr.mxu0 0.0
        %2140 = vmatpush2.msra.mxu0 0.0
        %2141 = vmatprep.subr.mxu0 0.0
        %2142 = vmatpush2.msra.mxu0 0.0
        %2143 = vmatprep.subr.mxu0 0.0
        %2144 = vmatpush2.msra.mxu0 0.0
        %2145 = vmatprep.subr.mxu0 0.0
        %2146 = vmatpush2.msra.mxu0 0.0
        %2147 = vmatprep.subr.mxu0 0.0
        %2148 = vmatpush2.msra.mxu0 0.0
        %2149 = vmatprep.subr.mxu0 0.0
        %2150 = vmatpush2.msra.mxu0 0.0
        %2151 = vmatprep.subr.mxu0 0.0
        %2152 = vmatpush2.msra.mxu0 0.0
        %2153 = vmatprep.subr.mxu0 0.0
        %2154 = vmatpush2.msra.mxu0 0.0
        %2155 = vmatprep.subr.mxu0 0.0
        %2156 = vmatpush2.msra.mxu0 0.0
        %2157 = vmatprep.subr.mxu0 0.0
        %2158 = vmatpush2.msra.mxu0 0.0
        %2159 = vmatprep.mubr.f32.mxu0 0.0
        %2160 = vmatmul.mubr.f32.gmra.mxu0 %v2093
        %v2161 = vpop.f32.mrf.mxu0
        %v2162 = vadd.f32 0.0, %v2161
        %v2163 = vpop.f32.mrf.mxu0
        %2164 = vdwg.mxu0
        %v2166 = vrot.slane %v2162, 1
        %v2168 = vadd.f32 %v1421, %v2166
        %v2169 = vxor.u32 %v2168, 2147483648
        %v2170 = vmul.f32 %v2169, 1.442695
        %v2171 = vpow.pop %v2170
        %v2172 = vadd.f32 %v2171, 1.0
        %v2173 = vrcp.pop %v2172
        %v2174 = vmul.f32 1.0, %v2173
        %v2175 = vtanh.pop %v2168
        %v2177 = vrot.slane %v2082, 7
        %v2179 = vmul.f32 %v2174, %v2177
        %2181 = vrot.lane.b32.xlu0 %v2175, 64
        %v2182 = vpop.permute.xlu0 %2181
        %v2184 = vmul.f32 %v2174, %v2182
        %2186 = vrot.lane.b32.xlu0 %v2184, 32
        %v2187 = vpop.permute.xlu0 %2186
        %v2189 = vadd.f32 %v2179, %v2187
        %v2190 = vtanh.pop %v2189
        %2192 = vrot.lane.b32.xlu0 %v2190, 64
        %v2193 = vpop.permute.xlu0 %2192
        %v2195 = vmul.f32 %v2174, %v2193
        %2197 = vrot.lane.b32.xlu0 %v1555, 64
        %v2198 = vpop.permute.xlu0 %2197
        %2200 = vrot.lane.b32.xlu0 %v1662, 96
        %v2201 = vpop.permute.xlu0 %2200
        %2205 = vrot.lane.b32.xlu0 %v1983, 64
        %v2206 = vpop.permute.xlu0 %2205
        %2208 = vrot.lane.b32.xlu0 %v2090, 96
        %v2209 = vpop.permute.xlu0 %2208
        %v2212 = vrot.slane %v2195, 7
        %v2214 = vsel %vm709, %v1448, %v2198
        %vm2215 = vcmask 523264
        %v2216 = vsel %vm2215, %v2214, %v2201
        %vm2217 = vcmask 785408
        %v2218 = vsel %vm2217, %v2216, %v1769
        %v2219 = vsel %vm709, %v1878, %v2206
        %v2220 = vsel %vm2215, %v2219, %v2209
        %v2221 = vsel %vm2217, %v2220, %v2212
        %v2222 = vld [vmem:[#allocation2 + $0x140] sm:$0xff]
        %v2223 = vld [vmem:[#allocation2 + $0x148] sm:$0xff]
        %v2224 = vld [vmem:[#allocation2 + $0x150] sm:$0xff]
        %v2225 = vld [vmem:[#allocation2 + $0x158] sm:$0xff]
        %v2226 = vld [vmem:[#allocation2 + $0x160] sm:$0xff]
        %v2227 = vld [vmem:[#allocation2 + $0x168] sm:$0xff]
        %v2228 = vld [vmem:[#allocation2 + $0x170] sm:$0xff]
        %v2229 = vld [vmem:[#allocation2 + $0x178] sm:$0xff]
        %v2230 = vld [vmem:[#allocation2 + $0x180] sm:$0xff]
        %v2231 = vld [vmem:[#allocation2 + $0x188] sm:$0xff]
        %v2232 = vld [vmem:[#allocation2 + $0x190] sm:$0xff]
        %v2233 = vld [vmem:[#allocation2 + $0x198] sm:$0xff]
        %v2234 = vld [vmem:[#allocation2 + $0x1a0] sm:$0xff]
        %v2235 = vld [vmem:[#allocation2 + $0x1a8] sm:$0xff]
        %v2236 = vld [vmem:[#allocation2 + $0x1b0] sm:$0xff]
        %v2237 = vld [vmem:[#allocation2 + $0x1b8] sm:$0xff]
        %v2238 = vld [vmem:[#allocation2 + $0x1c0] sm:$0xff]
        %v2239 = vld [vmem:[#allocation2 + $0x1c8] sm:$0xff]
        %v2240 = vld [vmem:[#allocation2 + $0x1d0] sm:$0xff]
        %v2241 = vld [vmem:[#allocation2 + $0x1d8] sm:$0xff]
        %v2242 = vld [vmem:[#allocation2 + $0x1e0] sm:$0xff]
        %v2243 = vld [vmem:[#allocation2 + $0x1e8] sm:$0xff]
        %v2244 = vld [vmem:[#allocation2 + $0x1f0] sm:$0xff]
        %v2245 = vld [vmem:[#allocation2 + $0x1f8] sm:$0xff]
        %v2246 = vld [vmem:[#allocation2 + $0x200] sm:$0xff]
        %v2247 = vld [vmem:[#allocation2 + $0x208] sm:$0xff]
        %v2248 = vld [vmem:[#allocation2 + $0x210] sm:$0xff]
        %v2249 = vld [vmem:[#allocation2 + $0x218] sm:$0xff]
        %v2250 = vld [vmem:[#allocation2 + $0x220] sm:$0xff]
        %v2251 = vld [vmem:[#allocation2 + $0x228] sm:$0xff]
        %v2252 = vld [vmem:[#allocation2 + $0x230] sm:$0xff]
        %v2253 = vld [vmem:[#allocation2 + $0x238] sm:$0xff]
        %v2254 = vld [vmem:[#allocation2 + $0x240] sm:$0x1]
        %2255 = vmatprep.subr.mxu0 0.0
        %2256 = vmatpush1.msra.mxu0 %v2237
        %2257 = vmatprep.subr.mxu0 0.0
        %2258 = vmatpush1.msra.mxu0 %v2236
        %2259 = vmatprep.subr.mxu0 0.0
        %2260 = vmatpush1.msra.mxu0 %v2235
        %2261 = vmatprep.subr.mxu0 0.0
        %2262 = vmatpush1.msra.mxu0 %v2234
        %2263 = vmatprep.subr.mxu0 0.0
        %2264 = vmatpush1.msra.mxu0 %v2233
        %2265 = vmatprep.subr.mxu0 0.0
        %2266 = vmatpush1.msra.mxu0 %v2232
        %2267 = vmatprep.subr.mxu0 0.0
        %2268 = vmatpush1.msra.mxu0 %v2231
        %2269 = vmatprep.subr.mxu0 0.0
        %2270 = vmatpush1.msra.mxu0 %v2230
        %2271 = vmatprep.subr.mxu0 0.0
        %2272 = vmatpush1.msra.mxu0 %v2229
        %2273 = vmatprep.subr.mxu0 0.0
        %2274 = vmatpush1.msra.mxu0 %v2228
        %2275 = vmatprep.subr.mxu0 0.0
        %2276 = vmatpush1.msra.mxu0 %v2227
        %2277 = vmatprep.subr.mxu0 0.0
        %2278 = vmatpush1.msra.mxu0 %v2226
        %2279 = vmatprep.subr.mxu0 0.0
        %2280 = vmatpush1.msra.mxu0 %v2225
        %2281 = vmatprep.subr.mxu0 0.0
        %2282 = vmatpush1.msra.mxu0 %v2224
        %2283 = vmatprep.subr.mxu0 0.0
        %2284 = vmatpush1.msra.mxu0 %v2223
        %2285 = vmatprep.subr.mxu0 0.0
        %2286 = vmatpush1.msra.mxu0 %v2222
        %2287 = vmatprep.subr.mxu0 0.0
        %2288 = vmatpush2.msra.mxu0 %v2253
        %2289 = vmatprep.subr.mxu0 0.0
        %2290 = vmatpush2.msra.mxu0 %v2252
        %2291 = vmatprep.subr.mxu0 0.0
        %2292 = vmatpush2.msra.mxu0 %v2251
        %2293 = vmatprep.subr.mxu0 0.0
        %2294 = vmatpush2.msra.mxu0 %v2250
        %2295 = vmatprep.subr.mxu0 0.0
        %2296 = vmatpush2.msra.mxu0 %v2249
        %2297 = vmatprep.subr.mxu0 0.0
        %2298 = vmatpush2.msra.mxu0 %v2248
        %2299 = vmatprep.subr.mxu0 0.0
        %2300 = vmatpush2.msra.mxu0 %v2247
        %2301 = vmatprep.subr.mxu0 0.0
        %2302 = vmatpush2.msra.mxu0 %v2246
        %2303 = vmatprep.subr.mxu0 0.0
        %2304 = vmatpush2.msra.mxu0 %v2245
        %2305 = vmatprep.subr.mxu0 0.0
        %2306 = vmatpush2.msra.mxu0 %v2244
        %2307 = vmatprep.subr.mxu0 0.0
        %2308 = vmatpush2.msra.mxu0 %v2243
        %2309 = vmatprep.subr.mxu0 0.0
        %2310 = vmatpush2.msra.mxu0 %v2242
        %2311 = vmatprep.subr.mxu0 0.0
        %2312 = vmatpush2.msra.mxu0 %v2241
        %2313 = vmatprep.subr.mxu0 0.0
        %2314 = vmatpush2.msra.mxu0 %v2240
        %2315 = vmatprep.subr.mxu0 0.0
        %2316 = vmatpush2.msra.mxu0 %v2239
        %2317 = vmatprep.subr.mxu0 0.0
        %2318 = vmatpush2.msra.mxu0 %v2238
        %2319 = vmatprep.mubr.f32.mxu0 %v2221
        %2320 = vmatmul.mubr.f32.gmra.mxu0 %v2218
        %v2321 = vpop.f32.mrf.mxu0
        %v2322 = vadd.f32 %v2254, %v2321
        %v2323 = vpop.f32.mrf.mxu0
        %2324 = vdwg.mxu0
        %v2325 = vmax.f32 %v2322, 0.0
        %v2326 = vld [vmem:[#allocation2 + $0x248] sm:$0xff]
        %v2327 = vld [vmem:[#allocation2 + $0x250] sm:$0xff]
        %v2328 = vld [vmem:[#allocation2 + $0x258] sm:$0xff]
        %v2329 = vld [vmem:[#allocation2 + $0x260] sm:$0xff]
        %v2330 = vld [vmem:[#allocation2 + $0x268] sm:$0xff]
        %v2331 = vld [vmem:[#allocation2 + $0x270] sm:$0xff]
        %v2332 = vld [vmem:[#allocation2 + $0x278] sm:$0xff]
        %v2333 = vld [vmem:[#allocation2 + $0x280] sm:$0xff]
        %v2334 = vld [vmem:[#allocation2 + $0x288] sm:$0x1]
        %v2336 = vsel %vm2215, %v2325, 0
        %2338 = vmatprep.subr.mxu0 0.0
        %2339 = vmatpush1.msra.mxu0 0.0
        %2340 = vmatprep.subr.mxu0 0.0
        %2341 = vmatpush1.msra.mxu0 0.0
        %2342 = vmatprep.subr.mxu0 0.0
        %2343 = vmatpush1.msra.mxu0 0.0
        %2344 = vmatprep.subr.mxu0 0.0
        %2345 = vmatpush1.msra.mxu0 0.0
        %2346 = vmatprep.subr.mxu0 0.0
        %2347 = vmatpush1.msra.mxu0 0.0
        %2348 = vmatprep.subr.mxu0 0.0
        %2349 = vmatpush1.msra.mxu0 0.0
        %2350 = vmatprep.subr.mxu0 0.0
        %2351 = vmatpush1.msra.mxu0 0.0
        %2352 = vmatprep.subr.mxu0 0.0
        %2353 = vmatpush1.msra.mxu0 0.0
        %2354 = vmatprep.subr.mxu0 0.0
        %2355 = vmatpush1.msra.mxu0 %v2333
        %2356 = vmatprep.subr.mxu0 0.0
        %2357 = vmatpush1.msra.mxu0 %v2332
        %2358 = vmatprep.subr.mxu0 0.0
        %2359 = vmatpush1.msra.mxu0 %v2331
        %2360 = vmatprep.subr.mxu0 0.0
        %2361 = vmatpush1.msra.mxu0 %v2330
        %2362 = vmatprep.subr.mxu0 0.0
        %2363 = vmatpush1.msra.mxu0 %v2329
        %2364 = vmatprep.subr.mxu0 0.0
        %2365 = vmatpush1.msra.mxu0 %v2328
        %2366 = vmatprep.subr.mxu0 0.0
        %2367 = vmatpush1.msra.mxu0 %v2327
        %2368 = vmatprep.subr.mxu0 0.0
        %2369 = vmatpush1.msra.mxu0 %v2326
        %2370 = vmatprep.subr.mxu0 0.0
        %2371 = vmatpush2.msra.mxu0 0.0
        %2372 = vmatprep.subr.mxu0 0.0
        %2373 = vmatpush2.msra.mxu0 0.0
        %2374 = vmatprep.subr.mxu0 0.0
        %2375 = vmatpush2.msra.mxu0 0.0
        %2376 = vmatprep.subr.mxu0 0.0
        %2377 = vmatpush2.msra.mxu0 0.0
        %2378 = vmatprep.subr.mxu0 0.0
        %2379 = vmatpush2.msra.mxu0 0.0
        %2380 = vmatprep.subr.mxu0 0.0
        %2381 = vmatpush2.msra.mxu0 0.0
        %2382 = vmatprep.subr.mxu0 0.0
        %2383 = vmatpush2.msra.mxu0 0.0
        %2384 = vmatprep.subr.mxu0 0.0
        %2385 = vmatpush2.msra.mxu0 0.0
        %2386 = vmatprep.subr.mxu0 0.0
        %2387 = vmatpush2.msra.mxu0 0.0
        %2388 = vmatprep.subr.mxu0 0.0
        %2389 = vmatpush2.msra.mxu0 0.0
        %2390 = vmatprep.subr.mxu0 0.0
        %2391 = vmatpush2.msra.mxu0 0.0
        %2392 = vmatprep.subr.mxu0 0.0
        %2393 = vmatpush2.msra.mxu0 0.0
        %2394 = vmatprep.subr.mxu0 0.0
        %2395 = vmatpush2.msra.mxu0 0.0
        %2396 = vmatprep.subr.mxu0 0.0
        %2397 = vmatpush2.msra.mxu0 0.0
        %2398 = vmatprep.subr.mxu0 0.0
        %2399 = vmatpush2.msra.mxu0 0.0
        %2400 = vmatprep.subr.mxu0 0.0
        %2401 = vmatpush2.msra.mxu0 0.0
        %2402 = vmatprep.mubr.f32.mxu0 0.0
        %2403 = vmatmul.mubr.f32.gmra.mxu0 %v2336
        %v2404 = vpop.f32.mrf.mxu0
        %v2405 = vadd.f32 %v2334, %v2404
        %v2406 = vpop.f32.mrf.mxu0
        %2407 = vdwg.mxu0
        %v2408 = vld [vmem:[#allocation2 + $0x290] sm:$0xff]
        %v2409 = vld [vmem:[#allocation2 + $0x298] sm:$0xff]
        %v2410 = vld [vmem:[#allocation2 + $0x2a0] sm:$0xff]
        %v2411 = vld [vmem:[#allocation2 + $0x2a8] sm:$0xff]
        %v2412 = vld [vmem:[#allocation2 + $0x2b0] sm:$0x1]
        %v2414 = vsel %vm709, %v2405, 0
        %2416 = vmatprep.subr.mxu0 0.0
        %2417 = vmatpush1.msra.mxu0 0.0
        %2418 = vmatprep.subr.mxu0 0.0
        %2419 = vmatpush1.msra.mxu0 0.0
        %2420 = vmatprep.subr.mxu0 0.0
        %2421 = vmatpush1.msra.mxu0 0.0
        %2422 = vmatprep.subr.mxu0 0.0
        %2423 = vmatpush1.msra.mxu0 0.0
        %2424 = vmatprep.subr.mxu0 0.0
        %2425 = vmatpush1.msra.mxu0 0.0
        %2426 = vmatprep.subr.mxu0 0.0
        %2427 = vmatpush1.msra.mxu0 0.0
        %2428 = vmatprep.subr.mxu0 0.0
        %2429 = vmatpush1.msra.mxu0 0.0
        %2430 = vmatprep.subr.mxu0 0.0
        %2431 = vmatpush1.msra.mxu0 0.0
        %2432 = vmatprep.subr.mxu0 0.0
        %2433 = vmatpush1.msra.mxu0 0.0
        %2434 = vmatprep.subr.mxu0 0.0
        %2435 = vmatpush1.msra.mxu0 0.0
        %2436 = vmatprep.subr.mxu0 0.0
        %2437 = vmatpush1.msra.mxu0 0.0
        %2438 = vmatprep.subr.mxu0 0.0
        %2439 = vmatpush1.msra.mxu0 0.0
        %2440 = vmatprep.subr.mxu0 0.0
        %2441 = vmatpush1.msra.mxu0 %v2411
        %2442 = vmatprep.subr.mxu0 0.0
        %2443 = vmatpush1.msra.mxu0 %v2410
        %2444 = vmatprep.subr.mxu0 0.0
        %2445 = vmatpush1.msra.mxu0 %v2409
        %2446 = vmatprep.subr.mxu0 0.0
        %2447 = vmatpush1.msra.mxu0 %v2408
        %2448 = vmatprep.subr.mxu0 0.0
        %2449 = vmatpush2.msra.mxu0 0.0
        %2450 = vmatprep.subr.mxu0 0.0
        %2451 = vmatpush2.msra.mxu0 0.0
        %2452 = vmatprep.subr.mxu0 0.0
        %2453 = vmatpush2.msra.mxu0 0.0
        %2454 = vmatprep.subr.mxu0 0.0
        %2455 = vmatpush2.msra.mxu0 0.0
        %2456 = vmatprep.subr.mxu0 0.0
        %2457 = vmatpush2.msra.mxu0 0.0
        %2458 = vmatprep.subr.mxu0 0.0
        %2459 = vmatpush2.msra.mxu0 0.0
        %2460 = vmatprep.subr.mxu0 0.0
        %2461 = vmatpush2.msra.mxu0 0.0
        %2462 = vmatprep.subr.mxu0 0.0
        %2463 = vmatpush2.msra.mxu0 0.0
        %2464 = vmatprep.subr.mxu0 0.0
        %2465 = vmatpush2.msra.mxu0 0.0
        %2466 = vmatprep.subr.mxu0 0.0
        %2467 = vmatpush2.msra.mxu0 0.0
        %2468 = vmatprep.subr.mxu0 0.0
        %2469 = vmatpush2.msra.mxu0 0.0
        %2470 = vmatprep.subr.mxu0 0.0
        %2471 = vmatpush2.msra.mxu0 0.0
        %2472 = vmatprep.subr.mxu0 0.0
        %2473 = vmatpush2.msra.mxu0 0.0
        %2474 = vmatprep.subr.mxu0 0.0
        %2475 = vmatpush2.msra.mxu0 0.0
        %2476 = vmatprep.subr.mxu0 0.0
        %2477 = vmatpush2.msra.mxu0 0.0
        %2478 = vmatprep.subr.mxu0 0.0
        %2479 = vmatpush2.msra.mxu0 0.0
        %2480 = vmatprep.mubr.f32.mxu0 0.0
        %2481 = vmatmul.mubr.f32.gmra.mxu0 %v2414
        %v2482 = vpop.f32.mrf.mxu0
        %v2483 = vadd.f32 %v2412, %v2482
        %v2484 = vpop.f32.mrf.mxu0
        %2485 = vdwg.mxu0
        %v2486 = vmax.f32 %v2483, 0.0
        %v2487 = vld [vmem:[#allocation5] sm:$0xff]
        %v2488 = vld [vmem:[#allocation5 + $0x8] sm:$0xff]
        %v2489 = vld [vmem:[#allocation5 + $0x10] sm:$0xff]
        %v2490 = vld [vmem:[#allocation5 + $0x18] sm:$0xff]
        %v2491 = vld [vmem:[#allocation5 + $0x20] sm:$0xff]
        %v2492 = vld [vmem:[#allocation5 + $0x28] sm:$0xff]
        %v2493 = vld [vmem:[#allocation5 + $0x30] sm:$0xff]
        %v2494 = vld [vmem:[#allocation5 + $0x38] sm:$0xff]
        %v2495 = vld [vmem:[#allocation5 + $0x40] sm:$0xff]
        %v2496 = vld [vmem:[#allocation5 + $0x48] sm:$0xff]
        %v2497 = vld [vmem:[#allocation5 + $0x50] sm:$0xff]
        %v2498 = vld [vmem:[#allocation5 + $0x58] sm:$0xff]
        %v2499 = vld [vmem:[#allocation5 + $0x60] sm:$0xff]
        %v2500 = vld [vmem:[#allocation5 + $0x68] sm:$0xff]
        %v2501 = vld [vmem:[#allocation5 + $0x70] sm:$0xff]
        %v2502 = vld [vmem:[#allocation5 + $0x78] sm:$0xff]
        %v2503 = vld [vmem:[#allocation5 + $0x80] sm:$0xff]
        %v2504 = vld [vmem:[#allocation5 + $0x88] sm:$0xff]
        %v2505 = vld [vmem:[#allocation5 + $0x90] sm:$0xff]
        %v2506 = vld [vmem:[#allocation5 + $0x98] sm:$0xff]
        %v2507 = vld [vmem:[#allocation5 + $0xa0] sm:$0xff]
        %v2508 = vld [vmem:[#allocation5 + $0xa8] sm:$0xff]
        %v2509 = vld [vmem:[#allocation5 + $0xb0] sm:$0xff]
        %v2510 = vld [vmem:[#allocation5 + $0xb8] sm:$0xff]
        %v2511 = vld [vmem:[#allocation5 + $0xc0] sm:$0xff]
        %v2512 = vld [vmem:[#allocation5 + $0xc8] sm:$0xff]
        %v2513 = vld [vmem:[#allocation5 + $0xd0] sm:$0xff]
        %v2514 = vld [vmem:[#allocation5 + $0xd8] sm:$0xff]
        %v2515 = vld [vmem:[#allocation5 + $0xe0] sm:$0xff]
        %v2516 = vld [vmem:[#allocation5 + $0xe8] sm:$0xff]
        %v2517 = vld [vmem:[#allocation5 + $0xf0] sm:$0xff]
        %v2518 = vld [vmem:[#allocation5 + $0xf8] sm:$0xff]
        %v2519 = vld [vmem:[#allocation5 + $0x100] sm:$0xff]
        %v2520 = vld [vmem:[#allocation5 + $0x108] sm:$0xff]
        %v2521 = vld [vmem:[#allocation5 + $0x110] sm:$0xff]
        %v2522 = vld [vmem:[#allocation5 + $0x118] sm:$0xff]
        %v2523 = vld [vmem:[#allocation5 + $0x120] sm:$0xff]
        %v2524 = vld [vmem:[#allocation5 + $0x128] sm:$0xff]
        %v2525 = vld [vmem:[#allocation5 + $0x130] sm:$0xff]
        %v2526 = vld [vmem:[#allocation5 + $0x138] sm:$0xff]
        %v2527 = vld [vmem:[#allocation5 + $0x140] sm:$0xff]
        %v2528 = vld [vmem:[#allocation5 + $0x148] sm:$0xff]
        %v2529 = vld [vmem:[#allocation5 + $0x150] sm:$0xff]
        %v2530 = vld [vmem:[#allocation5 + $0x158] sm:$0xff]
        %v2531 = vld [vmem:[#allocation5 + $0x160] sm:$0xff]
        %v2532 = vld [vmem:[#allocation5 + $0x168] sm:$0xff]
        %v2533 = vld [vmem:[#allocation5 + $0x170] sm:$0xff]
        %v2534 = vld [vmem:[#allocation5 + $0x178] sm:$0xff]
        %v2535 = vld [vmem:[#allocation5 + $0x180] sm:$0xff]
        %v2536 = vld [vmem:[#allocation5 + $0x188] sm:$0xff]
        %v2537 = vld [vmem:[#allocation5 + $0x190] sm:$0xff]
        %v2538 = vld [vmem:[#allocation5 + $0x198] sm:$0xff]
        %v2539 = vld [vmem:[#allocation5 + $0x1a0] sm:$0xff]
        %v2540 = vld [vmem:[#allocation5 + $0x1a8] sm:$0xff]
        %v2541 = vld [vmem:[#allocation5 + $0x1b0] sm:$0xff]
        %v2542 = vld [vmem:[#allocation5 + $0x1b8] sm:$0xff]
        %v2543 = vld [vmem:[#allocation5 + $0x1c0] sm:$0xff]
        %v2544 = vld [vmem:[#allocation5 + $0x1c8] sm:$0xff]
        %v2545 = vld [vmem:[#allocation5 + $0x1d0] sm:$0xff]
        %v2546 = vld [vmem:[#allocation5 + $0x1d8] sm:$0xff]
        %v2547 = vld [vmem:[#allocation5 + $0x1e0] sm:$0xff]
        %v2548 = vld [vmem:[#allocation5 + $0x1e8] sm:$0xff]
        %v2549 = vld [vmem:[#allocation5 + $0x1f0] sm:$0xff]
        %v2550 = vld [vmem:[#allocation5 + $0x1f8] sm:$0xff]
        %s2551 = scalar_lea.vmem [#allocation5], 512
        %v2552 = vld [vmem:[%s2551] ss:$8 sm:$0xf]
        %v2553 = vld [vmem:[%s2551] ss:$8 sm:$0xf0]
        %v2554 = vor.u32 %v2552, %v2553
        %v2556 = vlaneseq
        %v2557 = vshrl.u32 %v2556, 7
        %v2558 = vsub.s32 0, %v2557
        %v2559 = vrot.slane %v2554, %v2558
        %v2560 = vlaneseq
        %v2561 = vshrl.u32 %v2560, 7
        %v2562 = vsub.s32 1, %v2561
        %v2563 = vrot.slane %v2554, %v2562
        %v2564 = vlaneseq
        %v2565 = vshrl.u32 %v2564, 7
        %v2566 = vsub.s32 2, %v2565
        %v2567 = vrot.slane %v2554, %v2566
        %v2568 = vlaneseq
        %v2569 = vshrl.u32 %v2568, 7
        %v2570 = vsub.s32 3, %v2569
        %v2571 = vrot.slane %v2554, %v2570
        %v2572 = vlaneseq
        %v2573 = vshrl.u32 %v2572, 7
        %v2574 = vsub.s32 4, %v2573
        %v2575 = vrot.slane %v2554, %v2574
        %v2576 = vlaneseq
        %v2577 = vshrl.u32 %v2576, 7
        %v2578 = vsub.s32 5, %v2577
        %v2579 = vrot.slane %v2554, %v2578
        %v2580 = vlaneseq
        %v2581 = vshrl.u32 %v2580, 7
        %v2582 = vsub.s32 6, %v2581
        %v2583 = vrot.slane %v2554, %v2582
        %v2584 = vlaneseq
        %v2585 = vshrl.u32 %v2584, 7
        %v2586 = vsub.s32 7, %v2585
        %v2587 = vrot.slane %v2554, %v2586
        %v2597 = vsel %vm2215, %v2486, 0
        %2599 = vmatprep.subr.mxu0 0.0
        %2600 = vmatpush1.msra.mxu0 0.0
        %2601 = vmatprep.subr.mxu0 0.0
        %2602 = vmatpush1.msra.mxu0 0.0
        %2603 = vmatprep.subr.mxu0 0.0
        %2604 = vmatpush1.msra.mxu0 0.0
        %2605 = vmatprep.subr.mxu0 0.0
        %2606 = vmatpush1.msra.mxu0 0.0
        %2607 = vmatprep.subr.mxu0 0.0
        %2608 = vmatpush1.msra.mxu0 0.0
        %2609 = vmatprep.subr.mxu0 0.0
        %2610 = vmatpush1.msra.mxu0 0.0
        %2611 = vmatprep.subr.mxu0 0.0
        %2612 = vmatpush1.msra.mxu0 0.0
        %2613 = vmatprep.subr.mxu0 0.0
        %2614 = vmatpush1.msra.mxu0 0.0
        %2615 = vmatprep.subr.mxu0 %v2544
        %2616 = vmatpush1.msra.mxu0 %v2543
        %2617 = vmatprep.subr.mxu0 %v2536
        %2618 = vmatpush1.msra.mxu0 %v2535
        %2619 = vmatprep.subr.mxu0 %v2528
        %2620 = vmatpush1.msra.mxu0 %v2527
        %2621 = vmatprep.subr.mxu0 %v2520
        %2622 = vmatpush1.msra.mxu0 %v2519
        %2623 = vmatprep.subr.mxu0 %v2512
        %2624 = vmatpush1.msra.mxu0 %v2511
        %2625 = vmatprep.subr.mxu0 %v2504
        %2626 = vmatpush1.msra.mxu0 %v2503
        %2627 = vmatprep.subr.mxu0 %v2496
        %2628 = vmatpush1.msra.mxu0 %v2495
        %2629 = vmatprep.subr.mxu0 %v2488
        %2630 = vmatpush1.msra.mxu0 %v2487
        %2631 = vmatprep.subr.mxu0 0.0
        %2632 = vmatpush2.msra.mxu0 0.0
        %2633 = vmatprep.subr.mxu0 0.0
        %2634 = vmatpush2.msra.mxu0 0.0
        %2635 = vmatprep.subr.mxu0 0.0
        %2636 = vmatpush2.msra.mxu0 0.0
        %2637 = vmatprep.subr.mxu0 0.0
        %2638 = vmatpush2.msra.mxu0 0.0
        %2639 = vmatprep.subr.mxu0 0.0
        %2640 = vmatpush2.msra.mxu0 0.0
        %2641 = vmatprep.subr.mxu0 0.0
        %2642 = vmatpush2.msra.mxu0 0.0
        %2643 = vmatprep.subr.mxu0 0.0
        %2644 = vmatpush2.msra.mxu0 0.0
        %2645 = vmatprep.subr.mxu0 0.0
        %2646 = vmatpush2.msra.mxu0 0.0
        %2647 = vmatprep.subr.mxu0 0.0
        %2648 = vmatpush2.msra.mxu0 0.0
        %2649 = vmatprep.subr.mxu0 0.0
        %2650 = vmatpush2.msra.mxu0 0.0
        %2651 = vmatprep.subr.mxu0 0.0
        %2652 = vmatpush2.msra.mxu0 0.0
        %2653 = vmatprep.subr.mxu0 0.0
        %2654 = vmatpush2.msra.mxu0 0.0
        %2655 = vmatprep.subr.mxu0 0.0
        %2656 = vmatpush2.msra.mxu0 0.0
        %2657 = vmatprep.subr.mxu0 0.0
        %2658 = vmatpush2.msra.mxu0 0.0
        %2659 = vmatprep.subr.mxu0 0.0
        %2660 = vmatpush2.msra.mxu0 0.0
        %2661 = vmatprep.subr.mxu0 0.0
        %2662 = vmatpush2.msra.mxu0 0.0
        %2663 = vmatprep.mubr.f32.mxu0 0.0
        %2664 = vmatmul.mubr.f32.gmra.mxu0 %v2597
        %v2665 = vpop.f32.mrf.mxu0
        %v2666 = vadd.f32 %v2559, %v2665
        %v2667 = vpop.f32.mrf.mxu0
        %v2668 = vadd.f32 %v2563, %v2667
        %2669 = vdwg.mxu0
        %2670 = vmatprep.subr.mxu0 0.0
        %2671 = vmatpush1.msra.mxu0 0.0
        %2672 = vmatprep.subr.mxu0 0.0
        %2673 = vmatpush1.msra.mxu0 0.0
        %2674 = vmatprep.subr.mxu0 0.0
        %2675 = vmatpush1.msra.mxu0 0.0
        %2676 = vmatprep.subr.mxu0 0.0
        %2677 = vmatpush1.msra.mxu0 0.0
        %2678 = vmatprep.subr.mxu0 0.0
        %2679 = vmatpush1.msra.mxu0 0.0
        %2680 = vmatprep.subr.mxu0 0.0
        %2681 = vmatpush1.msra.mxu0 0.0
        %2682 = vmatprep.subr.mxu0 0.0
        %2683 = vmatpush1.msra.mxu0 0.0
        %2684 = vmatprep.subr.mxu0 0.0
        %2685 = vmatpush1.msra.mxu0 0.0
        %2686 = vmatprep.subr.mxu0 %v2546
        %2687 = vmatpush1.msra.mxu0 %v2545
        %2688 = vmatprep.subr.mxu0 %v2538
        %2689 = vmatpush1.msra.mxu0 %v2537
        %2690 = vmatprep.subr.mxu0 %v2530
        %2691 = vmatpush1.msra.mxu0 %v2529
        %2692 = vmatprep.subr.mxu0 %v2522
        %2693 = vmatpush1.msra.mxu0 %v2521
        %2694 = vmatprep.subr.mxu0 %v2514
        %2695 = vmatpush1.msra.mxu0 %v2513
        %2696 = vmatprep.subr.mxu0 %v2506
        %2697 = vmatpush1.msra.mxu0 %v2505
        %2698 = vmatprep.subr.mxu0 %v2498
        %2699 = vmatpush1.msra.mxu0 %v2497
        %2700 = vmatprep.subr.mxu0 %v2490
        %2701 = vmatpush1.msra.mxu0 %v2489
        %2702 = vmatprep.subr.mxu0 0.0
        %2703 = vmatpush2.msra.mxu0 0.0
        %2704 = vmatprep.subr.mxu0 0.0
        %2705 = vmatpush2.msra.mxu0 0.0
        %2706 = vmatprep.subr.mxu0 0.0
        %2707 = vmatpush2.msra.mxu0 0.0
        %2708 = vmatprep.subr.mxu0 0.0
        %2709 = vmatpush2.msra.mxu0 0.0
        %2710 = vmatprep.subr.mxu0 0.0
        %2711 = vmatpush2.msra.mxu0 0.0
        %2712 = vmatprep.subr.mxu0 0.0
        %2713 = vmatpush2.msra.mxu0 0.0
        %2714 = vmatprep.subr.mxu0 0.0
        %2715 = vmatpush2.msra.mxu0 0.0
        %2716 = vmatprep.subr.mxu0 0.0
        %2717 = vmatpush2.msra.mxu0 0.0
        %2718 = vmatprep.subr.mxu0 0.0
        %2719 = vmatpush2.msra.mxu0 0.0
        %2720 = vmatprep.subr.mxu0 0.0
        %2721 = vmatpush2.msra.mxu0 0.0
        %2722 = vmatprep.subr.mxu0 0.0
        %2723 = vmatpush2.msra.mxu0 0.0
        %2724 = vmatprep.subr.mxu0 0.0
        %2725 = vmatpush2.msra.mxu0 0.0
        %2726 = vmatprep.subr.mxu0 0.0
        %2727 = vmatpush2.msra.mxu0 0.0
        %2728 = vmatprep.subr.mxu0 0.0
        %2729 = vmatpush2.msra.mxu0 0.0
        %2730 = vmatprep.subr.mxu0 0.0
        %2731 = vmatpush2.msra.mxu0 0.0
        %2732 = vmatprep.subr.mxu0 0.0
        %2733 = vmatpush2.msra.mxu0 0.0
        %2734 = vmatprep.mubr.f32.mxu0 0.0
        %2735 = vmatmul.mubr.f32.gmra.mxu0 %v2597
        %v2736 = vpop.f32.mrf.mxu0
        %v2737 = vadd.f32 %v2567, %v2736
        %v2738 = vpop.f32.mrf.mxu0
        %v2739 = vadd.f32 %v2571, %v2738
        %2740 = vdwg.mxu0
        %2741 = vmatprep.subr.mxu0 0.0
        %2742 = vmatpush1.msra.mxu0 0.0
        %2743 = vmatprep.subr.mxu0 0.0
        %2744 = vmatpush1.msra.mxu0 0.0
        %2745 = vmatprep.subr.mxu0 0.0
        %2746 = vmatpush1.msra.mxu0 0.0
        %2747 = vmatprep.subr.mxu0 0.0
        %2748 = vmatpush1.msra.mxu0 0.0
        %2749 = vmatprep.subr.mxu0 0.0
        %2750 = vmatpush1.msra.mxu0 0.0
        %2751 = vmatprep.subr.mxu0 0.0
        %2752 = vmatpush1.msra.mxu0 0.0
        %2753 = vmatprep.subr.mxu0 0.0
        %2754 = vmatpush1.msra.mxu0 0.0
        %2755 = vmatprep.subr.mxu0 0.0
        %2756 = vmatpush1.msra.mxu0 0.0
        %2757 = vmatprep.subr.mxu0 %v2548
        %2758 = vmatpush1.msra.mxu0 %v2547
        %2759 = vmatprep.subr.mxu0 %v2540
        %2760 = vmatpush1.msra.mxu0 %v2539
        %2761 = vmatprep.subr.mxu0 %v2532
        %2762 = vmatpush1.msra.mxu0 %v2531
        %2763 = vmatprep.subr.mxu0 %v2524
        %2764 = vmatpush1.msra.mxu0 %v2523
        %2765 = vmatprep.subr.mxu0 %v2516
        %2766 = vmatpush1.msra.mxu0 %v2515
        %2767 = vmatprep.subr.mxu0 %v2508
        %2768 = vmatpush1.msra.mxu0 %v2507
        %2769 = vmatprep.subr.mxu0 %v2500
        %2770 = vmatpush1.msra.mxu0 %v2499
        %2771 = vmatprep.subr.mxu0 %v2492
        %2772 = vmatpush1.msra.mxu0 %v2491
        %2773 = vmatprep.subr.mxu0 0.0
        %2774 = vmatpush2.msra.mxu0 0.0
        %2775 = vmatprep.subr.mxu0 0.0
        %2776 = vmatpush2.msra.mxu0 0.0
        %2777 = vmatprep.subr.mxu0 0.0
        %2778 = vmatpush2.msra.mxu0 0.0
        %2779 = vmatprep.subr.mxu0 0.0
        %2780 = vmatpush2.msra.mxu0 0.0
        %2781 = vmatprep.subr.mxu0 0.0
        %2782 = vmatpush2.msra.mxu0 0.0
        %2783 = vmatprep.subr.mxu0 0.0
        %2784 = vmatpush2.msra.mxu0 0.0
        %2785 = vmatprep.subr.mxu0 0.0
        %2786 = vmatpush2.msra.mxu0 0.0
        %2787 = vmatprep.subr.mxu0 0.0
        %2788 = vmatpush2.msra.mxu0 0.0
        %2789 = vmatprep.subr.mxu0 0.0
        %2790 = vmatpush2.msra.mxu0 0.0
        %2791 = vmatprep.subr.mxu0 0.0
        %2792 = vmatpush2.msra.mxu0 0.0
        %2793 = vmatprep.subr.mxu0 0.0
        %2794 = vmatpush2.msra.mxu0 0.0
        %2795 = vmatprep.subr.mxu0 0.0
        %2796 = vmatpush2.msra.mxu0 0.0
        %2797 = vmatprep.subr.mxu0 0.0
        %2798 = vmatpush2.msra.mxu0 0.0
        %2799 = vmatprep.subr.mxu0 0.0
        %2800 = vmatpush2.msra.mxu0 0.0
        %2801 = vmatprep.subr.mxu0 0.0
        %2802 = vmatpush2.msra.mxu0 0.0
        %2803 = vmatprep.subr.mxu0 0.0
        %2804 = vmatpush2.msra.mxu0 0.0
        %2805 = vmatprep.mubr.f32.mxu0 0.0
        %2806 = vmatmul.mubr.f32.gmra.mxu0 %v2597
        %v2807 = vpop.f32.mrf.mxu0
        %v2808 = vadd.f32 %v2575, %v2807
        %v2809 = vpop.f32.mrf.mxu0
        %v2810 = vadd.f32 %v2579, %v2809
        %2811 = vdwg.mxu0
        %2812 = vmatprep.subr.mxu0 0.0
        %2813 = vmatpush1.msra.mxu0 0.0
        %2814 = vmatprep.subr.mxu0 0.0
        %2815 = vmatpush1.msra.mxu0 0.0
        %2816 = vmatprep.subr.mxu0 0.0
        %2817 = vmatpush1.msra.mxu0 0.0
        %2818 = vmatprep.subr.mxu0 0.0
        %2819 = vmatpush1.msra.mxu0 0.0
        %2820 = vmatprep.subr.mxu0 0.0
        %2821 = vmatpush1.msra.mxu0 0.0
        %2822 = vmatprep.subr.mxu0 0.0
        %2823 = vmatpush1.msra.mxu0 0.0
        %2824 = vmatprep.subr.mxu0 0.0
        %2825 = vmatpush1.msra.mxu0 0.0
        %2826 = vmatprep.subr.mxu0 0.0
        %2827 = vmatpush1.msra.mxu0 0.0
        %2828 = vmatprep.subr.mxu0 %v2550
        %2829 = vmatpush1.msra.mxu0 %v2549
        %2830 = vmatprep.subr.mxu0 %v2542
        %2831 = vmatpush1.msra.mxu0 %v2541
        %2832 = vmatprep.subr.mxu0 %v2534
        %2833 = vmatpush1.msra.mxu0 %v2533
        %2834 = vmatprep.subr.mxu0 %v2526
        %2835 = vmatpush1.msra.mxu0 %v2525
        %2836 = vmatprep.subr.mxu0 %v2518
        %2837 = vmatpush1.msra.mxu0 %v2517
        %2838 = vmatprep.subr.mxu0 %v2510
        %2839 = vmatpush1.msra.mxu0 %v2509
        %2840 = vmatprep.subr.mxu0 %v2502
        %2841 = vmatpush1.msra.mxu0 %v2501
        %2842 = vmatprep.subr.mxu0 %v2494
        %2843 = vmatpush1.msra.mxu0 %v2493
        %2844 = vmatprep.subr.mxu0 0.0
        %2845 = vmatpush2.msra.mxu0 0.0
        %2846 = vmatprep.subr.mxu0 0.0
        %2847 = vmatpush2.msra.mxu0 0.0
        %2848 = vmatprep.subr.mxu0 0.0
        %2849 = vmatpush2.msra.mxu0 0.0
        %2850 = vmatprep.subr.mxu0 0.0
        %2851 = vmatpush2.msra.mxu0 0.0
        %2852 = vmatprep.subr.mxu0 0.0
        %2853 = vmatpush2.msra.mxu0 0.0
        %2854 = vmatprep.subr.mxu0 0.0
        %2855 = vmatpush2.msra.mxu0 0.0
        %2856 = vmatprep.subr.mxu0 0.0
        %2857 = vmatpush2.msra.mxu0 0.0
        %2858 = vmatprep.subr.mxu0 0.0
        %2859 = vmatpush2.msra.mxu0 0.0
        %2860 = vmatprep.subr.mxu0 0.0
        %2861 = vmatpush2.msra.mxu0 0.0
        %2862 = vmatprep.subr.mxu0 0.0
        %2863 = vmatpush2.msra.mxu0 0.0
        %2864 = vmatprep.subr.mxu0 0.0
        %2865 = vmatpush2.msra.mxu0 0.0
        %2866 = vmatprep.subr.mxu0 0.0
        %2867 = vmatpush2.msra.mxu0 0.0
        %2868 = vmatprep.subr.mxu0 0.0
        %2869 = vmatpush2.msra.mxu0 0.0
        %2870 = vmatprep.subr.mxu0 0.0
        %2871 = vmatpush2.msra.mxu0 0.0
        %2872 = vmatprep.subr.mxu0 0.0
        %2873 = vmatpush2.msra.mxu0 0.0
        %2874 = vmatprep.subr.mxu0 0.0
        %2875 = vmatpush2.msra.mxu0 0.0
        %2876 = vmatprep.mubr.f32.mxu0 0.0
        %2877 = vmatmul.mubr.f32.gmra.mxu0 %v2597
        %v2878 = vpop.f32.mrf.mxu0
        %v2879 = vadd.f32 %v2583, %v2878
        %v2880 = vpop.f32.mrf.mxu0
        %v2881 = vadd.f32 %v2587, %v2880
        %2882 = vdwg.mxu0
        %v2883 = vld [vmem:[#allocation2 + $0x2b8] sm:$0xff]
        %v2884 = vld [vmem:[#allocation2 + $0x2c0] sm:$0xff]
        %v2885 = vld [vmem:[#allocation2 + $0x2c8] sm:$0xff]
        %v2886 = vld [vmem:[#allocation2 + $0x2d0] sm:$0xff]
        %v2887 = vxor.u32 %v2666, 2147483648
        %v2888 = vmul.f32 %v2887, 1.442695
        %v2889 = vpow.pop %v2888
        %v2890 = vadd.f32 %v2889, 1.0
        %v2891 = vrcp.pop %v2890
        %v2892 = vmul.f32 1.0, %v2891
        %v2893 = vtanh.pop %v2666
        %2895 = vrot.lane.b32.xlu0 %v2893, 64
        %v2896 = vpop.permute.xlu0 %2895
        %v2898 = vmul.f32 %v2892, %v2896
        %v2899 = vtanh.pop %v2898
        %2901 = vrot.lane.b32.xlu0 %v2899, 96
        %v2902 = vpop.permute.xlu0 %2901
        %v2904 = vmul.f32 %v2892, %v2902
        %2906 = vrot.lane.b32.xlu0 %v2904, 32
        %v2907 = vpop.permute.xlu0 %2906
        %v2908 = vsel %vm709, %v2907, 0
        %2910 = vmatprep.subr.mxu0 0.0
        %2911 = vmatpush1.msra.mxu0 0.0
        %2912 = vmatprep.subr.mxu0 0.0
        %2913 = vmatpush1.msra.mxu0 0.0
        %2914 = vmatprep.subr.mxu0 0.0
        %2915 = vmatpush1.msra.mxu0 0.0
        %2916 = vmatprep.subr.mxu0 0.0
        %2917 = vmatpush1.msra.mxu0 0.0
        %2918 = vmatprep.subr.mxu0 0.0
        %2919 = vmatpush1.msra.mxu0 0.0
        %2920 = vmatprep.subr.mxu0 0.0
        %2921 = vmatpush1.msra.mxu0 0.0
        %2922 = vmatprep.subr.mxu0 0.0
        %2923 = vmatpush1.msra.mxu0 0.0
        %2924 = vmatprep.subr.mxu0 0.0
        %2925 = vmatpush1.msra.mxu0 0.0
        %2926 = vmatprep.subr.mxu0 0.0
        %2927 = vmatpush1.msra.mxu0 0.0
        %2928 = vmatprep.subr.mxu0 0.0
        %2929 = vmatpush1.msra.mxu0 0.0
        %2930 = vmatprep.subr.mxu0 0.0
        %2931 = vmatpush1.msra.mxu0 0.0
        %2932 = vmatprep.subr.mxu0 0.0
        %2933 = vmatpush1.msra.mxu0 0.0
        %2934 = vmatprep.subr.mxu0 0.0
        %2935 = vmatpush1.msra.mxu0 %v2886
        %2936 = vmatprep.subr.mxu0 0.0
        %2937 = vmatpush1.msra.mxu0 %v2885
        %2938 = vmatprep.subr.mxu0 0.0
        %2939 = vmatpush1.msra.mxu0 %v2884
        %2940 = vmatprep.subr.mxu0 0.0
        %2941 = vmatpush1.msra.mxu0 %v2883
        %2942 = vmatprep.subr.mxu0 0.0
        %2943 = vmatpush2.msra.mxu0 0.0
        %2944 = vmatprep.subr.mxu0 0.0
        %2945 = vmatpush2.msra.mxu0 0.0
        %2946 = vmatprep.subr.mxu0 0.0
        %2947 = vmatpush2.msra.mxu0 0.0
        %2948 = vmatprep.subr.mxu0 0.0
        %2949 = vmatpush2.msra.mxu0 0.0
        %2950 = vmatprep.subr.mxu0 0.0
        %2951 = vmatpush2.msra.mxu0 0.0
        %2952 = vmatprep.subr.mxu0 0.0
        %2953 = vmatpush2.msra.mxu0 0.0
        %2954 = vmatprep.subr.mxu0 0.0
        %2955 = vmatpush2.msra.mxu0 0.0
        %2956 = vmatprep.subr.mxu0 0.0
        %2957 = vmatpush2.msra.mxu0 0.0
        %2958 = vmatprep.subr.mxu0 0.0
        %2959 = vmatpush2.msra.mxu0 0.0
        %2960 = vmatprep.subr.mxu0 0.0
        %2961 = vmatpush2.msra.mxu0 0.0
        %2962 = vmatprep.subr.mxu0 0.0
        %2963 = vmatpush2.msra.mxu0 0.0
        %2964 = vmatprep.subr.mxu0 0.0
        %2965 = vmatpush2.msra.mxu0 0.0
        %2966 = vmatprep.subr.mxu0 0.0
        %2967 = vmatpush2.msra.mxu0 0.0
        %2968 = vmatprep.subr.mxu0 0.0
        %2969 = vmatpush2.msra.mxu0 0.0
        %2970 = vmatprep.subr.mxu0 0.0
        %2971 = vmatpush2.msra.mxu0 0.0
        %2972 = vmatprep.subr.mxu0 0.0
        %2973 = vmatpush2.msra.mxu0 0.0
        %2974 = vmatprep.mubr.f32.mxu0 0.0
        %2975 = vmatmul.mubr.f32.gmra.mxu0 %v2908
        %v2976 = vpop.f32.mrf.mxu0
        %v2977 = vadd.f32 0.0, %v2976
        %v2978 = vpop.f32.mrf.mxu0
        %2979 = vdwg.mxu0
        %v2980 = vadd.f32 %v2668, %v2977
        %v2981 = vxor.u32 %v2980, 2147483648
        %v2982 = vmul.f32 %v2981, 1.442695
        %v2983 = vpow.pop %v2982
        %v2984 = vadd.f32 %v2983, 1.0
        %v2985 = vrcp.pop %v2984
        %v2986 = vmul.f32 1.0, %v2985
        %v2987 = vtanh.pop %v2980
        %2989 = vrot.lane.b32.xlu0 %v2898, 32
        %v2990 = vpop.permute.xlu0 %2989
        %v2992 = vmul.f32 %v2986, %v2990
        %2994 = vrot.lane.b32.xlu0 %v2987, 64
        %v2995 = vpop.permute.xlu0 %2994
        %v2997 = vmul.f32 %v2986, %v2995
        %2999 = vrot.lane.b32.xlu0 %v2997, 32
        %v3000 = vpop.permute.xlu0 %2999
        %v3002 = vadd.f32 %v2992, %v3000
        %v3003 = vtanh.pop %v3002
        %3005 = vrot.lane.b32.xlu0 %v3003, 64
        %v3006 = vpop.permute.xlu0 %3005
        %v3008 = vmul.f32 %v2986, %v3006
        %3010 = vrot.lane.b32.xlu0 %v3008, 32
        %v3011 = vpop.permute.xlu0 %3010
        %v3012 = vsel %vm709, %v3011, 0
        %3014 = vmatprep.subr.mxu0 0.0
        %3015 = vmatpush1.msra.mxu0 0.0
        %3016 = vmatprep.subr.mxu0 0.0
        %3017 = vmatpush1.msra.mxu0 0.0
        %3018 = vmatprep.subr.mxu0 0.0
        %3019 = vmatpush1.msra.mxu0 0.0
        %3020 = vmatprep.subr.mxu0 0.0
        %3021 = vmatpush1.msra.mxu0 0.0
        %3022 = vmatprep.subr.mxu0 0.0
        %3023 = vmatpush1.msra.mxu0 0.0
        %3024 = vmatprep.subr.mxu0 0.0
        %3025 = vmatpush1.msra.mxu0 0.0
        %3026 = vmatprep.subr.mxu0 0.0
        %3027 = vmatpush1.msra.mxu0 0.0
        %3028 = vmatprep.subr.mxu0 0.0
        %3029 = vmatpush1.msra.mxu0 0.0
        %3030 = vmatprep.subr.mxu0 0.0
        %3031 = vmatpush1.msra.mxu0 0.0
        %3032 = vmatprep.subr.mxu0 0.0
        %3033 = vmatpush1.msra.mxu0 0.0
        %3034 = vmatprep.subr.mxu0 0.0
        %3035 = vmatpush1.msra.mxu0 0.0
        %3036 = vmatprep.subr.mxu0 0.0
        %3037 = vmatpush1.msra.mxu0 0.0
        %3038 = vmatprep.subr.mxu0 0.0
        %3039 = vmatpush1.msra.mxu0 %v2886
        %3040 = vmatprep.subr.mxu0 0.0
        %3041 = vmatpush1.msra.mxu0 %v2885
        %3042 = vmatprep.subr.mxu0 0.0
        %3043 = vmatpush1.msra.mxu0 %v2884
        %3044 = vmatprep.subr.mxu0 0.0
        %3045 = vmatpush1.msra.mxu0 %v2883
        %3046 = vmatprep.subr.mxu0 0.0
        %3047 = vmatpush2.msra.mxu0 0.0
        %3048 = vmatprep.subr.mxu0 0.0
        %3049 = vmatpush2.msra.mxu0 0.0
        %3050 = vmatprep.subr.mxu0 0.0
        %3051 = vmatpush2.msra.mxu0 0.0
        %3052 = vmatprep.subr.mxu0 0.0
        %3053 = vmatpush2.msra.mxu0 0.0
        %3054 = vmatprep.subr.mxu0 0.0
        %3055 = vmatpush2.msra.mxu0 0.0
        %3056 = vmatprep.subr.mxu0 0.0
        %3057 = vmatpush2.msra.mxu0 0.0
        %3058 = vmatprep.subr.mxu0 0.0
        %3059 = vmatpush2.msra.mxu0 0.0
        %3060 = vmatprep.subr.mxu0 0.0
        %3061 = vmatpush2.msra.mxu0 0.0
        %3062 = vmatprep.subr.mxu0 0.0
        %3063 = vmatpush2.msra.mxu0 0.0
        %3064 = vmatprep.subr.mxu0 0.0
        %3065 = vmatpush2.msra.mxu0 0.0
        %3066 = vmatprep.subr.mxu0 0.0
        %3067 = vmatpush2.msra.mxu0 0.0
        %3068 = vmatprep.subr.mxu0 0.0
        %3069 = vmatpush2.msra.mxu0 0.0
        %3070 = vmatprep.subr.mxu0 0.0
        %3071 = vmatpush2.msra.mxu0 0.0
        %3072 = vmatprep.subr.mxu0 0.0
        %3073 = vmatpush2.msra.mxu0 0.0
        %3074 = vmatprep.subr.mxu0 0.0
        %3075 = vmatpush2.msra.mxu0 0.0
        %3076 = vmatprep.subr.mxu0 0.0
        %3077 = vmatpush2.msra.mxu0 0.0
        %3078 = vmatprep.mubr.f32.mxu0 0.0
        %3079 = vmatmul.mubr.f32.gmra.mxu0 %v3012
        %v3080 = vpop.f32.mrf.mxu0
        %v3081 = vadd.f32 0.0, %v3080
        %v3082 = vpop.f32.mrf.mxu0
        %3083 = vdwg.mxu0
        %v3084 = vadd.f32 %v2737, %v3081
        %v3085 = vxor.u32 %v3084, 2147483648
        %v3086 = vmul.f32 %v3085, 1.442695
        %v3087 = vpow.pop %v3086
        %v3088 = vadd.f32 %v3087, 1.0
        %v3089 = vrcp.pop %v3088
        %v3090 = vmul.f32 1.0, %v3089
        %v3091 = vtanh.pop %v3084
        %v3092 = vmul.f32 %v3090, %v3002
        %3094 = vrot.lane.b32.xlu0 %v3091, 64
        %v3095 = vpop.permute.xlu0 %3094
        %v3097 = vmul.f32 %v3090, %v3095
        %3099 = vrot.lane.b32.xlu0 %v3097, 32
        %v3100 = vpop.permute.xlu0 %3099
        %v3102 = vadd.f32 %v3092, %v3100
        %v3103 = vtanh.pop %v3102
        %3105 = vrot.lane.b32.xlu0 %v3103, 64
        %v3106 = vpop.permute.xlu0 %3105
        %v3108 = vmul.f32 %v3090, %v3106
        %3110 = vrot.lane.b32.xlu0 %v3108, 32
        %v3111 = vpop.permute.xlu0 %3110
        %v3112 = vsel %vm709, %v3111, 0
        %3114 = vmatprep.subr.mxu0 0.0
        %3115 = vmatpush1.msra.mxu0 0.0
        %3116 = vmatprep.subr.mxu0 0.0
        %3117 = vmatpush1.msra.mxu0 0.0
        %3118 = vmatprep.subr.mxu0 0.0
        %3119 = vmatpush1.msra.mxu0 0.0
        %3120 = vmatprep.subr.mxu0 0.0
        %3121 = vmatpush1.msra.mxu0 0.0
        %3122 = vmatprep.subr.mxu0 0.0
        %3123 = vmatpush1.msra.mxu0 0.0
        %3124 = vmatprep.subr.mxu0 0.0
        %3125 = vmatpush1.msra.mxu0 0.0
        %3126 = vmatprep.subr.mxu0 0.0
        %3127 = vmatpush1.msra.mxu0 0.0
        %3128 = vmatprep.subr.mxu0 0.0
        %3129 = vmatpush1.msra.mxu0 0.0
        %3130 = vmatprep.subr.mxu0 0.0
        %3131 = vmatpush1.msra.mxu0 0.0
        %3132 = vmatprep.subr.mxu0 0.0
        %3133 = vmatpush1.msra.mxu0 0.0
        %3134 = vmatprep.subr.mxu0 0.0
        %3135 = vmatpush1.msra.mxu0 0.0
        %3136 = vmatprep.subr.mxu0 0.0
        %3137 = vmatpush1.msra.mxu0 0.0
        %3138 = vmatprep.subr.mxu0 0.0
        %3139 = vmatpush1.msra.mxu0 %v2886
        %3140 = vmatprep.subr.mxu0 0.0
        %3141 = vmatpush1.msra.mxu0 %v2885
        %3142 = vmatprep.subr.mxu0 0.0
        %3143 = vmatpush1.msra.mxu0 %v2884
        %3144 = vmatprep.subr.mxu0 0.0
        %3145 = vmatpush1.msra.mxu0 %v2883
        %3146 = vmatprep.subr.mxu0 0.0
        %3147 = vmatpush2.msra.mxu0 0.0
        %3148 = vmatprep.subr.mxu0 0.0
        %3149 = vmatpush2.msra.mxu0 0.0
        %3150 = vmatprep.subr.mxu0 0.0
        %3151 = vmatpush2.msra.mxu0 0.0
        %3152 = vmatprep.subr.mxu0 0.0
        %3153 = vmatpush2.msra.mxu0 0.0
        %3154 = vmatprep.subr.mxu0 0.0
        %3155 = vmatpush2.msra.mxu0 0.0
        %3156 = vmatprep.subr.mxu0 0.0
        %3157 = vmatpush2.msra.mxu0 0.0
        %3158 = vmatprep.subr.mxu0 0.0
        %3159 = vmatpush2.msra.mxu0 0.0
        %3160 = vmatprep.subr.mxu0 0.0
        %3161 = vmatpush2.msra.mxu0 0.0
        %3162 = vmatprep.subr.mxu0 0.0
        %3163 = vmatpush2.msra.mxu0 0.0
        %3164 = vmatprep.subr.mxu0 0.0
        %3165 = vmatpush2.msra.mxu0 0.0
        %3166 = vmatprep.subr.mxu0 0.0
        %3167 = vmatpush2.msra.mxu0 0.0
        %3168 = vmatprep.subr.mxu0 0.0
        %3169 = vmatpush2.msra.mxu0 0.0
        %3170 = vmatprep.subr.mxu0 0.0
        %3171 = vmatpush2.msra.mxu0 0.0
        %3172 = vmatprep.subr.mxu0 0.0
        %3173 = vmatpush2.msra.mxu0 0.0
        %3174 = vmatprep.subr.mxu0 0.0
        %3175 = vmatpush2.msra.mxu0 0.0
        %3176 = vmatprep.subr.mxu0 0.0
        %3177 = vmatpush2.msra.mxu0 0.0
        %3178 = vmatprep.mubr.f32.mxu0 0.0
        %3179 = vmatmul.mubr.f32.gmra.mxu0 %v3112
        %v3180 = vpop.f32.mrf.mxu0
        %v3181 = vadd.f32 0.0, %v3180
        %v3182 = vpop.f32.mrf.mxu0
        %3183 = vdwg.mxu0
        %v3184 = vadd.f32 %v2739, %v3181
        %v3185 = vxor.u32 %v3184, 2147483648
        %v3186 = vmul.f32 %v3185, 1.442695
        %v3187 = vpow.pop %v3186
        %v3188 = vadd.f32 %v3187, 1.0
        %v3189 = vrcp.pop %v3188
        %v3190 = vmul.f32 1.0, %v3189
        %v3191 = vtanh.pop %v3184
        %v3192 = vmul.f32 %v3190, %v3102
        %3194 = vrot.lane.b32.xlu0 %v3191, 64
        %v3195 = vpop.permute.xlu0 %3194
        %v3197 = vmul.f32 %v3190, %v3195
        %3199 = vrot.lane.b32.xlu0 %v3197, 32
        %v3200 = vpop.permute.xlu0 %3199
        %v3202 = vadd.f32 %v3192, %v3200
        %v3203 = vtanh.pop %v3202
        %3205 = vrot.lane.b32.xlu0 %v3203, 64
        %v3206 = vpop.permute.xlu0 %3205
        %v3208 = vmul.f32 %v3190, %v3206
        %3210 = vrot.lane.b32.xlu0 %v3208, 32
        %v3211 = vpop.permute.xlu0 %3210
        %v3212 = vsel %vm709, %v3211, 0
        %3214 = vmatprep.subr.mxu0 0.0
        %3215 = vmatpush1.msra.mxu0 0.0
        %3216 = vmatprep.subr.mxu0 0.0
        %3217 = vmatpush1.msra.mxu0 0.0
        %3218 = vmatprep.subr.mxu0 0.0
        %3219 = vmatpush1.msra.mxu0 0.0
        %3220 = vmatprep.subr.mxu0 0.0
        %3221 = vmatpush1.msra.mxu0 0.0
        %3222 = vmatprep.subr.mxu0 0.0
        %3223 = vmatpush1.msra.mxu0 0.0
        %3224 = vmatprep.subr.mxu0 0.0
        %3225 = vmatpush1.msra.mxu0 0.0
        %3226 = vmatprep.subr.mxu0 0.0
        %3227 = vmatpush1.msra.mxu0 0.0
        %3228 = vmatprep.subr.mxu0 0.0
        %3229 = vmatpush1.msra.mxu0 0.0
        %3230 = vmatprep.subr.mxu0 0.0
        %3231 = vmatpush1.msra.mxu0 0.0
        %3232 = vmatprep.subr.mxu0 0.0
        %3233 = vmatpush1.msra.mxu0 0.0
        %3234 = vmatprep.subr.mxu0 0.0
        %3235 = vmatpush1.msra.mxu0 0.0
        %3236 = vmatprep.subr.mxu0 0.0
        %3237 = vmatpush1.msra.mxu0 0.0
        %3238 = vmatprep.subr.mxu0 0.0
        %3239 = vmatpush1.msra.mxu0 %v2886
        %3240 = vmatprep.subr.mxu0 0.0
        %3241 = vmatpush1.msra.mxu0 %v2885
        %3242 = vmatprep.subr.mxu0 0.0
        %3243 = vmatpush1.msra.mxu0 %v2884
        %3244 = vmatprep.subr.mxu0 0.0
        %3245 = vmatpush1.msra.mxu0 %v2883
        %3246 = vmatprep.subr.mxu0 0.0
        %3247 = vmatpush2.msra.mxu0 0.0
        %3248 = vmatprep.subr.mxu0 0.0
        %3249 = vmatpush2.msra.mxu0 0.0
        %3250 = vmatprep.subr.mxu0 0.0
        %3251 = vmatpush2.msra.mxu0 0.0
        %3252 = vmatprep.subr.mxu0 0.0
        %3253 = vmatpush2.msra.mxu0 0.0
        %3254 = vmatprep.subr.mxu0 0.0
        %3255 = vmatpush2.msra.mxu0 0.0
        %3256 = vmatprep.subr.mxu0 0.0
        %3257 = vmatpush2.msra.mxu0 0.0
        %3258 = vmatprep.subr.mxu0 0.0
        %3259 = vmatpush2.msra.mxu0 0.0
        %3260 = vmatprep.subr.mxu0 0.0
        %3261 = vmatpush2.msra.mxu0 0.0
        %3262 = vmatprep.subr.mxu0 0.0
        %3263 = vmatpush2.msra.mxu0 0.0
        %3264 = vmatprep.subr.mxu0 0.0
        %3265 = vmatpush2.msra.mxu0 0.0
        %3266 = vmatprep.subr.mxu0 0.0
        %3267 = vmatpush2.msra.mxu0 0.0
        %3268 = vmatprep.subr.mxu0 0.0
        %3269 = vmatpush2.msra.mxu0 0.0
        %3270 = vmatprep.subr.mxu0 0.0
        %3271 = vmatpush2.msra.mxu0 0.0
        %3272 = vmatprep.subr.mxu0 0.0
        %3273 = vmatpush2.msra.mxu0 0.0
        %3274 = vmatprep.subr.mxu0 0.0
        %3275 = vmatpush2.msra.mxu0 0.0
        %3276 = vmatprep.subr.mxu0 0.0
        %3277 = vmatpush2.msra.mxu0 0.0
        %3278 = vmatprep.mubr.f32.mxu0 0.0
        %3279 = vmatmul.mubr.f32.gmra.mxu0 %v3212
        %v3280 = vpop.f32.mrf.mxu0
        %v3281 = vadd.f32 0.0, %v3280
        %v3282 = vpop.f32.mrf.mxu0
        %3283 = vdwg.mxu0
        %v3284 = vadd.f32 %v2808, %v3281
        %v3285 = vxor.u32 %v3284, 2147483648
        %v3286 = vmul.f32 %v3285, 1.442695
        %v3287 = vpow.pop %v3286
        %v3288 = vadd.f32 %v3287, 1.0
        %v3289 = vrcp.pop %v3288
        %v3290 = vmul.f32 1.0, %v3289
        %v3291 = vtanh.pop %v3284
        %v3292 = vmul.f32 %v3290, %v3202
        %3294 = vrot.lane.b32.xlu0 %v3291, 64
        %v3295 = vpop.permute.xlu0 %3294
        %v3297 = vmul.f32 %v3290, %v3295
        %3299 = vrot.lane.b32.xlu0 %v3297, 32
        %v3300 = vpop.permute.xlu0 %3299
        %v3302 = vadd.f32 %v3292, %v3300
        %v3303 = vtanh.pop %v3302
        %3305 = vrot.lane.b32.xlu0 %v3303, 64
        %v3306 = vpop.permute.xlu0 %3305
        %v3308 = vmul.f32 %v3290, %v3306
        %3310 = vrot.lane.b32.xlu0 %v3308, 32
        %v3311 = vpop.permute.xlu0 %3310
        %v3312 = vsel %vm709, %v3311, 0
        %3314 = vmatprep.subr.mxu0 0.0
        %3315 = vmatpush1.msra.mxu0 0.0
        %3316 = vmatprep.subr.mxu0 0.0
        %3317 = vmatpush1.msra.mxu0 0.0
        %3318 = vmatprep.subr.mxu0 0.0
        %3319 = vmatpush1.msra.mxu0 0.0
        %3320 = vmatprep.subr.mxu0 0.0
        %3321 = vmatpush1.msra.mxu0 0.0
        %3322 = vmatprep.subr.mxu0 0.0
        %3323 = vmatpush1.msra.mxu0 0.0
        %3324 = vmatprep.subr.mxu0 0.0
        %3325 = vmatpush1.msra.mxu0 0.0
        %3326 = vmatprep.subr.mxu0 0.0
        %3327 = vmatpush1.msra.mxu0 0.0
        %3328 = vmatprep.subr.mxu0 0.0
        %3329 = vmatpush1.msra.mxu0 0.0
        %3330 = vmatprep.subr.mxu0 0.0
        %3331 = vmatpush1.msra.mxu0 0.0
        %3332 = vmatprep.subr.mxu0 0.0
        %3333 = vmatpush1.msra.mxu0 0.0
        %3334 = vmatprep.subr.mxu0 0.0
        %3335 = vmatpush1.msra.mxu0 0.0
        %3336 = vmatprep.subr.mxu0 0.0
        %3337 = vmatpush1.msra.mxu0 0.0
        %3338 = vmatprep.subr.mxu0 0.0
        %3339 = vmatpush1.msra.mxu0 %v2886
        %3340 = vmatprep.subr.mxu0 0.0
        %3341 = vmatpush1.msra.mxu0 %v2885
        %3342 = vmatprep.subr.mxu0 0.0
        %3343 = vmatpush1.msra.mxu0 %v2884
        %3344 = vmatprep.subr.mxu0 0.0
        %3345 = vmatpush1.msra.mxu0 %v2883
        %3346 = vmatprep.subr.mxu0 0.0
        %3347 = vmatpush2.msra.mxu0 0.0
        %3348 = vmatprep.subr.mxu0 0.0
        %3349 = vmatpush2.msra.mxu0 0.0
        %3350 = vmatprep.subr.mxu0 0.0
        %3351 = vmatpush2.msra.mxu0 0.0
        %3352 = vmatprep.subr.mxu0 0.0
        %3353 = vmatpush2.msra.mxu0 0.0
        %3354 = vmatprep.subr.mxu0 0.0
        %3355 = vmatpush2.msra.mxu0 0.0
        %3356 = vmatprep.subr.mxu0 0.0
        %3357 = vmatpush2.msra.mxu0 0.0
        %3358 = vmatprep.subr.mxu0 0.0
        %3359 = vmatpush2.msra.mxu0 0.0
        %3360 = vmatprep.subr.mxu0 0.0
        %3361 = vmatpush2.msra.mxu0 0.0
        %3362 = vmatprep.subr.mxu0 0.0
        %3363 = vmatpush2.msra.mxu0 0.0
        %3364 = vmatprep.subr.mxu0 0.0
        %3365 = vmatpush2.msra.mxu0 0.0
        %3366 = vmatprep.subr.mxu0 0.0
        %3367 = vmatpush2.msra.mxu0 0.0
        %3368 = vmatprep.subr.mxu0 0.0
        %3369 = vmatpush2.msra.mxu0 0.0
        %3370 = vmatprep.subr.mxu0 0.0
        %3371 = vmatpush2.msra.mxu0 0.0
        %3372 = vmatprep.subr.mxu0 0.0
        %3373 = vmatpush2.msra.mxu0 0.0
        %3374 = vmatprep.subr.mxu0 0.0
        %3375 = vmatpush2.msra.mxu0 0.0
        %3376 = vmatprep.subr.mxu0 0.0
        %3377 = vmatpush2.msra.mxu0 0.0
        %3378 = vmatprep.mubr.f32.mxu0 0.0
        %3379 = vmatmul.mubr.f32.gmra.mxu0 %v3312
        %v3380 = vpop.f32.mrf.mxu0
        %v3381 = vadd.f32 0.0, %v3380
        %v3382 = vpop.f32.mrf.mxu0
        %3383 = vdwg.mxu0
        %v3384 = vadd.f32 %v2810, %v3381
        %v3385 = vxor.u32 %v3384, 2147483648
        %v3386 = vmul.f32 %v3385, 1.442695
        %v3387 = vpow.pop %v3386
        %v3388 = vadd.f32 %v3387, 1.0
        %v3389 = vrcp.pop %v3388
        %v3390 = vmul.f32 1.0, %v3389
        %v3391 = vtanh.pop %v3384
        %v3392 = vmul.f32 %v3390, %v3302
        %3394 = vrot.lane.b32.xlu0 %v3391, 64
        %v3395 = vpop.permute.xlu0 %3394
        %v3397 = vmul.f32 %v3390, %v3395
        %3399 = vrot.lane.b32.xlu0 %v3397, 32
        %v3400 = vpop.permute.xlu0 %3399
        %v3402 = vadd.f32 %v3392, %v3400
        %v3403 = vtanh.pop %v3402
        %3405 = vrot.lane.b32.xlu0 %v3403, 64
        %v3406 = vpop.permute.xlu0 %3405
        %v3408 = vmul.f32 %v3390, %v3406
        %3410 = vrot.lane.b32.xlu0 %v3408, 32
        %v3411 = vpop.permute.xlu0 %3410
        %v3412 = vsel %vm709, %v3411, 0
        %3414 = vmatprep.subr.mxu0 0.0
        %3415 = vmatpush1.msra.mxu0 0.0
        %3416 = vmatprep.subr.mxu0 0.0
        %3417 = vmatpush1.msra.mxu0 0.0
        %3418 = vmatprep.subr.mxu0 0.0
        %3419 = vmatpush1.msra.mxu0 0.0
        %3420 = vmatprep.subr.mxu0 0.0
        %3421 = vmatpush1.msra.mxu0 0.0
        %3422 = vmatprep.subr.mxu0 0.0
        %3423 = vmatpush1.msra.mxu0 0.0
        %3424 = vmatprep.subr.mxu0 0.0
        %3425 = vmatpush1.msra.mxu0 0.0
        %3426 = vmatprep.subr.mxu0 0.0
        %3427 = vmatpush1.msra.mxu0 0.0
        %3428 = vmatprep.subr.mxu0 0.0
        %3429 = vmatpush1.msra.mxu0 0.0
        %3430 = vmatprep.subr.mxu0 0.0
        %3431 = vmatpush1.msra.mxu0 0.0
        %3432 = vmatprep.subr.mxu0 0.0
        %3433 = vmatpush1.msra.mxu0 0.0
        %3434 = vmatprep.subr.mxu0 0.0
        %3435 = vmatpush1.msra.mxu0 0.0
        %3436 = vmatprep.subr.mxu0 0.0
        %3437 = vmatpush1.msra.mxu0 0.0
        %3438 = vmatprep.subr.mxu0 0.0
        %3439 = vmatpush1.msra.mxu0 %v2886
        %3440 = vmatprep.subr.mxu0 0.0
        %3441 = vmatpush1.msra.mxu0 %v2885
        %3442 = vmatprep.subr.mxu0 0.0
        %3443 = vmatpush1.msra.mxu0 %v2884
        %3444 = vmatprep.subr.mxu0 0.0
        %3445 = vmatpush1.msra.mxu0 %v2883
        %3446 = vmatprep.subr.mxu0 0.0
        %3447 = vmatpush2.msra.mxu0 0.0
        %3448 = vmatprep.subr.mxu0 0.0
        %3449 = vmatpush2.msra.mxu0 0.0
        %3450 = vmatprep.subr.mxu0 0.0
        %3451 = vmatpush2.msra.mxu0 0.0
        %3452 = vmatprep.subr.mxu0 0.0
        %3453 = vmatpush2.msra.mxu0 0.0
        %3454 = vmatprep.subr.mxu0 0.0
        %3455 = vmatpush2.msra.mxu0 0.0
        %3456 = vmatprep.subr.mxu0 0.0
        %3457 = vmatpush2.msra.mxu0 0.0
        %3458 = vmatprep.subr.mxu0 0.0
        %3459 = vmatpush2.msra.mxu0 0.0
        %3460 = vmatprep.subr.mxu0 0.0
        %3461 = vmatpush2.msra.mxu0 0.0
        %3462 = vmatprep.subr.mxu0 0.0
        %3463 = vmatpush2.msra.mxu0 0.0
        %3464 = vmatprep.subr.mxu0 0.0
        %3465 = vmatpush2.msra.mxu0 0.0
        %3466 = vmatprep.subr.mxu0 0.0
        %3467 = vmatpush2.msra.mxu0 0.0
        %3468 = vmatprep.subr.mxu0 0.0
        %3469 = vmatpush2.msra.mxu0 0.0
        %3470 = vmatprep.subr.mxu0 0.0
        %3471 = vmatpush2.msra.mxu0 0.0
        %3472 = vmatprep.subr.mxu0 0.0
        %3473 = vmatpush2.msra.mxu0 0.0
        %3474 = vmatprep.subr.mxu0 0.0
        %3475 = vmatpush2.msra.mxu0 0.0
        %3476 = vmatprep.subr.mxu0 0.0
        %3477 = vmatpush2.msra.mxu0 0.0
        %3478 = vmatprep.mubr.f32.mxu0 0.0
        %3479 = vmatmul.mubr.f32.gmra.mxu0 %v3412
        %v3480 = vpop.f32.mrf.mxu0
        %v3481 = vadd.f32 0.0, %v3480
        %v3482 = vpop.f32.mrf.mxu0
        %3483 = vdwg.mxu0
        %v3484 = vadd.f32 %v2879, %v3481
        %v3485 = vxor.u32 %v3484, 2147483648
        %v3486 = vmul.f32 %v3485, 1.442695
        %v3487 = vpow.pop %v3486
        %v3488 = vadd.f32 %v3487, 1.0
        %v3489 = vrcp.pop %v3488
        %v3490 = vmul.f32 1.0, %v3489
        %v3491 = vtanh.pop %v3484
        %v3492 = vmul.f32 %v3490, %v3402
        %3494 = vrot.lane.b32.xlu0 %v3491, 64
        %v3495 = vpop.permute.xlu0 %3494
        %v3497 = vmul.f32 %v3490, %v3495
        %3499 = vrot.lane.b32.xlu0 %v3497, 32
        %v3500 = vpop.permute.xlu0 %3499
        %v3502 = vadd.f32 %v3492, %v3500
        %v3503 = vtanh.pop %v3502
        %3505 = vrot.lane.b32.xlu0 %v3503, 64
        %v3506 = vpop.permute.xlu0 %3505
        %v3508 = vmul.f32 %v3490, %v3506
        %3510 = vrot.lane.b32.xlu0 %v3508, 32
        %v3511 = vpop.permute.xlu0 %3510
        %v3512 = vsel %vm709, %v3511, 0
        %3514 = vmatprep.subr.mxu0 0.0
        %3515 = vmatpush1.msra.mxu0 0.0
        %3516 = vmatprep.subr.mxu0 0.0
        %3517 = vmatpush1.msra.mxu0 0.0
        %3518 = vmatprep.subr.mxu0 0.0
        %3519 = vmatpush1.msra.mxu0 0.0
        %3520 = vmatprep.subr.mxu0 0.0
        %3521 = vmatpush1.msra.mxu0 0.0
        %3522 = vmatprep.subr.mxu0 0.0
        %3523 = vmatpush1.msra.mxu0 0.0
        %3524 = vmatprep.subr.mxu0 0.0
        %3525 = vmatpush1.msra.mxu0 0.0
        %3526 = vmatprep.subr.mxu0 0.0
        %3527 = vmatpush1.msra.mxu0 0.0
        %3528 = vmatprep.subr.mxu0 0.0
        %3529 = vmatpush1.msra.mxu0 0.0
        %3530 = vmatprep.subr.mxu0 0.0
        %3531 = vmatpush1.msra.mxu0 0.0
        %3532 = vmatprep.subr.mxu0 0.0
        %3533 = vmatpush1.msra.mxu0 0.0
        %3534 = vmatprep.subr.mxu0 0.0
        %3535 = vmatpush1.msra.mxu0 0.0
        %3536 = vmatprep.subr.mxu0 0.0
        %3537 = vmatpush1.msra.mxu0 0.0
        %3538 = vmatprep.subr.mxu0 0.0
        %3539 = vmatpush1.msra.mxu0 %v2886
        %3540 = vmatprep.subr.mxu0 0.0
        %3541 = vmatpush1.msra.mxu0 %v2885
        %3542 = vmatprep.subr.mxu0 0.0
        %3543 = vmatpush1.msra.mxu0 %v2884
        %3544 = vmatprep.subr.mxu0 0.0
        %3545 = vmatpush1.msra.mxu0 %v2883
        %3546 = vmatprep.subr.mxu0 0.0
        %3547 = vmatpush2.msra.mxu0 0.0
        %3548 = vmatprep.subr.mxu0 0.0
        %3549 = vmatpush2.msra.mxu0 0.0
        %3550 = vmatprep.subr.mxu0 0.0
        %3551 = vmatpush2.msra.mxu0 0.0
        %3552 = vmatprep.subr.mxu0 0.0
        %3553 = vmatpush2.msra.mxu0 0.0
        %3554 = vmatprep.subr.mxu0 0.0
        %3555 = vmatpush2.msra.mxu0 0.0
        %3556 = vmatprep.subr.mxu0 0.0
        %3557 = vmatpush2.msra.mxu0 0.0
        %3558 = vmatprep.subr.mxu0 0.0
        %3559 = vmatpush2.msra.mxu0 0.0
        %3560 = vmatprep.subr.mxu0 0.0
        %3561 = vmatpush2.msra.mxu0 0.0
        %3562 = vmatprep.subr.mxu0 0.0
        %3563 = vmatpush2.msra.mxu0 0.0
        %3564 = vmatprep.subr.mxu0 0.0
        %3565 = vmatpush2.msra.mxu0 0.0
        %3566 = vmatprep.subr.mxu0 0.0
        %3567 = vmatpush2.msra.mxu0 0.0
        %3568 = vmatprep.subr.mxu0 0.0
        %3569 = vmatpush2.msra.mxu0 0.0
        %3570 = vmatprep.subr.mxu0 0.0
        %3571 = vmatpush2.msra.mxu0 0.0
        %3572 = vmatprep.subr.mxu0 0.0
        %3573 = vmatpush2.msra.mxu0 0.0
        %3574 = vmatprep.subr.mxu0 0.0
        %3575 = vmatpush2.msra.mxu0 0.0
        %3576 = vmatprep.subr.mxu0 0.0
        %3577 = vmatpush2.msra.mxu0 0.0
        %3578 = vmatprep.mubr.f32.mxu0 0.0
        %3579 = vmatmul.mubr.f32.gmra.mxu0 %v3512
        %v3580 = vpop.f32.mrf.mxu0
        %v3581 = vadd.f32 0.0, %v3580
        %v3582 = vpop.f32.mrf.mxu0
        %3583 = vdwg.mxu0
        %v3584 = vadd.f32 %v2881, %v3581
        %v3585 = vxor.u32 %v3584, 2147483648
        %v3586 = vmul.f32 %v3585, 1.442695
        %v3587 = vpow.pop %v3586
        %v3588 = vadd.f32 %v3587, 1.0
        %v3589 = vrcp.pop %v3588
        %v3590 = vmul.f32 1.0, %v3589
        %v3591 = vtanh.pop %v3584
        %v3592 = vmul.f32 %v3590, %v3502
        %3594 = vrot.lane.b32.xlu0 %v3591, 64
        %v3595 = vpop.permute.xlu0 %3594
        %v3597 = vmul.f32 %v3590, %v3595
        %3599 = vrot.lane.b32.xlu0 %v3597, 32
        %v3600 = vpop.permute.xlu0 %3599
        %v3602 = vadd.f32 %v3592, %v3600
        %v3603 = vtanh.pop %v3602
        %3605 = vrot.lane.b32.xlu0 %v3603, 64
        %v3606 = vpop.permute.xlu0 %3605
        %v3608 = vmul.f32 %v3590, %v3606
        %v3609 = vrot.slane %v3008, 7
        %v3611 = vrot.slane %v3108, 6
        %v3613 = vrot.slane %v3208, 5
        %v3615 = vrot.slane %v3308, 4
        %v3617 = vrot.slane %v3408, 3
        %v3619 = vrot.slane %v3508, 2
        %v3622 = vrot.slane %v3608, 1
        %v3624 = vsel %vm203, %v2904, %v3609
        %vm3625 = vcmask 1041408
        %v3626 = vsel %vm3625, %v3624, %v3611
        %vm3627 = vcmask 1042432
        %v3628 = vsel %vm3627, %v3626, %v3613
        %v3629 = vsel %vm209, %v3628, %v3615
        %vm3630 = vcmask 1044480
        %v3631 = vsel %vm3630, %v3629, %v3617
        %vm3632 = vcmask 1045504
        %v3633 = vsel %vm3632, %v3631, %v3619
        %v3634 = vsel %vm360, %v3633, %v3622
        %v3635 = vld [vmem:[#allocation2 + $0x2d8] sm:$0xff]
        %v3636 = vld [vmem:[#allocation2 + $0x2e0] sm:$0xff]
        %v3637 = vld [vmem:[#allocation2 + $0x2e8] sm:$0xff]
        %v3638 = vld [vmem:[#allocation2 + $0x2f0] sm:$0xff]
        %v3639 = vld [vmem:[#allocation2 + $0x2f8] sm:$0x1]
        %v3640 = vlaneseq
        %v3641 = vshrl.u32 %v3640, 7
        %v3642 = vsub.s32 0, %v3641
        %v3643 = vrot.slane %v3639, %v3642
        %3645 = vrot.lane.b32.xlu0 %v3634, 32
        %v3646 = vpop.permute.xlu0 %3645
        %v3647 = vsel %vm709, %v3646, 0
        %3649 = vmatprep.subr.mxu0 0.0
        %3650 = vmatpush1.msra.mxu0 0.0
        %3651 = vmatprep.subr.mxu0 0.0
        %3652 = vmatpush1.msra.mxu0 0.0
        %3653 = vmatprep.subr.mxu0 0.0
        %3654 = vmatpush1.msra.mxu0 0.0
        %3655 = vmatprep.subr.mxu0 0.0
        %3656 = vmatpush1.msra.mxu0 0.0
        %3657 = vmatprep.subr.mxu0 0.0
        %3658 = vmatpush1.msra.mxu0 0.0
        %3659 = vmatprep.subr.mxu0 0.0
        %3660 = vmatpush1.msra.mxu0 0.0
        %3661 = vmatprep.subr.mxu0 0.0
        %3662 = vmatpush1.msra.mxu0 0.0
        %3663 = vmatprep.subr.mxu0 0.0
        %3664 = vmatpush1.msra.mxu0 0.0
        %3665 = vmatprep.subr.mxu0 0.0
        %3666 = vmatpush1.msra.mxu0 0.0
        %3667 = vmatprep.subr.mxu0 0.0
        %3668 = vmatpush1.msra.mxu0 0.0
        %3669 = vmatprep.subr.mxu0 0.0
        %3670 = vmatpush1.msra.mxu0 0.0
        %3671 = vmatprep.subr.mxu0 0.0
        %3672 = vmatpush1.msra.mxu0 0.0
        %3673 = vmatprep.subr.mxu0 0.0
        %3674 = vmatpush1.msra.mxu0 %v3638
        %3675 = vmatprep.subr.mxu0 0.0
        %3676 = vmatpush1.msra.mxu0 %v3637
        %3677 = vmatprep.subr.mxu0 0.0
        %3678 = vmatpush1.msra.mxu0 %v3636
        %3679 = vmatprep.subr.mxu0 0.0
        %3680 = vmatpush1.msra.mxu0 %v3635
        %3681 = vmatprep.subr.mxu0 0.0
        %3682 = vmatpush2.msra.mxu0 0.0
        %3683 = vmatprep.subr.mxu0 0.0
        %3684 = vmatpush2.msra.mxu0 0.0
        %3685 = vmatprep.subr.mxu0 0.0
        %3686 = vmatpush2.msra.mxu0 0.0
        %3687 = vmatprep.subr.mxu0 0.0
        %3688 = vmatpush2.msra.mxu0 0.0
        %3689 = vmatprep.subr.mxu0 0.0
        %3690 = vmatpush2.msra.mxu0 0.0
        %3691 = vmatprep.subr.mxu0 0.0
        %3692 = vmatpush2.msra.mxu0 0.0
        %3693 = vmatprep.subr.mxu0 0.0
        %3694 = vmatpush2.msra.mxu0 0.0
        %3695 = vmatprep.subr.mxu0 0.0
        %3696 = vmatpush2.msra.mxu0 0.0
        %3697 = vmatprep.subr.mxu0 0.0
        %3698 = vmatpush2.msra.mxu0 0.0
        %3699 = vmatprep.subr.mxu0 0.0
        %3700 = vmatpush2.msra.mxu0 0.0
        %3701 = vmatprep.subr.mxu0 0.0
        %3702 = vmatpush2.msra.mxu0 0.0
        %3703 = vmatprep.subr.mxu0 0.0
        %3704 = vmatpush2.msra.mxu0 0.0
        %3705 = vmatprep.subr.mxu0 0.0
        %3706 = vmatpush2.msra.mxu0 0.0
        %3707 = vmatprep.subr.mxu0 0.0
        %3708 = vmatpush2.msra.mxu0 0.0
        %3709 = vmatprep.subr.mxu0 0.0
        %3710 = vmatpush2.msra.mxu0 0.0
        %3711 = vmatprep.subr.mxu0 0.0
        %3712 = vmatpush2.msra.mxu0 0.0
        %3713 = vmatprep.mubr.f32.mxu0 0.0
        %3714 = vmatmul.mubr.f32.gmra.mxu0 %v3647
        %v3715 = vpop.f32.mrf.mxu0
        %v3716 = vadd.f32 %v3643, %v3715
        %v3717 = vpop.f32.mrf.mxu0
        %3718 = vdwg.mxu0
        %v3719 = vmax.f32 %v3716, 0.0
        %v3720 = vld [vmem:[#allocation2 + $0x300] sm:$0xff]
        %v3721 = vld [vmem:[#allocation2 + $0x308] sm:$0xff]
        %v3722 = vld [vmem:[#allocation2 + $0x310] sm:$0x1]
        %v3723 = vlaneseq
        %v3724 = vshrl.u32 %v3723, 7
        %v3725 = vsub.s32 0, %v3724
        %v3726 = vrot.slane %v3722, %v3725
        %v3728 = vsel %vm456, %v3719, 0
        %3730 = vmatprep.subr.mxu0 0.0
        %3731 = vmatpush1.msra.mxu0 0.0
        %3732 = vmatprep.subr.mxu0 0.0
        %3733 = vmatpush1.msra.mxu0 0.0
        %3734 = vmatprep.subr.mxu0 0.0
        %3735 = vmatpush1.msra.mxu0 0.0
        %3736 = vmatprep.subr.mxu0 0.0
        %3737 = vmatpush1.msra.mxu0 0.0
        %3738 = vmatprep.subr.mxu0 0.0
        %3739 = vmatpush1.msra.mxu0 0.0
        %3740 = vmatprep.subr.mxu0 0.0
        %3741 = vmatpush1.msra.mxu0 0.0
        %3742 = vmatprep.subr.mxu0 0.0
        %3743 = vmatpush1.msra.mxu0 0.0
        %3744 = vmatprep.subr.mxu0 0.0
        %3745 = vmatpush1.msra.mxu0 0.0
        %3746 = vmatprep.subr.mxu0 0.0
        %3747 = vmatpush1.msra.mxu0 0.0
        %3748 = vmatprep.subr.mxu0 0.0
        %3749 = vmatpush1.msra.mxu0 0.0
        %3750 = vmatprep.subr.mxu0 0.0
        %3751 = vmatpush1.msra.mxu0 0.0
        %3752 = vmatprep.subr.mxu0 0.0
        %3753 = vmatpush1.msra.mxu0 0.0
        %3754 = vmatprep.subr.mxu0 0.0
        %3755 = vmatpush1.msra.mxu0 0.0
        %3756 = vmatprep.subr.mxu0 0.0
        %3757 = vmatpush1.msra.mxu0 0.0
        %3758 = vmatprep.subr.mxu0 0.0
        %3759 = vmatpush1.msra.mxu0 %v3721
        %3760 = vmatprep.subr.mxu0 0.0
        %3761 = vmatpush1.msra.mxu0 %v3720
        %3762 = vmatprep.subr.mxu0 0.0
        %3763 = vmatpush2.msra.mxu0 0.0
        %3764 = vmatprep.subr.mxu0 0.0
        %3765 = vmatpush2.msra.mxu0 0.0
        %3766 = vmatprep.subr.mxu0 0.0
        %3767 = vmatpush2.msra.mxu0 0.0
        %3768 = vmatprep.subr.mxu0 0.0
        %3769 = vmatpush2.msra.mxu0 0.0
        %3770 = vmatprep.subr.mxu0 0.0
        %3771 = vmatpush2.msra.mxu0 0.0
        %3772 = vmatprep.subr.mxu0 0.0
        %3773 = vmatpush2.msra.mxu0 0.0
        %3774 = vmatprep.subr.mxu0 0.0
        %3775 = vmatpush2.msra.mxu0 0.0
        %3776 = vmatprep.subr.mxu0 0.0
        %3777 = vmatpush2.msra.mxu0 0.0
        %3778 = vmatprep.subr.mxu0 0.0
        %3779 = vmatpush2.msra.mxu0 0.0
        %3780 = vmatprep.subr.mxu0 0.0
        %3781 = vmatpush2.msra.mxu0 0.0
        %3782 = vmatprep.subr.mxu0 0.0
        %3783 = vmatpush2.msra.mxu0 0.0
        %3784 = vmatprep.subr.mxu0 0.0
        %3785 = vmatpush2.msra.mxu0 0.0
        %3786 = vmatprep.subr.mxu0 0.0
        %3787 = vmatpush2.msra.mxu0 0.0
        %3788 = vmatprep.subr.mxu0 0.0
        %3789 = vmatpush2.msra.mxu0 0.0
        %3790 = vmatprep.subr.mxu0 0.0
        %3791 = vmatpush2.msra.mxu0 0.0
        %3792 = vmatprep.subr.mxu0 0.0
        %3793 = vmatpush2.msra.mxu0 0.0
        %3794 = vmatprep.mubr.f32.mxu0 0.0
        %3795 = vmatmul.mubr.f32.gmra.mxu0 %v3728
        %v3796 = vpop.f32.mrf.mxu0
        %v3797 = vadd.f32 %v3726, %v3796
        %v3798 = vpop.f32.mrf.mxu0
        %3799 = vdwg.mxu0
        %v3800 = vld [vmem:[#allocation2 + $0x360] sm:$0xf]
        %v3801 = vld [vmem:[#allocation2 + $0x368] sm:$0xf]
        %v3802 = vld [vmem:[#allocation2 + $0x370] sm:$0xf]
        %v3803 = vld [vmem:[#allocation2 + $0x378] sm:$0x1]
        %v3805 = vrot.slane %v3797, 7
        %v3807 = vsel %vm203, 0.0, %v3805
        %v3809 = vsel %vm205, %v3807, 0
        %v3812 = vsel %vm209, %v3800, 0
        %3814 = vmatprep.subr.mxu0 0.0
        %3815 = vmatpush1.msra.mxu0 0.0
        %3816 = vmatprep.subr.mxu0 0.0
        %3817 = vmatpush1.msra.mxu0 0.0
        %3818 = vmatprep.subr.mxu0 0.0
        %3819 = vmatpush1.msra.mxu0 0.0
        %3820 = vmatprep.subr.mxu0 0.0
        %3821 = vmatpush1.msra.mxu0 0.0
        %3822 = vmatprep.subr.mxu0 0.0
        %3823 = vmatpush1.msra.mxu0 0.0
        %3824 = vmatprep.subr.mxu0 0.0
        %3825 = vmatpush1.msra.mxu0 0.0
        %3826 = vmatprep.subr.mxu0 0.0
        %3827 = vmatpush1.msra.mxu0 0.0
        %3828 = vmatprep.subr.mxu0 0.0
        %3829 = vmatpush1.msra.mxu0 0.0
        %3830 = vmatprep.subr.mxu0 0.0
        %3831 = vmatpush1.msra.mxu0 0.0
        %3832 = vmatprep.subr.mxu0 0.0
        %3833 = vmatpush1.msra.mxu0 0.0
        %3834 = vmatprep.subr.mxu0 0.0
        %3835 = vmatpush1.msra.mxu0 0.0
        %3836 = vmatprep.subr.mxu0 0.0
        %3837 = vmatpush1.msra.mxu0 0.0
        %3838 = vmatprep.subr.mxu0 0.0
        %3839 = vmatpush1.msra.mxu0 0.0
        %3840 = vmatprep.subr.mxu0 0.0
        %3841 = vmatpush1.msra.mxu0 0.0
        %3842 = vmatprep.subr.mxu0 0.0
        %3843 = vmatpush1.msra.mxu0 0.0
        %3844 = vmatprep.subr.mxu0 0.0
        %3845 = vmatpush1.msra.mxu0 %v3812
        %3846 = vmatprep.subr.mxu0 0.0
        %3847 = vmatpush2.msra.mxu0 0.0
        %3848 = vmatprep.subr.mxu0 0.0
        %3849 = vmatpush2.msra.mxu0 0.0
        %3850 = vmatprep.subr.mxu0 0.0
        %3851 = vmatpush2.msra.mxu0 0.0
        %3852 = vmatprep.subr.mxu0 0.0
        %3853 = vmatpush2.msra.mxu0 0.0
        %3854 = vmatprep.subr.mxu0 0.0
        %3855 = vmatpush2.msra.mxu0 0.0
        %3856 = vmatprep.subr.mxu0 0.0
        %3857 = vmatpush2.msra.mxu0 0.0
        %3858 = vmatprep.subr.mxu0 0.0
        %3859 = vmatpush2.msra.mxu0 0.0
        %3860 = vmatprep.subr.mxu0 0.0
        %3861 = vmatpush2.msra.mxu0 0.0
        %3862 = vmatprep.subr.mxu0 0.0
        %3863 = vmatpush2.msra.mxu0 0.0
        %3864 = vmatprep.subr.mxu0 0.0
        %3865 = vmatpush2.msra.mxu0 0.0
        %3866 = vmatprep.subr.mxu0 0.0
        %3867 = vmatpush2.msra.mxu0 0.0
        %3868 = vmatprep.subr.mxu0 0.0
        %3869 = vmatpush2.msra.mxu0 0.0
        %3870 = vmatprep.subr.mxu0 0.0
        %3871 = vmatpush2.msra.mxu0 0.0
        %3872 = vmatprep.subr.mxu0 0.0
        %3873 = vmatpush2.msra.mxu0 0.0
        %3874 = vmatprep.subr.mxu0 0.0
        %3875 = vmatpush2.msra.mxu0 0.0
        %3876 = vmatprep.subr.mxu0 0.0
        %3877 = vmatpush2.msra.mxu0 0.0
        %3878 = vmatprep.mubr.f32.mxu0 0.0
        %3879 = vmatmul.mubr.f32.gmra.mxu0 %v3809
        %v3880 = vpop.f32.mrf.mxu0
        %v3881 = vadd.f32 0.0, %v3880
        %v3882 = vpop.f32.mrf.mxu0
        %3883 = vdwg.mxu0
        %v3884 = vsel %vm205, %v3797, 0
        %v3887 = vsel %vm209, %v3801, 0
        %3889 = vmatprep.subr.mxu0 0.0
        %3890 = vmatpush1.msra.mxu0 0.0
        %3891 = vmatprep.subr.mxu0 0.0
        %3892 = vmatpush1.msra.mxu0 0.0
        %3893 = vmatprep.subr.mxu0 0.0
        %3894 = vmatpush1.msra.mxu0 0.0
        %3895 = vmatprep.subr.mxu0 0.0
        %3896 = vmatpush1.msra.mxu0 0.0
        %3897 = vmatprep.subr.mxu0 0.0
        %3898 = vmatpush1.msra.mxu0 0.0
        %3899 = vmatprep.subr.mxu0 0.0
        %3900 = vmatpush1.msra.mxu0 0.0
        %3901 = vmatprep.subr.mxu0 0.0
        %3902 = vmatpush1.msra.mxu0 0.0
        %3903 = vmatprep.subr.mxu0 0.0
        %3904 = vmatpush1.msra.mxu0 0.0
        %3905 = vmatprep.subr.mxu0 0.0
        %3906 = vmatpush1.msra.mxu0 0.0
        %3907 = vmatprep.subr.mxu0 0.0
        %3908 = vmatpush1.msra.mxu0 0.0
        %3909 = vmatprep.subr.mxu0 0.0
        %3910 = vmatpush1.msra.mxu0 0.0
        %3911 = vmatprep.subr.mxu0 0.0
        %3912 = vmatpush1.msra.mxu0 0.0
        %3913 = vmatprep.subr.mxu0 0.0
        %3914 = vmatpush1.msra.mxu0 0.0
        %3915 = vmatprep.subr.mxu0 0.0
        %3916 = vmatpush1.msra.mxu0 0.0
        %3917 = vmatprep.subr.mxu0 0.0
        %3918 = vmatpush1.msra.mxu0 0.0
        %3919 = vmatprep.subr.mxu0 0.0
        %3920 = vmatpush1.msra.mxu0 %v3887
        %3921 = vmatprep.subr.mxu0 0.0
        %3922 = vmatpush2.msra.mxu0 0.0
        %3923 = vmatprep.subr.mxu0 0.0
        %3924 = vmatpush2.msra.mxu0 0.0
        %3925 = vmatprep.subr.mxu0 0.0
        %3926 = vmatpush2.msra.mxu0 0.0
        %3927 = vmatprep.subr.mxu0 0.0
        %3928 = vmatpush2.msra.mxu0 0.0
        %3929 = vmatprep.subr.mxu0 0.0
        %3930 = vmatpush2.msra.mxu0 0.0
        %3931 = vmatprep.subr.mxu0 0.0
        %3932 = vmatpush2.msra.mxu0 0.0
        %3933 = vmatprep.subr.mxu0 0.0
        %3934 = vmatpush2.msra.mxu0 0.0
        %3935 = vmatprep.subr.mxu0 0.0
        %3936 = vmatpush2.msra.mxu0 0.0
        %3937 = vmatprep.subr.mxu0 0.0
        %3938 = vmatpush2.msra.mxu0 0.0
        %3939 = vmatprep.subr.mxu0 0.0
        %3940 = vmatpush2.msra.mxu0 0.0
        %3941 = vmatprep.subr.mxu0 0.0
        %3942 = vmatpush2.msra.mxu0 0.0
        %3943 = vmatprep.subr.mxu0 0.0
        %3944 = vmatpush2.msra.mxu0 0.0
        %3945 = vmatprep.subr.mxu0 0.0
        %3946 = vmatpush2.msra.mxu0 0.0
        %3947 = vmatprep.subr.mxu0 0.0
        %3948 = vmatpush2.msra.mxu0 0.0
        %3949 = vmatprep.subr.mxu0 0.0
        %3950 = vmatpush2.msra.mxu0 0.0
        %3951 = vmatprep.subr.mxu0 0.0
        %3952 = vmatpush2.msra.mxu0 0.0
        %3953 = vmatprep.mubr.f32.mxu0 0.0
        %3954 = vmatmul.mubr.f32.gmra.mxu0 %v3884
        %v3955 = vpop.f32.mrf.mxu0
        %v3956 = vadd.f32 %v3881, %v3955
        %v3957 = vpop.f32.mrf.mxu0
        %3958 = vdwg.mxu0
        %v3959 = vrot.slane %v3797, 1
        %v3961 = vsel %vm360, %v3959, 0.0
        %v3963 = vsel %vm205, %v3961, 0
        %v3966 = vsel %vm209, %v3802, 0
        %3968 = vmatprep.subr.mxu0 0.0
        %3969 = vmatpush1.msra.mxu0 0.0
        %3970 = vmatprep.subr.mxu0 0.0
        %3971 = vmatpush1.msra.mxu0 0.0
        %3972 = vmatprep.subr.mxu0 0.0
        %3973 = vmatpush1.msra.mxu0 0.0
        %3974 = vmatprep.subr.mxu0 0.0
        %3975 = vmatpush1.msra.mxu0 0.0
        %3976 = vmatprep.subr.mxu0 0.0
        %3977 = vmatpush1.msra.mxu0 0.0
        %3978 = vmatprep.subr.mxu0 0.0
        %3979 = vmatpush1.msra.mxu0 0.0
        %3980 = vmatprep.subr.mxu0 0.0
        %3981 = vmatpush1.msra.mxu0 0.0
        %3982 = vmatprep.subr.mxu0 0.0
        %3983 = vmatpush1.msra.mxu0 0.0
        %3984 = vmatprep.subr.mxu0 0.0
        %3985 = vmatpush1.msra.mxu0 0.0
        %3986 = vmatprep.subr.mxu0 0.0
        %3987 = vmatpush1.msra.mxu0 0.0
        %3988 = vmatprep.subr.mxu0 0.0
        %3989 = vmatpush1.msra.mxu0 0.0
        %3990 = vmatprep.subr.mxu0 0.0
        %3991 = vmatpush1.msra.mxu0 0.0
        %3992 = vmatprep.subr.mxu0 0.0
        %3993 = vmatpush1.msra.mxu0 0.0
        %3994 = vmatprep.subr.mxu0 0.0
        %3995 = vmatpush1.msra.mxu0 0.0
        %3996 = vmatprep.subr.mxu0 0.0
        %3997 = vmatpush1.msra.mxu0 0.0
        %3998 = vmatprep.subr.mxu0 0.0
        %3999 = vmatpush1.msra.mxu0 %v3966
        %4000 = vmatprep.subr.mxu0 0.0
        %4001 = vmatpush2.msra.mxu0 0.0
        %4002 = vmatprep.subr.mxu0 0.0
        %4003 = vmatpush2.msra.mxu0 0.0
        %4004 = vmatprep.subr.mxu0 0.0
        %4005 = vmatpush2.msra.mxu0 0.0
        %4006 = vmatprep.subr.mxu0 0.0
        %4007 = vmatpush2.msra.mxu0 0.0
        %4008 = vmatprep.subr.mxu0 0.0
        %4009 = vmatpush2.msra.mxu0 0.0
        %4010 = vmatprep.subr.mxu0 0.0
        %4011 = vmatpush2.msra.mxu0 0.0
        %4012 = vmatprep.subr.mxu0 0.0
        %4013 = vmatpush2.msra.mxu0 0.0
        %4014 = vmatprep.subr.mxu0 0.0
        %4015 = vmatpush2.msra.mxu0 0.0
        %4016 = vmatprep.subr.mxu0 0.0
        %4017 = vmatpush2.msra.mxu0 0.0
        %4018 = vmatprep.subr.mxu0 0.0
        %4019 = vmatpush2.msra.mxu0 0.0
        %4020 = vmatprep.subr.mxu0 0.0
        %4021 = vmatpush2.msra.mxu0 0.0
        %4022 = vmatprep.subr.mxu0 0.0
        %4023 = vmatpush2.msra.mxu0 0.0
        %4024 = vmatprep.subr.mxu0 0.0
        %4025 = vmatpush2.msra.mxu0 0.0
        %4026 = vmatprep.subr.mxu0 0.0
        %4027 = vmatpush2.msra.mxu0 0.0
        %4028 = vmatprep.subr.mxu0 0.0
        %4029 = vmatpush2.msra.mxu0 0.0
        %4030 = vmatprep.subr.mxu0 0.0
        %4031 = vmatpush2.msra.mxu0 0.0
        %4032 = vmatprep.mubr.f32.mxu0 0.0
        %4033 = vmatmul.mubr.f32.gmra.mxu0 %v3963
        %v4034 = vpop.f32.mrf.mxu0
        %v4035 = vadd.f32 0.0, %v4034
        %v4036 = vpop.f32.mrf.mxu0
        %4037 = vdwg.mxu0
        %v4038 = vadd.f32 %v3956, %v4035
        %v4039 = vlaneseq
        %v4040 = vshrl.u32 %v4039, 7
        %v4041 = vsub.s32 0, %v4040
        %v4042 = vrot.slane %v3803, %v4041
        %v4043 = vadd.f32 %v4038, %v4042
        %v4044 = vsub.f32 %v195, %v4043
        %v4045 = vand.u32 2147483647, %v4044
        %v4046 = vld [vmem:[#allocation2 + $0x318] sm:$0xf]
        %v4047 = vld [vmem:[#allocation2 + $0x320] sm:$0x1]
        %v4048 = vlaneseq
        %v4049 = vshrl.u32 %v4048, 7
        %v4050 = vsub.s32 0, %v4049
        %v4051 = vrot.slane %v4047, %v4050
        %v4053 = vsel %vm205, %v4045, 0
        %v4056 = vsel %vm209, %v4046, 0
        %4058 = vmatprep.subr.mxu0 0.0
        %4059 = vmatpush1.msra.mxu0 0.0
        %4060 = vmatprep.subr.mxu0 0.0
        %4061 = vmatpush1.msra.mxu0 0.0
        %4062 = vmatprep.subr.mxu0 0.0
        %4063 = vmatpush1.msra.mxu0 0.0
        %4064 = vmatprep.subr.mxu0 0.0
        %4065 = vmatpush1.msra.mxu0 0.0
        %4066 = vmatprep.subr.mxu0 0.0
        %4067 = vmatpush1.msra.mxu0 0.0
        %4068 = vmatprep.subr.mxu0 0.0
        %4069 = vmatpush1.msra.mxu0 0.0
        %4070 = vmatprep.subr.mxu0 0.0
        %4071 = vmatpush1.msra.mxu0 0.0
        %4072 = vmatprep.subr.mxu0 0.0
        %4073 = vmatpush1.msra.mxu0 0.0
        %4074 = vmatprep.subr.mxu0 0.0
        %4075 = vmatpush1.msra.mxu0 0.0
        %4076 = vmatprep.subr.mxu0 0.0
        %4077 = vmatpush1.msra.mxu0 0.0
        %4078 = vmatprep.subr.mxu0 0.0
        %4079 = vmatpush1.msra.mxu0 0.0
        %4080 = vmatprep.subr.mxu0 0.0
        %4081 = vmatpush1.msra.mxu0 0.0
        %4082 = vmatprep.subr.mxu0 0.0
        %4083 = vmatpush1.msra.mxu0 0.0
        %4084 = vmatprep.subr.mxu0 0.0
        %4085 = vmatpush1.msra.mxu0 0.0
        %4086 = vmatprep.subr.mxu0 0.0
        %4087 = vmatpush1.msra.mxu0 0.0
        %4088 = vmatprep.subr.mxu0 0.0
        %4089 = vmatpush1.msra.mxu0 %v4056
        %4090 = vmatprep.subr.mxu0 0.0
        %4091 = vmatpush2.msra.mxu0 0.0
        %4092 = vmatprep.subr.mxu0 0.0
        %4093 = vmatpush2.msra.mxu0 0.0
        %4094 = vmatprep.subr.mxu0 0.0
        %4095 = vmatpush2.msra.mxu0 0.0
        %4096 = vmatprep.subr.mxu0 0.0
        %4097 = vmatpush2.msra.mxu0 0.0
        %4098 = vmatprep.subr.mxu0 0.0
        %4099 = vmatpush2.msra.mxu0 0.0
        %4100 = vmatprep.subr.mxu0 0.0
        %4101 = vmatpush2.msra.mxu0 0.0
        %4102 = vmatprep.subr.mxu0 0.0
        %4103 = vmatpush2.msra.mxu0 0.0
        %4104 = vmatprep.subr.mxu0 0.0
        %4105 = vmatpush2.msra.mxu0 0.0
        %4106 = vmatprep.subr.mxu0 0.0
        %4107 = vmatpush2.msra.mxu0 0.0
        %4108 = vmatprep.subr.mxu0 0.0
        %4109 = vmatpush2.msra.mxu0 0.0
        %4110 = vmatprep.subr.mxu0 0.0
        %4111 = vmatpush2.msra.mxu0 0.0
        %4112 = vmatprep.subr.mxu0 0.0
        %4113 = vmatpush2.msra.mxu0 0.0
        %4114 = vmatprep.subr.mxu0 0.0
        %4115 = vmatpush2.msra.mxu0 0.0
        %4116 = vmatprep.subr.mxu0 0.0
        %4117 = vmatpush2.msra.mxu0 0.0
        %4118 = vmatprep.subr.mxu0 0.0
        %4119 = vmatpush2.msra.mxu0 0.0
        %4120 = vmatprep.subr.mxu0 0.0
        %4121 = vmatpush2.msra.mxu0 0.0
        %4122 = vmatprep.mubr.f32.mxu0 0.0
        %4123 = vmatmul.mubr.f32.gmra.mxu0 %v4053
        %v4124 = vpop.f32.mrf.mxu0
        %v4125 = vadd.f32 %v4051, %v4124
        %v4126 = vpop.f32.mrf.mxu0
        %4127 = vdwg.mxu0
        %v4128 = vmax.f32 %v4125, 0.0
        %v4129 = vld [vmem:[#allocation2 + $0x328] sm:$0xff]
        %v4130 = vld [vmem:[#allocation2 + $0x330] sm:$0x1]
        %v4131 = vlaneseq
        %v4132 = vshrl.u32 %v4131, 7
        %v4133 = vsub.s32 0, %v4132
        %v4134 = vrot.slane %v4130, %v4133
        %v4136 = vsel %vm1008, %v4128, 0
        %4138 = vmatprep.subr.mxu0 0.0
        %4139 = vmatpush1.msra.mxu0 0.0
        %4140 = vmatprep.subr.mxu0 0.0
        %4141 = vmatpush1.msra.mxu0 0.0
        %4142 = vmatprep.subr.mxu0 0.0
        %4143 = vmatpush1.msra.mxu0 0.0
        %4144 = vmatprep.subr.mxu0 0.0
        %4145 = vmatpush1.msra.mxu0 0.0
        %4146 = vmatprep.subr.mxu0 0.0
        %4147 = vmatpush1.msra.mxu0 0.0
        %4148 = vmatprep.subr.mxu0 0.0
        %4149 = vmatpush1.msra.mxu0 0.0
        %4150 = vmatprep.subr.mxu0 0.0
        %4151 = vmatpush1.msra.mxu0 0.0
        %4152 = vmatprep.subr.mxu0 0.0
        %4153 = vmatpush1.msra.mxu0 0.0
        %4154 = vmatprep.subr.mxu0 0.0
        %4155 = vmatpush1.msra.mxu0 0.0
        %4156 = vmatprep.subr.mxu0 0.0
        %4157 = vmatpush1.msra.mxu0 0.0
        %4158 = vmatprep.subr.mxu0 0.0
        %4159 = vmatpush1.msra.mxu0 0.0
        %4160 = vmatprep.subr.mxu0 0.0
        %4161 = vmatpush1.msra.mxu0 0.0
        %4162 = vmatprep.subr.mxu0 0.0
        %4163 = vmatpush1.msra.mxu0 0.0
        %4164 = vmatprep.subr.mxu0 0.0
        %4165 = vmatpush1.msra.mxu0 0.0
        %4166 = vmatprep.subr.mxu0 0.0
        %4167 = vmatpush1.msra.mxu0 0.0
        %4168 = vmatprep.subr.mxu0 0.0
        %4169 = vmatpush1.msra.mxu0 %v4129
        %4170 = vmatprep.subr.mxu0 0.0
        %4171 = vmatpush2.msra.mxu0 0.0
        %4172 = vmatprep.subr.mxu0 0.0
        %4173 = vmatpush2.msra.mxu0 0.0
        %4174 = vmatprep.subr.mxu0 0.0
        %4175 = vmatpush2.msra.mxu0 0.0
        %4176 = vmatprep.subr.mxu0 0.0
        %4177 = vmatpush2.msra.mxu0 0.0
        %4178 = vmatprep.subr.mxu0 0.0
        %4179 = vmatpush2.msra.mxu0 0.0
        %4180 = vmatprep.subr.mxu0 0.0
        %4181 = vmatpush2.msra.mxu0 0.0
        %4182 = vmatprep.subr.mxu0 0.0
        %4183 = vmatpush2.msra.mxu0 0.0
        %4184 = vmatprep.subr.mxu0 0.0
        %4185 = vmatpush2.msra.mxu0 0.0
        %4186 = vmatprep.subr.mxu0 0.0
        %4187 = vmatpush2.msra.mxu0 0.0
        %4188 = vmatprep.subr.mxu0 0.0
        %4189 = vmatpush2.msra.mxu0 0.0
        %4190 = vmatprep.subr.mxu0 0.0
        %4191 = vmatpush2.msra.mxu0 0.0
        %4192 = vmatprep.subr.mxu0 0.0
        %4193 = vmatpush2.msra.mxu0 0.0
        %4194 = vmatprep.subr.mxu0 0.0
        %4195 = vmatpush2.msra.mxu0 0.0
        %4196 = vmatprep.subr.mxu0 0.0
        %4197 = vmatpush2.msra.mxu0 0.0
        %4198 = vmatprep.subr.mxu0 0.0
        %4199 = vmatpush2.msra.mxu0 0.0
        %4200 = vmatprep.subr.mxu0 0.0
        %4201 = vmatpush2.msra.mxu0 0.0
        %4202 = vmatprep.mubr.f32.mxu0 0.0
        %4203 = vmatmul.mubr.f32.gmra.mxu0 %v4136
        %v4204 = vpop.f32.mrf.mxu0
        %v4205 = vadd.f32 %v4134, %v4204
        %v4206 = vpop.f32.mrf.mxu0
        %4207 = vdwg.mxu0
        %v4208 = vxor.u32 %v4205, 2147483648
        %v4209 = vmul.f32 %v4208, 1.442695
        %v4210 = vpow.pop %v4209
        %v4211 = vadd.f32 %v4210, 1.0
        %v4212 = vrcp.pop %v4211
        %v4213 = vmul.f32 1.0, %v4212
        %v4214 = vmul.f32 %v4045, %v4213
        %v4215 = vsel %vm205, %v4214, 0.0
        %4216 = vadd.xlane.f32.xlu0 %v4215
        %v4217 = vpop.xlane.xlu0 %4216
        %v4218 = vrcp.pop 4.0
        %v4219 = vmul.f32 %v4217, %v4218
        %v4220 = vld [vmem:[#allocation2 + $0x338] sm:$0x1]
        %v4221 = vlaneseq
        %v4222 = vshrl.u32 %v4221, 7
        %v4223 = vsub.s32 0, %v4222
        %v4224 = vrot.slane %v4220, %v4223
        %v4225 = vmul.f32 %v4219, %v4224
        %v4226 = vld [vmem:[#allocation2 + $0x348] sm:$0x1]
        %v4227 = vlaneseq
        %v4228 = vshrl.u32 %v4227, 7
        %v4229 = vsub.s32 0, %v4228
        %v4230 = vrot.slane %v4226, %v4229
        %v4231 = vadd.f32 %v4225, %v4230
        %v4232 = vld [vmem:[#allocation2 + $0x340] sm:$0xff]
        %v4233 = vxor.u32 %v4231, 2147483648
        %v4234 = vmul.f32 %v4233, 1.442695
        %v4235 = vpow.pop %v4234
        %v4236 = vadd.f32 %v4235, 1.0
        %v4237 = vrcp.pop %v4236
        %v4238 = vmul.f32 1.0, %v4237
        %v4239 = vtanh.pop %v4231
        %4241 = vrot.lane.b32.xlu0 %v4239, 112
        %v4242 = vpop.permute.xlu0 %4241
        %v4244 = vmul.f32 %v4238, %v4242
        %v4245 = vtanh.pop %v4244
        %4247 = vrot.lane.b32.xlu0 %v4245, 24
        %v4248 = vpop.permute.xlu0 %4247
        %v4250 = vmul.f32 %v4238, %v4248
        %4252 = vrot.lane.b32.xlu0 %v4250, 104
        %v4253 = vpop.permute.xlu0 %4252
        %v4254 = vsel %vm1008, %v4253, 0
        %4256 = vmatprep.subr.mxu0 0.0
        %4257 = vmatpush1.msra.mxu0 0.0
        %4258 = vmatprep.subr.mxu0 0.0
        %4259 = vmatpush1.msra.mxu0 0.0
        %4260 = vmatprep.subr.mxu0 0.0
        %4261 = vmatpush1.msra.mxu0 0.0
        %4262 = vmatprep.subr.mxu0 0.0
        %4263 = vmatpush1.msra.mxu0 0.0
        %4264 = vmatprep.subr.mxu0 0.0
        %4265 = vmatpush1.msra.mxu0 0.0
        %4266 = vmatprep.subr.mxu0 0.0
        %4267 = vmatpush1.msra.mxu0 0.0
        %4268 = vmatprep.subr.mxu0 0.0
        %4269 = vmatpush1.msra.mxu0 0.0
        %4270 = vmatprep.subr.mxu0 0.0
        %4271 = vmatpush1.msra.mxu0 0.0
        %4272 = vmatprep.subr.mxu0 0.0
        %4273 = vmatpush1.msra.mxu0 0.0
        %4274 = vmatprep.subr.mxu0 0.0
        %4275 = vmatpush1.msra.mxu0 0.0
        %4276 = vmatprep.subr.mxu0 0.0
        %4277 = vmatpush1.msra.mxu0 0.0
        %4278 = vmatprep.subr.mxu0 0.0
        %4279 = vmatpush1.msra.mxu0 0.0
        %4280 = vmatprep.subr.mxu0 0.0
        %4281 = vmatpush1.msra.mxu0 0.0
        %4282 = vmatprep.subr.mxu0 0.0
        %4283 = vmatpush1.msra.mxu0 0.0
        %4284 = vmatprep.subr.mxu0 0.0
        %4285 = vmatpush1.msra.mxu0 0.0
        %4286 = vmatprep.subr.mxu0 0.0
        %4287 = vmatpush1.msra.mxu0 %v4232
        %4288 = vmatprep.subr.mxu0 0.0
        %4289 = vmatpush2.msra.mxu0 0.0
        %4290 = vmatprep.subr.mxu0 0.0
        %4291 = vmatpush2.msra.mxu0 0.0
        %4292 = vmatprep.subr.mxu0 0.0
        %4293 = vmatpush2.msra.mxu0 0.0
        %4294 = vmatprep.subr.mxu0 0.0
        %4295 = vmatpush2.msra.mxu0 0.0
        %4296 = vmatprep.subr.mxu0 0.0
        %4297 = vmatpush2.msra.mxu0 0.0
        %4298 = vmatprep.subr.mxu0 0.0
        %4299 = vmatpush2.msra.mxu0 0.0
        %4300 = vmatprep.subr.mxu0 0.0
        %4301 = vmatpush2.msra.mxu0 0.0
        %4302 = vmatprep.subr.mxu0 0.0
        %4303 = vmatpush2.msra.mxu0 0.0
        %4304 = vmatprep.subr.mxu0 0.0
        %4305 = vmatpush2.msra.mxu0 0.0
        %4306 = vmatprep.subr.mxu0 0.0
        %4307 = vmatpush2.msra.mxu0 0.0
        %4308 = vmatprep.subr.mxu0 0.0
        %4309 = vmatpush2.msra.mxu0 0.0
        %4310 = vmatprep.subr.mxu0 0.0
        %4311 = vmatpush2.msra.mxu0 0.0
        %4312 = vmatprep.subr.mxu0 0.0
        %4313 = vmatpush2.msra.mxu0 0.0
        %4314 = vmatprep.subr.mxu0 0.0
        %4315 = vmatpush2.msra.mxu0 0.0
        %4316 = vmatprep.subr.mxu0 0.0
        %4317 = vmatpush2.msra.mxu0 0.0
        %4318 = vmatprep.subr.mxu0 0.0
        %4319 = vmatpush2.msra.mxu0 0.0
        %4320 = vmatprep.mubr.f32.mxu0 0.0
        %4321 = vmatmul.mubr.f32.gmra.mxu0 %v4254
        %v4322 = vpop.f32.mrf.mxu0
        %v4323 = vadd.f32 0.0, %v4322
        %v4324 = vpop.f32.mrf.mxu0
        %4325 = vdwg.mxu0
        %v4327 = vrot.slane %v4323, 7
        %v4329 = vadd.f32 %v4231, %v4327
        %v4330 = vxor.u32 %v4329, 2147483648
        %v4331 = vmul.f32 %v4330, 1.442695
        %v4332 = vpow.pop %v4331
        %v4333 = vadd.f32 %v4332, 1.0
        %v4334 = vrcp.pop %v4333
        %v4335 = vmul.f32 1.0, %v4334
        %v4336 = vtanh.pop %v4329
        %v4338 = vrot.slane %v4244, 7
        %4339 = vrot.lane.b32.xlu0 %v4338, 8
        %v4340 = vpop.permute.xlu0 %4339
        %v4342 = vmul.f32 %v4335, %v4340
        %4344 = vrot.lane.b32.xlu0 %v4336, 112
        %v4345 = vpop.permute.xlu0 %4344
        %v4347 = vmul.f32 %v4335, %v4345
        %4349 = vrot.lane.b32.xlu0 %v4347, 8
        %v4350 = vpop.permute.xlu0 %4349
        %v4352 = vadd.f32 %v4342, %v4350
        %v4353 = vtanh.pop %v4352
        %4355 = vrot.lane.b32.xlu0 %v4353, 16
        %v4356 = vpop.permute.xlu0 %4355
        %v4358 = vmul.f32 %v4335, %v4356
        %v4360 = vrot.slane %v4358, 1
        %4361 = vrot.lane.b32.xlu0 %v4360, 104
        %v4362 = vpop.permute.xlu0 %4361
        %v4363 = vsel %vm1008, %v4362, 0
        %4365 = vmatprep.subr.mxu0 0.0
        %4366 = vmatpush1.msra.mxu0 0.0
        %4367 = vmatprep.subr.mxu0 0.0
        %4368 = vmatpush1.msra.mxu0 0.0
        %4369 = vmatprep.subr.mxu0 0.0
        %4370 = vmatpush1.msra.mxu0 0.0
        %4371 = vmatprep.subr.mxu0 0.0
        %4372 = vmatpush1.msra.mxu0 0.0
        %4373 = vmatprep.subr.mxu0 0.0
        %4374 = vmatpush1.msra.mxu0 0.0
        %4375 = vmatprep.subr.mxu0 0.0
        %4376 = vmatpush1.msra.mxu0 0.0
        %4377 = vmatprep.subr.mxu0 0.0
        %4378 = vmatpush1.msra.mxu0 0.0
        %4379 = vmatprep.subr.mxu0 0.0
        %4380 = vmatpush1.msra.mxu0 0.0
        %4381 = vmatprep.subr.mxu0 0.0
        %4382 = vmatpush1.msra.mxu0 0.0
        %4383 = vmatprep.subr.mxu0 0.0
        %4384 = vmatpush1.msra.mxu0 0.0
        %4385 = vmatprep.subr.mxu0 0.0
        %4386 = vmatpush1.msra.mxu0 0.0
        %4387 = vmatprep.subr.mxu0 0.0
        %4388 = vmatpush1.msra.mxu0 0.0
        %4389 = vmatprep.subr.mxu0 0.0
        %4390 = vmatpush1.msra.mxu0 0.0
        %4391 = vmatprep.subr.mxu0 0.0
        %4392 = vmatpush1.msra.mxu0 0.0
        %4393 = vmatprep.subr.mxu0 0.0
        %4394 = vmatpush1.msra.mxu0 0.0
        %4395 = vmatprep.subr.mxu0 0.0
        %4396 = vmatpush1.msra.mxu0 %v4232
        %4397 = vmatprep.subr.mxu0 0.0
        %4398 = vmatpush2.msra.mxu0 0.0
        %4399 = vmatprep.subr.mxu0 0.0
        %4400 = vmatpush2.msra.mxu0 0.0
        %4401 = vmatprep.subr.mxu0 0.0
        %4402 = vmatpush2.msra.mxu0 0.0
        %4403 = vmatprep.subr.mxu0 0.0
        %4404 = vmatpush2.msra.mxu0 0.0
        %4405 = vmatprep.subr.mxu0 0.0
        %4406 = vmatpush2.msra.mxu0 0.0
        %4407 = vmatprep.subr.mxu0 0.0
        %4408 = vmatpush2.msra.mxu0 0.0
        %4409 = vmatprep.subr.mxu0 0.0
        %4410 = vmatpush2.msra.mxu0 0.0
        %4411 = vmatprep.subr.mxu0 0.0
        %4412 = vmatpush2.msra.mxu0 0.0
        %4413 = vmatprep.subr.mxu0 0.0
        %4414 = vmatpush2.msra.mxu0 0.0
        %4415 = vmatprep.subr.mxu0 0.0
        %4416 = vmatpush2.msra.mxu0 0.0
        %4417 = vmatprep.subr.mxu0 0.0
        %4418 = vmatpush2.msra.mxu0 0.0
        %4419 = vmatprep.subr.mxu0 0.0
        %4420 = vmatpush2.msra.mxu0 0.0
        %4421 = vmatprep.subr.mxu0 0.0
        %4422 = vmatpush2.msra.mxu0 0.0
        %4423 = vmatprep.subr.mxu0 0.0
        %4424 = vmatpush2.msra.mxu0 0.0
        %4425 = vmatprep.subr.mxu0 0.0
        %4426 = vmatpush2.msra.mxu0 0.0
        %4427 = vmatprep.subr.mxu0 0.0
        %4428 = vmatpush2.msra.mxu0 0.0
        %4429 = vmatprep.mubr.f32.mxu0 0.0
        %4430 = vmatmul.mubr.f32.gmra.mxu0 %v4363
        %v4431 = vpop.f32.mrf.mxu0
        %v4432 = vadd.f32 0.0, %v4431
        %v4433 = vpop.f32.mrf.mxu0
        %4434 = vdwg.mxu0
        %v4436 = vrot.slane %v4432, 6
        %v4438 = vadd.f32 %v4231, %v4436
        %v4439 = vxor.u32 %v4438, 2147483648
        %v4440 = vmul.f32 %v4439, 1.442695
        %v4441 = vpow.pop %v4440
        %v4442 = vadd.f32 %v4441, 1.0
        %v4443 = vrcp.pop %v4442
        %v4444 = vmul.f32 1.0, %v4443
        %v4445 = vtanh.pop %v4438
        %v4447 = vrot.slane %v4352, 7
        %v4449 = vmul.f32 %v4444, %v4447
        %4451 = vrot.lane.b32.xlu0 %v4445, 112
        %v4452 = vpop.permute.xlu0 %4451
        %v4454 = vmul.f32 %v4444, %v4452
        %4456 = vrot.lane.b32.xlu0 %v4454, 8
        %v4457 = vpop.permute.xlu0 %4456
        %v4459 = vadd.f32 %v4449, %v4457
        %v4460 = vtanh.pop %v4459
        %4462 = vrot.lane.b32.xlu0 %v4460, 16
        %v4463 = vpop.permute.xlu0 %4462
        %v4465 = vmul.f32 %v4444, %v4463
        %v4467 = vrot.slane %v4465, 2
        %4468 = vrot.lane.b32.xlu0 %v4467, 104
        %v4469 = vpop.permute.xlu0 %4468
        %v4470 = vsel %vm1008, %v4469, 0
        %4472 = vmatprep.subr.mxu0 0.0
        %4473 = vmatpush1.msra.mxu0 0.0
        %4474 = vmatprep.subr.mxu0 0.0
        %4475 = vmatpush1.msra.mxu0 0.0
        %4476 = vmatprep.subr.mxu0 0.0
        %4477 = vmatpush1.msra.mxu0 0.0
        %4478 = vmatprep.subr.mxu0 0.0
        %4479 = vmatpush1.msra.mxu0 0.0
        %4480 = vmatprep.subr.mxu0 0.0
        %4481 = vmatpush1.msra.mxu0 0.0
        %4482 = vmatprep.subr.mxu0 0.0
        %4483 = vmatpush1.msra.mxu0 0.0
        %4484 = vmatprep.subr.mxu0 0.0
        %4485 = vmatpush1.msra.mxu0 0.0
        %4486 = vmatprep.subr.mxu0 0.0
        %4487 = vmatpush1.msra.mxu0 0.0
        %4488 = vmatprep.subr.mxu0 0.0
        %4489 = vmatpush1.msra.mxu0 0.0
        %4490 = vmatprep.subr.mxu0 0.0
        %4491 = vmatpush1.msra.mxu0 0.0
        %4492 = vmatprep.subr.mxu0 0.0
        %4493 = vmatpush1.msra.mxu0 0.0
        %4494 = vmatprep.subr.mxu0 0.0
        %4495 = vmatpush1.msra.mxu0 0.0
        %4496 = vmatprep.subr.mxu0 0.0
        %4497 = vmatpush1.msra.mxu0 0.0
        %4498 = vmatprep.subr.mxu0 0.0
        %4499 = vmatpush1.msra.mxu0 0.0
        %4500 = vmatprep.subr.mxu0 0.0
        %4501 = vmatpush1.msra.mxu0 0.0
        %4502 = vmatprep.subr.mxu0 0.0
        %4503 = vmatpush1.msra.mxu0 %v4232
        %4504 = vmatprep.subr.mxu0 0.0
        %4505 = vmatpush2.msra.mxu0 0.0
        %4506 = vmatprep.subr.mxu0 0.0
        %4507 = vmatpush2.msra.mxu0 0.0
        %4508 = vmatprep.subr.mxu0 0.0
        %4509 = vmatpush2.msra.mxu0 0.0
        %4510 = vmatprep.subr.mxu0 0.0
        %4511 = vmatpush2.msra.mxu0 0.0
        %4512 = vmatprep.subr.mxu0 0.0
        %4513 = vmatpush2.msra.mxu0 0.0
        %4514 = vmatprep.subr.mxu0 0.0
        %4515 = vmatpush2.msra.mxu0 0.0
        %4516 = vmatprep.subr.mxu0 0.0
        %4517 = vmatpush2.msra.mxu0 0.0
        %4518 = vmatprep.subr.mxu0 0.0
        %4519 = vmatpush2.msra.mxu0 0.0
        %4520 = vmatprep.subr.mxu0 0.0
        %4521 = vmatpush2.msra.mxu0 0.0
        %4522 = vmatprep.subr.mxu0 0.0
        %4523 = vmatpush2.msra.mxu0 0.0
        %4524 = vmatprep.subr.mxu0 0.0
        %4525 = vmatpush2.msra.mxu0 0.0
        %4526 = vmatprep.subr.mxu0 0.0
        %4527 = vmatpush2.msra.mxu0 0.0
        %4528 = vmatprep.subr.mxu0 0.0
        %4529 = vmatpush2.msra.mxu0 0.0
        %4530 = vmatprep.subr.mxu0 0.0
        %4531 = vmatpush2.msra.mxu0 0.0
        %4532 = vmatprep.subr.mxu0 0.0
        %4533 = vmatpush2.msra.mxu0 0.0
        %4534 = vmatprep.subr.mxu0 0.0
        %4535 = vmatpush2.msra.mxu0 0.0
        %4536 = vmatprep.mubr.f32.mxu0 0.0
        %4537 = vmatmul.mubr.f32.gmra.mxu0 %v4470
        %v4538 = vpop.f32.mrf.mxu0
        %v4539 = vadd.f32 0.0, %v4538
        %v4540 = vpop.f32.mrf.mxu0
        %4541 = vdwg.mxu0
        %v4543 = vrot.slane %v4539, 5
        %v4545 = vadd.f32 %v4231, %v4543
        %v4546 = vxor.u32 %v4545, 2147483648
        %v4547 = vmul.f32 %v4546, 1.442695
        %v4548 = vpow.pop %v4547
        %v4549 = vadd.f32 %v4548, 1.0
        %v4550 = vrcp.pop %v4549
        %v4551 = vmul.f32 1.0, %v4550
        %v4552 = vtanh.pop %v4545
        %v4554 = vrot.slane %v4459, 7
        %v4556 = vmul.f32 %v4551, %v4554
        %4558 = vrot.lane.b32.xlu0 %v4552, 112
        %v4559 = vpop.permute.xlu0 %4558
        %v4561 = vmul.f32 %v4551, %v4559
        %4563 = vrot.lane.b32.xlu0 %v4561, 8
        %v4564 = vpop.permute.xlu0 %4563
        %v4566 = vadd.f32 %v4556, %v4564
        %v4567 = vtanh.pop %v4566
        %4569 = vrot.lane.b32.xlu0 %v4567, 16
        %v4570 = vpop.permute.xlu0 %4569
        %v4572 = vmul.f32 %v4551, %v4570
        %v4574 = vrot.slane %v4572, 3
        %4575 = vrot.lane.b32.xlu0 %v4574, 104
        %v4576 = vpop.permute.xlu0 %4575
        %v4577 = vsel %vm1008, %v4576, 0
        %4579 = vmatprep.subr.mxu0 0.0
        %4580 = vmatpush1.msra.mxu0 0.0
        %4581 = vmatprep.subr.mxu0 0.0
        %4582 = vmatpush1.msra.mxu0 0.0
        %4583 = vmatprep.subr.mxu0 0.0
        %4584 = vmatpush1.msra.mxu0 0.0
        %4585 = vmatprep.subr.mxu0 0.0
        %4586 = vmatpush1.msra.mxu0 0.0
        %4587 = vmatprep.subr.mxu0 0.0
        %4588 = vmatpush1.msra.mxu0 0.0
        %4589 = vmatprep.subr.mxu0 0.0
        %4590 = vmatpush1.msra.mxu0 0.0
        %4591 = vmatprep.subr.mxu0 0.0
        %4592 = vmatpush1.msra.mxu0 0.0
        %4593 = vmatprep.subr.mxu0 0.0
        %4594 = vmatpush1.msra.mxu0 0.0
        %4595 = vmatprep.subr.mxu0 0.0
        %4596 = vmatpush1.msra.mxu0 0.0
        %4597 = vmatprep.subr.mxu0 0.0
        %4598 = vmatpush1.msra.mxu0 0.0
        %4599 = vmatprep.subr.mxu0 0.0
        %4600 = vmatpush1.msra.mxu0 0.0
        %4601 = vmatprep.subr.mxu0 0.0
        %4602 = vmatpush1.msra.mxu0 0.0
        %4603 = vmatprep.subr.mxu0 0.0
        %4604 = vmatpush1.msra.mxu0 0.0
        %4605 = vmatprep.subr.mxu0 0.0
        %4606 = vmatpush1.msra.mxu0 0.0
        %4607 = vmatprep.subr.mxu0 0.0
        %4608 = vmatpush1.msra.mxu0 0.0
        %4609 = vmatprep.subr.mxu0 0.0
        %4610 = vmatpush1.msra.mxu0 %v4232
        %4611 = vmatprep.subr.mxu0 0.0
        %4612 = vmatpush2.msra.mxu0 0.0
        %4613 = vmatprep.subr.mxu0 0.0
        %4614 = vmatpush2.msra.mxu0 0.0
        %4615 = vmatprep.subr.mxu0 0.0
        %4616 = vmatpush2.msra.mxu0 0.0
        %4617 = vmatprep.subr.mxu0 0.0
        %4618 = vmatpush2.msra.mxu0 0.0
        %4619 = vmatprep.subr.mxu0 0.0
        %4620 = vmatpush2.msra.mxu0 0.0
        %4621 = vmatprep.subr.mxu0 0.0
        %4622 = vmatpush2.msra.mxu0 0.0
        %4623 = vmatprep.subr.mxu0 0.0
        %4624 = vmatpush2.msra.mxu0 0.0
        %4625 = vmatprep.subr.mxu0 0.0
        %4626 = vmatpush2.msra.mxu0 0.0
        %4627 = vmatprep.subr.mxu0 0.0
        %4628 = vmatpush2.msra.mxu0 0.0
        %4629 = vmatprep.subr.mxu0 0.0
        %4630 = vmatpush2.msra.mxu0 0.0
        %4631 = vmatprep.subr.mxu0 0.0
        %4632 = vmatpush2.msra.mxu0 0.0
        %4633 = vmatprep.subr.mxu0 0.0
        %4634 = vmatpush2.msra.mxu0 0.0
        %4635 = vmatprep.subr.mxu0 0.0
        %4636 = vmatpush2.msra.mxu0 0.0
        %4637 = vmatprep.subr.mxu0 0.0
        %4638 = vmatpush2.msra.mxu0 0.0
        %4639 = vmatprep.subr.mxu0 0.0
        %4640 = vmatpush2.msra.mxu0 0.0
        %4641 = vmatprep.subr.mxu0 0.0
        %4642 = vmatpush2.msra.mxu0 0.0
        %4643 = vmatprep.mubr.f32.mxu0 0.0
        %4644 = vmatmul.mubr.f32.gmra.mxu0 %v4577
        %v4645 = vpop.f32.mrf.mxu0
        %v4646 = vadd.f32 0.0, %v4645
        %v4647 = vpop.f32.mrf.mxu0
        %4648 = vdwg.mxu0
        %v4650 = vrot.slane %v4646, 4
        %v4652 = vadd.f32 %v4231, %v4650
        %v4653 = vxor.u32 %v4652, 2147483648
        %v4654 = vmul.f32 %v4653, 1.442695
        %v4655 = vpow.pop %v4654
        %v4656 = vadd.f32 %v4655, 1.0
        %v4657 = vrcp.pop %v4656
        %v4658 = vmul.f32 1.0, %v4657
        %v4659 = vtanh.pop %v4652
        %v4661 = vrot.slane %v4566, 7
        %v4663 = vmul.f32 %v4658, %v4661
        %4665 = vrot.lane.b32.xlu0 %v4659, 112
        %v4666 = vpop.permute.xlu0 %4665
        %v4668 = vmul.f32 %v4658, %v4666
        %4670 = vrot.lane.b32.xlu0 %v4668, 8
        %v4671 = vpop.permute.xlu0 %4670
        %v4673 = vadd.f32 %v4663, %v4671
        %v4674 = vtanh.pop %v4673
        %4676 = vrot.lane.b32.xlu0 %v4674, 16
        %v4677 = vpop.permute.xlu0 %4676
        %v4679 = vmul.f32 %v4658, %v4677
        %v4681 = vrot.slane %v4679, 4
        %4682 = vrot.lane.b32.xlu0 %v4681, 104
        %v4683 = vpop.permute.xlu0 %4682
        %v4684 = vsel %vm1008, %v4683, 0
        %4686 = vmatprep.subr.mxu0 0.0
        %4687 = vmatpush1.msra.mxu0 0.0
        %4688 = vmatprep.subr.mxu0 0.0
        %4689 = vmatpush1.msra.mxu0 0.0
        %4690 = vmatprep.subr.mxu0 0.0
        %4691 = vmatpush1.msra.mxu0 0.0
        %4692 = vmatprep.subr.mxu0 0.0
        %4693 = vmatpush1.msra.mxu0 0.0
        %4694 = vmatprep.subr.mxu0 0.0
        %4695 = vmatpush1.msra.mxu0 0.0
        %4696 = vmatprep.subr.mxu0 0.0
        %4697 = vmatpush1.msra.mxu0 0.0
        %4698 = vmatprep.subr.mxu0 0.0
        %4699 = vmatpush1.msra.mxu0 0.0
        %4700 = vmatprep.subr.mxu0 0.0
        %4701 = vmatpush1.msra.mxu0 0.0
        %4702 = vmatprep.subr.mxu0 0.0
        %4703 = vmatpush1.msra.mxu0 0.0
        %4704 = vmatprep.subr.mxu0 0.0
        %4705 = vmatpush1.msra.mxu0 0.0
        %4706 = vmatprep.subr.mxu0 0.0
        %4707 = vmatpush1.msra.mxu0 0.0
        %4708 = vmatprep.subr.mxu0 0.0
        %4709 = vmatpush1.msra.mxu0 0.0
        %4710 = vmatprep.subr.mxu0 0.0
        %4711 = vmatpush1.msra.mxu0 0.0
        %4712 = vmatprep.subr.mxu0 0.0
        %4713 = vmatpush1.msra.mxu0 0.0
        %4714 = vmatprep.subr.mxu0 0.0
        %4715 = vmatpush1.msra.mxu0 0.0
        %4716 = vmatprep.subr.mxu0 0.0
        %4717 = vmatpush1.msra.mxu0 %v4232
        %4718 = vmatprep.subr.mxu0 0.0
        %4719 = vmatpush2.msra.mxu0 0.0
        %4720 = vmatprep.subr.mxu0 0.0
        %4721 = vmatpush2.msra.mxu0 0.0
        %4722 = vmatprep.subr.mxu0 0.0
        %4723 = vmatpush2.msra.mxu0 0.0
        %4724 = vmatprep.subr.mxu0 0.0
        %4725 = vmatpush2.msra.mxu0 0.0
        %4726 = vmatprep.subr.mxu0 0.0
        %4727 = vmatpush2.msra.mxu0 0.0
        %4728 = vmatprep.subr.mxu0 0.0
        %4729 = vmatpush2.msra.mxu0 0.0
        %4730 = vmatprep.subr.mxu0 0.0
        %4731 = vmatpush2.msra.mxu0 0.0
        %4732 = vmatprep.subr.mxu0 0.0
        %4733 = vmatpush2.msra.mxu0 0.0
        %4734 = vmatprep.subr.mxu0 0.0
        %4735 = vmatpush2.msra.mxu0 0.0
        %4736 = vmatprep.subr.mxu0 0.0
        %4737 = vmatpush2.msra.mxu0 0.0
        %4738 = vmatprep.subr.mxu0 0.0
        %4739 = vmatpush2.msra.mxu0 0.0
        %4740 = vmatprep.subr.mxu0 0.0
        %4741 = vmatpush2.msra.mxu0 0.0
        %4742 = vmatprep.subr.mxu0 0.0
        %4743 = vmatpush2.msra.mxu0 0.0
        %4744 = vmatprep.subr.mxu0 0.0
        %4745 = vmatpush2.msra.mxu0 0.0
        %4746 = vmatprep.subr.mxu0 0.0
        %4747 = vmatpush2.msra.mxu0 0.0
        %4748 = vmatprep.subr.mxu0 0.0
        %4749 = vmatpush2.msra.mxu0 0.0
        %4750 = vmatprep.mubr.f32.mxu0 0.0
        %4751 = vmatmul.mubr.f32.gmra.mxu0 %v4684
        %v4752 = vpop.f32.mrf.mxu0
        %v4753 = vadd.f32 0.0, %v4752
        %v4754 = vpop.f32.mrf.mxu0
        %4755 = vdwg.mxu0
        %v4757 = vrot.slane %v4753, 3
        %v4759 = vadd.f32 %v4231, %v4757
        %v4760 = vxor.u32 %v4759, 2147483648
        %v4761 = vmul.f32 %v4760, 1.442695
        %v4762 = vpow.pop %v4761
        %v4763 = vadd.f32 %v4762, 1.0
        %v4764 = vrcp.pop %v4763
        %v4765 = vmul.f32 1.0, %v4764
        %v4766 = vtanh.pop %v4759
        %v4768 = vrot.slane %v4673, 7
        %v4770 = vmul.f32 %v4765, %v4768
        %4772 = vrot.lane.b32.xlu0 %v4766, 112
        %v4773 = vpop.permute.xlu0 %4772
        %v4775 = vmul.f32 %v4765, %v4773
        %4777 = vrot.lane.b32.xlu0 %v4775, 8
        %v4778 = vpop.permute.xlu0 %4777
        %v4780 = vadd.f32 %v4770, %v4778
        %v4781 = vtanh.pop %v4780
        %4783 = vrot.lane.b32.xlu0 %v4781, 16
        %v4784 = vpop.permute.xlu0 %4783
        %v4786 = vmul.f32 %v4765, %v4784
        %v4788 = vrot.slane %v4786, 5
        %4789 = vrot.lane.b32.xlu0 %v4788, 104
        %v4790 = vpop.permute.xlu0 %4789
        %v4791 = vsel %vm1008, %v4790, 0
        %4793 = vmatprep.subr.mxu0 0.0
        %4794 = vmatpush1.msra.mxu0 0.0
        %4795 = vmatprep.subr.mxu0 0.0
        %4796 = vmatpush1.msra.mxu0 0.0
        %4797 = vmatprep.subr.mxu0 0.0
        %4798 = vmatpush1.msra.mxu0 0.0
        %4799 = vmatprep.subr.mxu0 0.0
        %4800 = vmatpush1.msra.mxu0 0.0
        %4801 = vmatprep.subr.mxu0 0.0
        %4802 = vmatpush1.msra.mxu0 0.0
        %4803 = vmatprep.subr.mxu0 0.0
        %4804 = vmatpush1.msra.mxu0 0.0
        %4805 = vmatprep.subr.mxu0 0.0
        %4806 = vmatpush1.msra.mxu0 0.0
        %4807 = vmatprep.subr.mxu0 0.0
        %4808 = vmatpush1.msra.mxu0 0.0
        %4809 = vmatprep.subr.mxu0 0.0
        %4810 = vmatpush1.msra.mxu0 0.0
        %4811 = vmatprep.subr.mxu0 0.0
        %4812 = vmatpush1.msra.mxu0 0.0
        %4813 = vmatprep.subr.mxu0 0.0
        %4814 = vmatpush1.msra.mxu0 0.0
        %4815 = vmatprep.subr.mxu0 0.0
        %4816 = vmatpush1.msra.mxu0 0.0
        %4817 = vmatprep.subr.mxu0 0.0
        %4818 = vmatpush1.msra.mxu0 0.0
        %4819 = vmatprep.subr.mxu0 0.0
        %4820 = vmatpush1.msra.mxu0 0.0
        %4821 = vmatprep.subr.mxu0 0.0
        %4822 = vmatpush1.msra.mxu0 0.0
        %4823 = vmatprep.subr.mxu0 0.0
        %4824 = vmatpush1.msra.mxu0 %v4232
        %4825 = vmatprep.subr.mxu0 0.0
        %4826 = vmatpush2.msra.mxu0 0.0
        %4827 = vmatprep.subr.mxu0 0.0
        %4828 = vmatpush2.msra.mxu0 0.0
        %4829 = vmatprep.subr.mxu0 0.0
        %4830 = vmatpush2.msra.mxu0 0.0
        %4831 = vmatprep.subr.mxu0 0.0
        %4832 = vmatpush2.msra.mxu0 0.0
        %4833 = vmatprep.subr.mxu0 0.0
        %4834 = vmatpush2.msra.mxu0 0.0
        %4835 = vmatprep.subr.mxu0 0.0
        %4836 = vmatpush2.msra.mxu0 0.0
        %4837 = vmatprep.subr.mxu0 0.0
        %4838 = vmatpush2.msra.mxu0 0.0
        %4839 = vmatprep.subr.mxu0 0.0
        %4840 = vmatpush2.msra.mxu0 0.0
        %4841 = vmatprep.subr.mxu0 0.0
        %4842 = vmatpush2.msra.mxu0 0.0
        %4843 = vmatprep.subr.mxu0 0.0
        %4844 = vmatpush2.msra.mxu0 0.0
        %4845 = vmatprep.subr.mxu0 0.0
        %4846 = vmatpush2.msra.mxu0 0.0
        %4847 = vmatprep.subr.mxu0 0.0
        %4848 = vmatpush2.msra.mxu0 0.0
        %4849 = vmatprep.subr.mxu0 0.0
        %4850 = vmatpush2.msra.mxu0 0.0
        %4851 = vmatprep.subr.mxu0 0.0
        %4852 = vmatpush2.msra.mxu0 0.0
        %4853 = vmatprep.subr.mxu0 0.0
        %4854 = vmatpush2.msra.mxu0 0.0
        %4855 = vmatprep.subr.mxu0 0.0
        %4856 = vmatpush2.msra.mxu0 0.0
        %4857 = vmatprep.mubr.f32.mxu0 0.0
        %4858 = vmatmul.mubr.f32.gmra.mxu0 %v4791
        %v4859 = vpop.f32.mrf.mxu0
        %v4860 = vadd.f32 0.0, %v4859
        %v4861 = vpop.f32.mrf.mxu0
        %4862 = vdwg.mxu0
        %v4864 = vrot.slane %v4860, 2
        %v4866 = vadd.f32 %v4231, %v4864
        %v4867 = vxor.u32 %v4866, 2147483648
        %v4868 = vmul.f32 %v4867, 1.442695
        %v4869 = vpow.pop %v4868
        %v4870 = vadd.f32 %v4869, 1.0
        %v4871 = vrcp.pop %v4870
        %v4872 = vmul.f32 1.0, %v4871
        %v4873 = vtanh.pop %v4866
        %v4875 = vrot.slane %v4780, 7
        %v4877 = vmul.f32 %v4872, %v4875
        %4879 = vrot.lane.b32.xlu0 %v4873, 112
        %v4880 = vpop.permute.xlu0 %4879
        %v4882 = vmul.f32 %v4872, %v4880
        %4884 = vrot.lane.b32.xlu0 %v4882, 8
        %v4885 = vpop.permute.xlu0 %4884
        %v4887 = vadd.f32 %v4877, %v4885
        %v4888 = vtanh.pop %v4887
        %4890 = vrot.lane.b32.xlu0 %v4888, 16
        %v4891 = vpop.permute.xlu0 %4890
        %v4893 = vmul.f32 %v4872, %v4891
        %v4895 = vrot.slane %v4893, 6
        %4896 = vrot.lane.b32.xlu0 %v4895, 104
        %v4897 = vpop.permute.xlu0 %4896
        %v4898 = vsel %vm1008, %v4897, 0
        %4900 = vmatprep.subr.mxu0 0.0
        %4901 = vmatpush1.msra.mxu0 0.0
        %4902 = vmatprep.subr.mxu0 0.0
        %4903 = vmatpush1.msra.mxu0 0.0
        %4904 = vmatprep.subr.mxu0 0.0
        %4905 = vmatpush1.msra.mxu0 0.0
        %4906 = vmatprep.subr.mxu0 0.0
        %4907 = vmatpush1.msra.mxu0 0.0
        %4908 = vmatprep.subr.mxu0 0.0
        %4909 = vmatpush1.msra.mxu0 0.0
        %4910 = vmatprep.subr.mxu0 0.0
        %4911 = vmatpush1.msra.mxu0 0.0
        %4912 = vmatprep.subr.mxu0 0.0
        %4913 = vmatpush1.msra.mxu0 0.0
        %4914 = vmatprep.subr.mxu0 0.0
        %4915 = vmatpush1.msra.mxu0 0.0
        %4916 = vmatprep.subr.mxu0 0.0
        %4917 = vmatpush1.msra.mxu0 0.0
        %4918 = vmatprep.subr.mxu0 0.0
        %4919 = vmatpush1.msra.mxu0 0.0
        %4920 = vmatprep.subr.mxu0 0.0
        %4921 = vmatpush1.msra.mxu0 0.0
        %4922 = vmatprep.subr.mxu0 0.0
        %4923 = vmatpush1.msra.mxu0 0.0
        %4924 = vmatprep.subr.mxu0 0.0
        %4925 = vmatpush1.msra.mxu0 0.0
        %4926 = vmatprep.subr.mxu0 0.0
        %4927 = vmatpush1.msra.mxu0 0.0
        %4928 = vmatprep.subr.mxu0 0.0
        %4929 = vmatpush1.msra.mxu0 0.0
        %4930 = vmatprep.subr.mxu0 0.0
        %4931 = vmatpush1.msra.mxu0 %v4232
        %4932 = vmatprep.subr.mxu0 0.0
        %4933 = vmatpush2.msra.mxu0 0.0
        %4934 = vmatprep.subr.mxu0 0.0
        %4935 = vmatpush2.msra.mxu0 0.0
        %4936 = vmatprep.subr.mxu0 0.0
        %4937 = vmatpush2.msra.mxu0 0.0
        %4938 = vmatprep.subr.mxu0 0.0
        %4939 = vmatpush2.msra.mxu0 0.0
        %4940 = vmatprep.subr.mxu0 0.0
        %4941 = vmatpush2.msra.mxu0 0.0
        %4942 = vmatprep.subr.mxu0 0.0
        %4943 = vmatpush2.msra.mxu0 0.0
        %4944 = vmatprep.subr.mxu0 0.0
        %4945 = vmatpush2.msra.mxu0 0.0
        %4946 = vmatprep.subr.mxu0 0.0
        %4947 = vmatpush2.msra.mxu0 0.0
        %4948 = vmatprep.subr.mxu0 0.0
        %4949 = vmatpush2.msra.mxu0 0.0
        %4950 = vmatprep.subr.mxu0 0.0
        %4951 = vmatpush2.msra.mxu0 0.0
        %4952 = vmatprep.subr.mxu0 0.0
        %4953 = vmatpush2.msra.mxu0 0.0
        %4954 = vmatprep.subr.mxu0 0.0
        %4955 = vmatpush2.msra.mxu0 0.0
        %4956 = vmatprep.subr.mxu0 0.0
        %4957 = vmatpush2.msra.mxu0 0.0
        %4958 = vmatprep.subr.mxu0 0.0
        %4959 = vmatpush2.msra.mxu0 0.0
        %4960 = vmatprep.subr.mxu0 0.0
        %4961 = vmatpush2.msra.mxu0 0.0
        %4962 = vmatprep.subr.mxu0 0.0
        %4963 = vmatpush2.msra.mxu0 0.0
        %4964 = vmatprep.mubr.f32.mxu0 0.0
        %4965 = vmatmul.mubr.f32.gmra.mxu0 %v4898
        %v4966 = vpop.f32.mrf.mxu0
        %v4967 = vadd.f32 0.0, %v4966
        %v4968 = vpop.f32.mrf.mxu0
        %4969 = vdwg.mxu0
        %v4971 = vrot.slane %v4967, 1
        %v4973 = vadd.f32 %v4231, %v4971
        %v4974 = vxor.u32 %v4973, 2147483648
        %v4975 = vmul.f32 %v4974, 1.442695
        %v4976 = vpow.pop %v4975
        %v4977 = vadd.f32 %v4976, 1.0
        %v4978 = vrcp.pop %v4977
        %v4979 = vmul.f32 1.0, %v4978
        %v4980 = vtanh.pop %v4973
        %v4982 = vrot.slane %v4887, 7
        %v4984 = vmul.f32 %v4979, %v4982
        %4986 = vrot.lane.b32.xlu0 %v4980, 112
        %v4987 = vpop.permute.xlu0 %4986
        %v4989 = vmul.f32 %v4979, %v4987
        %4991 = vrot.lane.b32.xlu0 %v4989, 8
        %v4992 = vpop.permute.xlu0 %4991
        %v4994 = vadd.f32 %v4984, %v4992
        %v4995 = vtanh.pop %v4994
        %4997 = vrot.lane.b32.xlu0 %v4995, 16
        %v4998 = vpop.permute.xlu0 %4997
        %v5000 = vmul.f32 %v4979, %v4998
        %v5001 = vsel %vm203, %v4250, %v4358
        %v5002 = vsel %vm3625, %v5001, %v4465
        %v5003 = vsel %vm3627, %v5002, %v4572
        %v5004 = vsel %vm209, %v5003, %v4679
        %v5005 = vsel %vm3630, %v5004, %v4786
        %v5006 = vsel %vm3632, %v5005, %v4893
        %v5007 = vsel %vm360, %v5006, %v5000
        %v5008 = vld [vmem:[#allocation2 + $0x350] sm:$0x1]
        %v5009 = vlaneseq
        %v5010 = vshrl.u32 %v5009, 7
        %v5011 = vsub.s32 0, %v5010
        %v5012 = vrot.slane %v5008, %v5011
        %5014 = vrot.lane.b32.xlu0 %v5012, 24
        %v5015 = vpop.permute.xlu0 %5014
        %v5017 = vmul.f32 %v5007, %v5015
        %5019 = vrot.lane.b32.xlu0 %v5017, 104
        %v5020 = vpop.permute.xlu0 %5019
        %v5022 = vsel %vm1008, %v5020, 0.0
        %5023 = vadd.xlane.f32.xlu0 %v5022
        %v5024 = vpop.xlane.xlu0 %5023
        %v5025 = vld [vmem:[#allocation2 + $0x358] sm:$0x1]
        %v5026 = vlaneseq
        %v5027 = vshrl.u32 %v5026, 7
        %v5028 = vsub.s32 0, %v5027
        %v5029 = vrot.slane %v5025, %v5028
        %v5030 = vadd.f32 %v5024, %v5029
        %v5031 = vadd.f32 %v4219, %v5030
        %v5032 = vxor.u32 %v5031, 2147483648
        %v5033 = vmul.f32 %v5032, 1.442695
        %v5034 = vpow.pop %v5033
        %v5035 = vadd.f32 %v5034, 1.0
        %v5036 = vrcp.pop %v5035
        %v5037 = vmul.f32 1.0, %v5036
        %v5039 = vrot.slane %v4043, 1
        %5040 = vrot.lane.b32.xlu0 %v5039, 4
        %v5041 = vpop.permute.xlu0 %5040
        %v5043 = vrot.slane %v4043, 2
        %5044 = vrot.lane.b32.xlu0 %v5043, 8
        %v5045 = vpop.permute.xlu0 %5044
        %v5047 = vrot.slane %v4043, 3
        %5048 = vrot.lane.b32.xlu0 %v5047, 12
        %v5049 = vpop.permute.xlu0 %5048
        %v5051 = vrot.slane %v4043, 4
        %5052 = vrot.lane.b32.xlu0 %v5051, 16
        %v5053 = vpop.permute.xlu0 %5052
        %v5055 = vrot.slane %v4043, 5
        %5056 = vrot.lane.b32.xlu0 %v5055, 20
        %v5057 = vpop.permute.xlu0 %5056
        %v5059 = vrot.slane %v4043, 6
        %5060 = vrot.lane.b32.xlu0 %v5059, 24
        %v5061 = vpop.permute.xlu0 %5060
        %v5063 = vrot.slane %v4043, 7
        %5064 = vrot.lane.b32.xlu0 %v5063, 28
        %v5065 = vpop.permute.xlu0 %5064
        %v5067 = vsel %vm205, %v4043, %v5041
        %v5068 = vsel %vm1008, %v5067, %v5045
        %vm5069 = vcmask 97280
        %v5070 = vsel %vm5069, %v5068, %v5049
        %v5071 = vsel %vm456, %v5070, %v5053
        %vm5072 = vcmask 162816
        %v5073 = vsel %vm5072, %v5071, %v5057
        %vm5074 = vcmask 195584
        %v5075 = vsel %vm5074, %v5073, %v5061
        %vm5076 = vcmask 228352
        %v5077 = vsel %vm5076, %v5075, %v5065
        %v5079 = vrot.slane %v5037, 1
        %5080 = vrot.lane.b32.xlu0 %v5079, 1
        %v5081 = vpop.permute.xlu0 %5080
        %v5083 = vrot.slane %v5037, 2
        %5084 = vrot.lane.b32.xlu0 %v5083, 2
        %v5085 = vpop.permute.xlu0 %5084
        %v5087 = vrot.slane %v5037, 3
        %5088 = vrot.lane.b32.xlu0 %v5087, 3
        %v5089 = vpop.permute.xlu0 %5088
        %v5091 = vrot.slane %v5037, 4
        %5092 = vrot.lane.b32.xlu0 %v5091, 4
        %v5093 = vpop.permute.xlu0 %5092
        %v5095 = vrot.slane %v5037, 5
        %5096 = vrot.lane.b32.xlu0 %v5095, 5
        %v5097 = vpop.permute.xlu0 %5096
        %v5099 = vrot.slane %v5037, 6
        %5100 = vrot.lane.b32.xlu0 %v5099, 6
        %v5101 = vpop.permute.xlu0 %5100
        %v5103 = vrot.slane %v5037, 7
        %5104 = vrot.lane.b32.xlu0 %v5103, 7
        %v5105 = vpop.permute.xlu0 %5104
        %vm5107 = vcmask 7168
        %v5108 = vsel %vm5107, %v5037, %v5081
        %vm5109 = vcmask 15360
        %v5110 = vsel %vm5109, %v5108, %v5085
        %vm5111 = vcmask 23552
        %v5112 = vsel %vm5111, %v5110, %v5089
        %v5113 = vsel %vm205, %v5112, %v5093
        %vm5114 = vcmask 39936
        %v5115 = vsel %vm5114, %v5113, %v5097
        %vm5116 = vcmask 48128
        %v5117 = vsel %vm5116, %v5115, %v5101
        %vm5118 = vcmask 56320
        %v5119 = vsel %vm5118, %v5117, %v5105
        %5121 = vrot.lane.b32.xlu0 %v5119, 32
        %v5122 = vpop.permute.xlu0 %5121
        %5124 = vrot.lane.b32.xlu0 %v2405, 40
        %v5125 = vpop.permute.xlu0 %5124
        %v5127 = vsel %vm709, %v5077, %v5122
        %vm5128 = vcmask 326656
        %v5129 = vsel %vm5128, %v5127, %v5125
        %vm5130 = vcmask 588800
        %v5131 = vsel %vm5130, %v5129, 0.0
        %5132 = vst [vmem:[%s190] sm:$0x1] %v5131
        %s5133 = sand.u32 %s95, 1
        %s5134 = scalar_lea.sflag [#allocation4], %s5133
        %s5135 = sand.u32 %s95, 1
        %s5136 = scalar_lea.vmem [#allocation7], %s5135
        // Predicated region
        $region41: #{tpu_custom_call.1} parent=31 // pred_check
          %p5137 = pneg %p105
        $region42: #{tpu_custom_call.1} parent=31 // pred_check_branch
          %5139 = sbr.rel (%p5137) target = $region44
        $region43: #{tpu_custom_call.1} parent=31 // pred_region
          %s5141 = ssub.s32 16, 16
          %5142 = vsyncadd %s5134, %s5141
          %s5143 = smul.addr %s19, 16
          %s5144 = scalar_lea.hbm %s3, %s5143
          %s5146 = sshll.u32 %s5136, 4
          %s5147 = int_to_ptr.vmem [resolvable:$true] %s5146
          %5149 = dma.vmem_to_hbm [thread:$0]  %s5147, 16, %s5144, %s5134
        $region44: #{tpu_custom_call.1} parent=31 // pred_fallthru
          _
      $region32: #{tpu_custom_call.1} parent=5 // pred_fallthru
        _
      %p5150 = scmp.le.s32.totalorder 2, %s14
      // Predicated region
      $region45: #{tpu_custom_call.1} parent=5 // pred_check
        %p5151 = pneg %p5150
      $region46: #{tpu_custom_call.1} parent=5 // pred_check_branch
        %5153 = sbr.rel (%p5151) target = $region48
      $region47: #{tpu_custom_call.1} parent=5 // pred_region
        %s5154 = ssub.s32 %s14, 2
        // Predicated region
        $region49: #{tpu_custom_call.1} parent=47 // pred_check
          %p5155 = pneg %p111
        $region50: #{tpu_custom_call.1} parent=47 // pred_check_branch
          %5157 = sbr.rel (%p5155) target = $region52
        $region51: #{tpu_custom_call.1} parent=47 // pred_region
          %s5158 = sand.u32 %s96, 1
          %s5159 = scalar_lea.sflag [#allocation4], %s5158
          %s5160 = sand.u32 %s96, 1
          %s5161 = scalar_lea.vmem [#allocation7], %s5160
          %5162 = dma.done %s5159, 16
        $region52: #{tpu_custom_call.1} parent=47 // pred_fallthru
          _
      $region48: #{tpu_custom_call.1} parent=5 // pred_fallthru
        _
    $region6: #{tpu_custom_call.1} parent=1 // loop_footer
      %s18 = sadd.s32 1, %s14
    $region7: #{tpu_custom_call.1} parent=1 // loop_footer_branch
      %13 = sbr.rel target = $region3
    $region8: #{tpu_custom_call.1} parent=1 // loop_exit
      _
    %5163 = vsyncpa [#allocation3], 1
    %s5164 = scalar_lea.sflag [#allocation3], 1
    %5165 = vsyncpa %s5164, 1
    %5166 = vsyncpa [#allocation6], 1
    %5167 = vsyncpa [#allocation4], 1
    %s5168 = scalar_lea.sflag [#allocation4], 1
    %5169 = vsyncpa %s5168, 1

</llo_original>
